<compile_context>
chip_gen: v7x
topology: tpu7x:2x2x1
jax: 0.10.0
libtpu: 0.0.40
codegen_flags: <defaults>
</compile_context>

<pallas_src>
import jax
import jax.numpy as jnp
from jax.experimental import pallas as pl
from jax.experimental.pallas import tpu as pltpu


def ner_kernel(bert_ref, cls_ref, masks_ref, ent_emb_ref, entity_ref,
               conv_ref, lin_w_ref, lin_b_ref, out_ref):
    """One batch tile of the NER_model head.

    bert_ref   : (TB, S, H) bf16   last-layer BERT hidden states
    cls_ref    : (TB, H)    bf16   pooled [CLS] output
    masks_ref  : (TB, 2, S) f32    stacked begin/end token masks
    ent_emb_ref: (N, H)     bf16   entity embedding table
    entity_ref : (TB, N)    f32    entity indicator mask
    conv_ref   : (5,)       f32    SMEM scalars [w_cls, w_begin, w_end, w_ent, conv_b]
    lin_w_ref  : (2, H)     f32    linear weight
    lin_b_ref  : (1, 2)     f32    linear bias
    out_ref    : (TB, 2)    f32
    """
    # ---- SMEM scalar reads hoisted before any heavy VMEM compute ----
    w_cls = conv_ref[0]
    w_begin = conv_ref[1]
    w_end = conv_ref[2]
    w_ent = conv_ref[3]
    conv_b = conv_ref[4]

    # ---- masked sequence pooling on the VPU (not the MXU) ----
    # Fold w_begin / w_end into one f32 (TB, S) mask so the bf16 bert tile is
    # read exactly once; multiply + sublane reduce run in f32 on the VPU and
    # hide under the bert_out DMA.  Conv weights are applied at f32 precision.
    masks = masks_ref[...]                                         # (TB, 2, S)
    wmask = w_begin * masks[:, 0, :] + w_end * masks[:, 1, :]      # (TB, S) f32
    pooled = jnp.sum(bert_ref[...].astype(jnp.float32) * wmask[:, :, None],
                     axis=1)                                       # (TB, H) f32

    # ---- entity pooling: real (TB, N) x (N, H) contraction -> MXU ----
    # entity mask is exact 0/1 in bf16; w_ent applied afterwards in f32.
    ent_vec = jnp.dot(entity_ref[...].astype(ent_emb_ref.dtype),
                      ent_emb_ref[...],
                      preferred_element_type=jnp.float32)          # (TB, H) f32

    # ---- Conv2d(4 -> 1, kernel=1) == scalar-weighted channel sum (f32 VPU) ----
    conv_out = (w_cls * cls_ref[...].astype(jnp.float32)
                + pooled + w_ent * ent_vec + conv_b)               # (TB, H) f32

    # ---- Linear(768 -> 2) on the VPU + lane reduce (N=2 would waste the MXU) ----
    lw = lin_w_ref[...]                                            # (2, H) f32
    logits = jnp.sum(conv_out[:, None, :] * lw[None, :, :], axis=-1)  # (TB, 2)
    logits = logits + lin_b_ref[...]                               # (1, 2) bias

    # ---- sigmoid then softmax over the 2 classes ----
    sig = jax.nn.sigmoid(logits)
    m = jnp.max(sig, axis=-1, keepdims=True)
    e = jnp.exp(sig - m)
    out_ref[...] = (e / jnp.sum(e, axis=-1, keepdims=True)).astype(out_ref.dtype)


def _vmem_capacity_bytes():
    try:
        cap = getattr(pltpu.get_tpu_info(), "vmem_capacity_bytes", None)
        if cap:
            return int(cap)
    except Exception:
        pass
    return 64 << 20  # conservative default (v7x per-TensorCore VMEM)


def _choose_batch_tile(B, S, H):
    """Derive the batch tile from the VMEM budget instead of a fixed constant.

    Per batch row the bert stream costs S*H*2 bytes (bf16) * 2 double-buffers
    plus ~S*H*8 bytes for the f32 upcast / masked-product intermediates of
    the VPU pooling.
    """
    vmem_budget = _vmem_capacity_bytes() // 2        # headroom for everything else
    bytes_per_row = S * H * (2 * 2 + 8)
    tb = int(vmem_budget // max(bytes_per_row, 1))
    tb = max(8, min(64, (tb // 8) * 8))              # multiple of 8 (sublane tiling)
    # Keep >= 2 grid steps whenever the batch allows it: preserves DMA/compute
    # pipelining and lets dimension_semantics=("parallel",) shard the grid
    # across v7x's two TensorCores.
    while tb > 8 and pl.cdiv(B, tb) < 2:
        tb = max(8, ((tb // 2) // 8) * 8)
    return tb


def ner_forward(bert_out, clsout, begin, end, ent_emb, entity,
                conv_w, conv_b, lin_w, lin_b, *, batch_tile=None):
    B, S, H = bert_out.shape
    N = ent_emb.shape[0]

    TB = batch_tile if batch_tile is not None else _choose_batch_tile(B, S, H)
    Bp = pl.cdiv(B, TB) * TB                 # pad the batch; no "TB = B" fallback
    grid = (Bp // TB,)

    def pad_b(x):
        if Bp == B:
            return x
        return jnp.pad(x, [(0, Bp - B)] + [(0, 0)] * (x.ndim - 1))

    # ---- host-side glue (layout / dtype only) ----
    bert_bf = pad_b(bert_out.astype(jnp.bfloat16))     # halve HBM traffic & VMEM
    cls_bf = pad_b(clsout.astype(jnp.bfloat16))
    masks = pad_b(jnp.stack([begin, end], axis=1).astype(jnp.float32))  # (Bp,2,S)
    entity_p = pad_b(entity.astype(jnp.float32))
    ent_bf = ent_emb.astype(jnp.bfloat16)
    conv_params = jnp.concatenate(
        [conv_w.reshape(4), conv_b.reshape(1)]).astype(jnp.float32)     # (5,)
    lin_w_f = lin_w.astype(jnp.float32)                                 # (2, H)
    lin_b_f = lin_b.reshape(1, 2).astype(jnp.float32)                   # (1, 2)

    # Explicit scoped-VMEM limit derived from the actual per-step footprint.
    per_step_bytes = (
        2 * TB * S * H * 2        # double-buffered bf16 bert blocks
        + TB * S * H * 8          # f32 upcast + masked-product intermediates
        + 2 * TB * H * 2          # clsout blocks
        + 2 * TB * 2 * S * 4      # mask blocks
        + 2 * TB * N * 4          # entity mask blocks
        + N * H * 2               # resident entity embedding table
        + 4 * TB * H * 4          # f32 (TB, H) temporaries
        + (2 * H + 2) * 4         # linear weight / bias
    )
    vmem_limit = min(max(per_step_bytes + (2 << 20), 32 << 20),
                     _vmem_capacity_bytes())

    cost = pl.CostEstimate(
        flops=2 * Bp * S * H + 2 * Bp * N * H + 2 * Bp * H * 2,
        transcendentals=4 * Bp,
        bytes_accessed=(Bp * S * H * 2 + Bp * H * 2 + Bp * 2 * S * 4
                        + Bp * N * 4 + N * H * 2 + Bp * 2 * 4),
    )

    out = pl.pallas_call(
        ner_kernel,
        out_shape=jax.ShapeDtypeStruct((Bp, 2), jnp.float32),
        grid=grid,
        in_specs=[
            pl.BlockSpec((TB, S, H), lambda i: (i, 0, 0)),      # bert_out bf16
            pl.BlockSpec((TB, H),    lambda i: (i, 0)),         # clsout bf16
            pl.BlockSpec((TB, 2, S), lambda i: (i, 0, 0)),      # begin/end masks
            pl.BlockSpec((N, H),     lambda i: (0, 0)),         # entity embedding
            pl.BlockSpec((TB, N),    lambda i: (i, 0)),         # entity mask
            pl.BlockSpec(memory_space=pltpu.MemorySpace.SMEM),  # conv scalars
            pl.BlockSpec((2, H),     lambda i: (0, 0)),         # linear weight
            pl.BlockSpec((1, 2),     lambda i: (0, 0)),         # linear bias
        ],
        out_specs=pl.BlockSpec((TB, 2), lambda i: (i, 0)),
        compiler_params=pltpu.CompilerParams(
            dimension_semantics=("parallel",),
            vmem_limit_bytes=int(vmem_limit)),
        cost_estimate=cost,
    )(bert_bf, cls_bf, masks, ent_bf, entity_p, conv_params, lin_w_f, lin_b_f)

    return out[:B]


def reference(bert_out, clsout, begin, end, ent_emb, entity,
              conv_w, conv_b, lin_w, lin_b):
    # Pure-f32 PyTorch-semantics reference.
    begin_vec = jnp.sum(bert_out * begin[:, :, None], axis=1)
    end_vec = jnp.sum(bert_out * end[:, :, None], axis=1)
    entity_vec = entity @ ent_emb
    stacked = jnp.stack([clsout, begin_vec, end_vec, entity_vec], axis=1)
    cw = conv_w.reshape(4)
    conv_out = jnp.einsum('c,bch->bh', cw, stacked) + conv_b.reshape(())
    logits = conv_out @ lin_w.T + lin_b
    sig = jax.nn.sigmoid(logits)
    return jax.nn.softmax(sig, axis=-1)


if __name__ == "__main__":
    # Small shapes consistent with the module (Linear requires H=768).
    # B=20 is deliberately not a multiple of the batch tile so the padded
    # batch / multi-step grid path is exercised.
    B, S, N, H = 20, 8, 16, 768

    key = jax.random.PRNGKey(0)
    ks = jax.random.split(key, 10)

    bert_out = jax.random.normal(ks[0], (B, S, H), dtype=jnp.float32)
    clsout = jax.random.normal(ks[1], (B, H), dtype=jnp.float32)
    begin = (jax.random.uniform(ks[2], (B, S)) < 0.3).astype(jnp.float32)
    end = (jax.random.uniform(ks[3], (B, S)) < 0.3).astype(jnp.float32)
    ent_emb = jax.random.normal(ks[4], (N, H), dtype=jnp.float32)
    entity = (jax.random.uniform(ks[5], (B, N)) < 0.3).astype(jnp.float32)

    # deterministic synthetic parameters (no checkpoint load)
    conv_w = jax.random.normal(ks[6], (1, 4, 1, 1), dtype=jnp.float32) * 0.5
    conv_b = jax.random.normal(ks[7], (1,), dtype=jnp.float32) * 0.1
    lin_w = jax.random.normal(ks[8], (2, H), dtype=jnp.float32) * 0.02
    lin_b = jax.random.normal(ks[9], (2,), dtype=jnp.float32) * 0.1

    out = ner_forward(bert_out, clsout, begin, end, ent_emb, entity,
                      conv_w, conv_b, lin_w, lin_b)
    out = jax.block_until_ready(out)

    ref = reference(bert_out, clsout, begin, end, ent_emb, entity,
                    conv_w, conv_b, lin_w, lin_b)
    assert out.shape == (B, 2)
    # bf16 bert_out / clsout / entity-embedding inputs -> slightly relaxed
    # tolerance vs the pure-f32 reference (all accumulation is f32).
    assert jnp.allclose(out, ref, atol=1e-2, rtol=1e-2), (out, ref)
    print("KERNEL_OK")
</pallas_src>

<mosaic_0001>
module attributes {stable_mosaic.version = 11 : i64} {
  func.func @ner_kernel(%arg0: i32, %arg1: memref<16x8x768xbf16, #tpu.memory_space<vmem>>, %arg2: memref<16x768xbf16, #tpu.memory_space<vmem>>, %arg3: memref<16x2x8xf32, #tpu.memory_space<vmem>>, %arg4: memref<16x768xbf16, #tpu.memory_space<vmem>>, %arg5: memref<16x16xf32, #tpu.memory_space<vmem>>, %arg6: memref<5xf32, #tpu.memory_space<smem>>, %arg7: memref<2x768xf32, #tpu.memory_space<vmem>>, %arg8: memref<1x2xf32, #tpu.memory_space<vmem>>, %arg9: memref<16x2xf32, #tpu.memory_space<vmem>>) attributes {dimension_semantics = [#tpu.dimension_semantics<parallel>], iteration_bounds = array<i64: 2>, scalar_prefetch = 0 : i64, scratch_operands = 0 : i64, tpu.core_type = #tpu.core_type<tc>, window_params = [{transform_indices = @transform_0, window_bounds = array<i64: 16, 8, 768>}, {transform_indices = @transform_1, window_bounds = array<i64: 16, 768>}, {transform_indices = @transform_2, window_bounds = array<i64: 16, 2, 8>}, {pipeline_mode = #tpu.pipeline_mode<synchronous>, transform_indices = @transform_3, window_bounds = array<i64: 16, 768>}, {transform_indices = @transform_4, window_bounds = array<i64: 16, 16>}, {transform_indices = @transform_5, window_bounds = array<i64: 5>}, {pipeline_mode = #tpu.pipeline_mode<synchronous>, transform_indices = @transform_6, window_bounds = array<i64: 2, 768>}, {pipeline_mode = #tpu.pipeline_mode<synchronous>, transform_indices = @transform_7, window_bounds = array<i64: 1, 2>}, {transform_indices = @transform_8, window_bounds = array<i64: 16, 2>}]} {
    %c0 = arith.constant 0 : index
    %0 = memref.load %arg6[%c0] : memref<5xf32, #tpu.memory_space<smem>>
    %c1 = arith.constant 1 : index
    %1 = memref.load %arg6[%c1] : memref<5xf32, #tpu.memory_space<smem>>
    %c2 = arith.constant 2 : index
    %2 = memref.load %arg6[%c2] : memref<5xf32, #tpu.memory_space<smem>>
    %c3 = arith.constant 3 : index
    %3 = memref.load %arg6[%c3] : memref<5xf32, #tpu.memory_space<smem>>
    %c4 = arith.constant 4 : index
    %4 = memref.load %arg6[%c4] : memref<5xf32, #tpu.memory_space<smem>>
    %c0_0 = arith.constant 0 : index
    %c0_1 = arith.constant 0 : index
    %c0_2 = arith.constant 0 : index
    %5 = vector.load %arg3[%c0_0, %c0_1, %c0_2] : memref<16x2x8xf32, #tpu.memory_space<vmem>>, vector<16x2x8xf32>
    %6 = vector.extract_strided_slice %5 {offsets = [0, 0, 0], sizes = [16, 1, 8], strides = [1, 1, 1]} : vector<16x2x8xf32> to vector<16x1x8xf32>
    %7 = vector.shape_cast %6 : vector<16x1x8xf32> to vector<16x8xf32>
    %8 = vector.broadcast %1 : f32 to vector<16x8xf32>
    %9 = arith.mulf %8, %7 : vector<16x8xf32>
    %10 = vector.extract_strided_slice %5 {offsets = [0, 1, 0], sizes = [16, 1, 8], strides = [1, 1, 1]} : vector<16x2x8xf32> to vector<16x1x8xf32>
    %11 = vector.shape_cast %10 : vector<16x1x8xf32> to vector<16x8xf32>
    %12 = vector.broadcast %2 : f32 to vector<16x8xf32>
    %13 = arith.mulf %12, %11 : vector<16x8xf32>
    %14 = arith.addf %9, %13 : vector<16x8xf32>
    %c0_3 = arith.constant 0 : index
    %c0_4 = arith.constant 0 : index
    %c0_5 = arith.constant 0 : index
    %15 = vector.load %arg1[%c0_3, %c0_4, %c0_5] : memref<16x8x768xbf16, #tpu.memory_space<vmem>>, vector<16x8x768xbf16>
    %16 = arith.extf %15 : vector<16x8x768xbf16> to vector<16x8x768xf32>
    %17 = vector.shape_cast %14 : vector<16x8xf32> to vector<16x8x1xf32>
    %18 = vector.broadcast %17 : vector<16x8x1xf32> to vector<16x8x768xf32>
    %19 = arith.mulf %16, %18 : vector<16x8x768xf32>
    %cst = arith.constant dense<0.000000e+00> : vector<16x768xf32>
    %20 = vector.multi_reduction <add>, %19, %cst [1] : vector<16x8x768xf32> to vector<16x768xf32>
    %c0_6 = arith.constant 0 : index
    %c0_7 = arith.constant 0 : index
    %21 = vector.load %arg5[%c0_6, %c0_7] : memref<16x16xf32, #tpu.memory_space<vmem>>, vector<16x16xf32>
    %22 = arith.truncf %21 : vector<16x16xf32> to vector<16x16xbf16>
    %c0_8 = arith.constant 0 : index
    %c0_9 = arith.constant 0 : index
    %23 = vector.load %arg4[%c0_8, %c0_9] : memref<16x768xbf16, #tpu.memory_space<vmem>>, vector<16x768xbf16>
    %cst_10 = arith.constant dense<0.000000e+00> : vector<16x768xf32>
    %24 = tpu.matmul %22, %23, %cst_10 {dimension_numbers = #tpu.dot_dimension_numbers<[1], [0], [0], [1], [0, 0, 1, 1], [], []>} : vector<16x16xbf16>, vector<16x768xbf16>, vector<16x768xf32> -> vector<16x768xf32>
    %c0_11 = arith.constant 0 : index
    %c0_12 = arith.constant 0 : index
    %25 = vector.load %arg2[%c0_11, %c0_12] : memref<16x768xbf16, #tpu.memory_space<vmem>>, vector<16x768xbf16>
    %26 = arith.extf %25 : vector<16x768xbf16> to vector<16x768xf32>
    %27 = vector.broadcast %0 : f32 to vector<16x768xf32>
    %28 = arith.mulf %27, %26 : vector<16x768xf32>
    %29 = arith.addf %28, %20 : vector<16x768xf32>
    %30 = vector.broadcast %3 : f32 to vector<16x768xf32>
    %31 = arith.mulf %30, %24 : vector<16x768xf32>
    %32 = arith.addf %29, %31 : vector<16x768xf32>
    %33 = vector.broadcast %4 : f32 to vector<16x768xf32>
    %34 = arith.addf %32, %33 : vector<16x768xf32>
    %c0_13 = arith.constant 0 : index
    %c0_14 = arith.constant 0 : index
    %35 = vector.load %arg7[%c0_13, %c0_14] : memref<2x768xf32, #tpu.memory_space<vmem>>, vector<2x768xf32>
    %36 = vector.shape_cast %34 : vector<16x768xf32> to vector<16x1x768xf32>
    %37 = vector.shape_cast %35 : vector<2x768xf32> to vector<1x2x768xf32>
    %38 = vector.broadcast %36 : vector<16x1x768xf32> to vector<16x2x768xf32>
    %39 = vector.broadcast %37 : vector<1x2x768xf32> to vector<16x2x768xf32>
    %40 = arith.mulf %38, %39 : vector<16x2x768xf32>
    %cst_15 = arith.constant dense<0.000000e+00> : vector<16x2xf32>
    %41 = vector.multi_reduction <add>, %40, %cst_15 [2] : vector<16x2x768xf32> to vector<16x2xf32>
    %c0_16 = arith.constant 0 : index
    %c0_17 = arith.constant 0 : index
    %42 = vector.load %arg8[%c0_16, %c0_17] : memref<1x2xf32, #tpu.memory_space<vmem>>, vector<1x2xf32>
    %43 = vector.broadcast %42 : vector<1x2xf32> to vector<16x2xf32>
    %44 = arith.addf %41, %43 : vector<16x2xf32>
    %45 = arith.negf %44 : vector<16x2xf32>
    %46 = math.exp %45 : vector<16x2xf32>
    %cst_18 = arith.constant 1.000000e+00 : f32
    %47 = vector.broadcast %cst_18 : f32 to vector<16x2xf32>
    %48 = arith.addf %47, %46 : vector<16x2xf32>
    %49 = arith.divf %47, %48 : vector<16x2xf32>
    %cst_19 = arith.constant dense<0xFF800000> : vector<16xf32>
    %50 = vector.multi_reduction <maximumf>, %49, %cst_19 [1] : vector<16x2xf32> to vector<16xf32>
    %51 = vector.shape_cast %50 : vector<16xf32> to vector<16x1xf32>
    %52 = vector.broadcast %51 : vector<16x1xf32> to vector<16x2xf32>
    %53 = arith.subf %49, %52 : vector<16x2xf32>
    %54 = math.exp %53 : vector<16x2xf32>
    %cst_20 = arith.constant dense<0.000000e+00> : vector<16xf32>
    %55 = vector.multi_reduction <add>, %54, %cst_20 [1] : vector<16x2xf32> to vector<16xf32>
    %56 = vector.shape_cast %55 : vector<16xf32> to vector<16x1xf32>
    %57 = vector.broadcast %56 : vector<16x1xf32> to vector<16x2xf32>
    %58 = arith.divf %54, %57 : vector<16x2xf32>
    %c0_21 = arith.constant 0 : index
    %c0_22 = arith.constant 0 : index
    %59 = vector.load %arg9[%c0_21, %c0_22] : memref<16x2xf32, #tpu.memory_space<vmem>>, vector<16x2xf32>
    tpu.vector_store %arg9[%c0_21, %c0_22], %58 {strides = array<i32>} : memref<16x2xf32, #tpu.memory_space<vmem>>, vector<16x2xf32>,
    return
  }
  func.func @transform_0(%arg0: i32) -> (i32, i32, i32) {
    %c0_i32 = arith.constant 0 : i32
    %c0_i32_0 = arith.constant 0 : i32
    %c0_i32_1 = arith.constant 0 : i32
    return %arg0, %c0_i32, %c0_i32_0 : i32, i32, i32
  }
  func.func @transform_1(%arg0: i32) -> (i32, i32) {
    %c0_i32 = arith.constant 0 : i32
    %c0_i32_0 = arith.constant 0 : i32
    return %arg0, %c0_i32 : i32, i32
  }
  func.func @transform_2(%arg0: i32) -> (i32, i32, i32) {
    %c0_i32 = arith.constant 0 : i32
    %c0_i32_0 = arith.constant 0 : i32
    %c0_i32_1 = arith.constant 0 : i32
    return %arg0, %c0_i32, %c0_i32_0 : i32, i32, i32
  }
  func.func @transform_3(%arg0: i32) -> (i32, i32) {
    %c0_i32 = arith.constant 0 : i32
    %c0_i32_0 = arith.constant 0 : i32
    %c0_i32_1 = arith.constant 0 : i32
    return %c0_i32, %c0_i32_0 : i32, i32
  }
  func.func @transform_4(%arg0: i32) -> (i32, i32) {
    %c0_i32 = arith.constant 0 : i32
    %c0_i32_0 = arith.constant 0 : i32
    return %arg0, %c0_i32 : i32, i32
  }
  func.func @transform_5(%arg0: i32) -> i32 {
    %c0_i32 = arith.constant 0 : i32
    %c0_i32_0 = arith.constant 0 : i32
    return %c0_i32 : i32
  }
  func.func @transform_6(%arg0: i32) -> (i32, i32) {
    %c0_i32 = arith.constant 0 : i32
    %c0_i32_0 = arith.constant 0 : i32
    %c0_i32_1 = arith.constant 0 : i32
    return %c0_i32, %c0_i32_0 : i32, i32
  }
  func.func @transform_7(%arg0: i32) -> (i32, i32) {
    %c0_i32 = arith.constant 0 : i32
    %c0_i32_0 = arith.constant 0 : i32
    %c0_i32_1 = arith.constant 0 : i32
    return %c0_i32, %c0_i32_0 : i32, i32
  }
  func.func @transform_8(%arg0: i32) -> (i32, i32) {
    %c0_i32 = arith.constant 0 : i32
    %c0_i32_0 = arith.constant 0 : i32
    return %arg0, %c0_i32 : i32, i32
  }
}

</mosaic_0001>

<llo_original>
// kernel: tpu_custom_call.1
$region0: #{tpu_custom_call.1}
  #allocation0 [shape = 'u32[]', space=smem, size = 0x4, offset = 0x4, fixed_abs, tag = 'smem constant byte address 0x4 - core index']
  #allocation1 [shape = 'u32[144,128]{1,0:T(1,128)}', space=vmem, size = 0x12000, scoped, tag = 'internal scratch']
  %s0 = inlined_call_operand.hbm [shape: bf16[32,8,768], index: 0, kind: input, shape index: {}]
  %s1 = inlined_call_operand.vmem [shape: bf16[32,768], index: 1, kind: input, shape index: {}]
  %s2 = inlined_call_operand.vmem [shape: f32[32,2,8], index: 2, kind: input, shape index: {}]
  %s3 = inlined_call_operand.hbm [shape: bf16[16,768], index: 3, kind: input, shape index: {}]
  %s4 = inlined_call_operand.vmem [shape: f32[32,16], index: 4, kind: input, shape index: {}]
  %s5 = inlined_call_operand.vmem [shape: f32[5], index: 5, kind: input, shape index: {}]
  %s6 = inlined_call_operand.vmem [shape: f32[2,768], index: 6, kind: input, shape index: {}]
  %s7 = inlined_call_operand.vmem [shape: f32[1,2], index: 7, kind: input, shape index: {}]
  %s8 = inlined_call_operand.vmem [shape: f32[32,2], index: 8, kind: output, shape index: {}]
  %s9 = sld [smem:[#allocation0]]
  $region77: #{tpu_custom_call.1} parent=0
    _
  %s11 = ssub.s32 1, %s9
  %s12 = scalar_select 0, %s11, %s9
  $region1: #{tpu_custom_call.1} parent=0
    #allocation2 [shape = 'u8[393216]{0}', space=vmem, size = 0x60000, scoped, tag = 'input window, operand 0']
    #allocation3 [shape = 's32[2]{0}', space=sflag, size = 0x8, scoped, tag = 'scoped memory for tpu_custom_call.1']
    #allocation4 [shape = 's32[2]{0}', space=sflag, size = 0x8, scoped, tag = 'scoped memory for tpu_custom_call.1']
    #allocation5 [shape = 'u8[24576]{0}', space=vmem, size = 0x6000, scoped, tag = 'input window, operand 3, single buffered']
    #allocation6 [shape = 's32[1]{0}', space=sflag, size = 0x4, scoped, tag = 'scoped memory for tpu_custom_call.1']
    #allocation7 [shape = 'u8[512]{0}', space=smem, size = 0x200, scoped, tag = 'input window, operand 5, single buffered']
    %13 = vsyncpa [#allocation3], 0
    %s14 = scalar_lea.sflag [#allocation3], 1
    %15 = vsyncpa %s14, 0
    %16 = vsyncpa [#allocation6], 0
    %17 = vsyncpa [#allocation4], 0
    loop: start=0, step=1, limit=4
    $region2: #{tpu_custom_call.1} parent=1 // loop_pre_header
      _
    $region3: #{tpu_custom_call.1} parent=1 // loop_header
      %s19 = sphi 0, %s23
      %p20 = scmp.ge.s32.totalorder %s19, 4
      %s29 = sphi 0, %s31
      %s32 = sphi 0, %s29
      %s33 = sphi 0, %s32
      %s49 = sphi 0, %s33
      %s55 = sphi 0, %s57
      %s58 = sphi 0, %s55
      %s59 = sphi 0, %s58
      %s75 = sphi 0, %s59
      %s81 = sphi 0, %s83
      %s84 = sphi 0, %s81
      %s85 = sphi 0, %s84
      %s101 = sphi 0, %s85
      %s105 = sphi 0, %s105
      %s107 = sphi 0, %s105
      %s108 = sphi 0, %s107
      %s122 = sphi 0, %s108
      %s128 = sphi 0, %s130
      %s131 = sphi 0, %s128
      %s132 = sphi 0, %s131
      %s148 = sphi 0, %s132
      %s152 = sphi 0, %s152
      %s154 = sphi 0, %s152
      %s155 = sphi 0, %s154
      %s169 = sphi 0, %s155
      %s173 = sphi 0, %s173
      %s175 = sphi 0, %s173
      %s176 = sphi 0, %s175
      %s190 = sphi 0, %s176
      %s194 = sphi 0, %s194
      %s196 = sphi 0, %s194
      %s197 = sphi 0, %s196
      %s211 = sphi 0, %s197
      %s217 = sphi 0, %s219
      %s220 = sphi 0, %s217
      %s221 = sphi 0, %s220
      %s237 = sphi 0, %s221
    $region4: #{tpu_custom_call.1} parent=1 // loop_header_branch
      %22 = sbr.rel (%p20) target = $region8
    $region5: #{tpu_custom_call.1} parent=1 // loop_body
      %s24 = ssub.s32 %s19, 1
      %s25 = ssub.s32 %s19, 2
      %s26 = sadd.s32 %s19, 1
      %s27 = ssub.s32 %s19, %s26
      %p28 = scmp.eq.s32.totalorder %s27, 0
      %s30 = sadd.s32 %s29, 1
      %s31 = scalar_select %p28, %s29, %s30
      %p34 = pneg %p28
      %p35 = scmp.eq.s32.totalorder %s19, 1
      %p36 = por %p34, %p35
      %p37 = scmp.ne.s32.totalorder %s29, %s32
      %p38 = scmp.eq.s32.totalorder %s19, 0
      %p39 = por %p37, %p38
      %p40 = scmp.ne.s32.totalorder %s29, %s32
      %p41 = scmp.eq.s32.totalorder %s24, 1
      %p42 = por %p40, %p41
      %p43 = scmp.ne.s32.totalorder %s32, %s33
      %p44 = scmp.eq.s32.totalorder %s24, 0
      %p45 = por %p43, %p44
      %p46 = scmp.ne.s32.totalorder %s32, %s33
      %p47 = scmp.eq.s32.totalorder %s25, 1
      %p48 = por %p46, %p47
      %p50 = scmp.ne.s32.totalorder %s33, %s49
      %p51 = scmp.eq.s32.totalorder %s25, 0
      %p52 = por %p50, %p51
      %s53 = ssub.s32 %s19, %s26
      %p54 = scmp.eq.s32.totalorder %s53, 0
      %s56 = sadd.s32 %s55, 1
      %s57 = scalar_select %p54, %s55, %s56
      %p60 = pneg %p54
      %p61 = scmp.eq.s32.totalorder %s19, 1
      %p62 = por %p60, %p61
      %p63 = scmp.ne.s32.totalorder %s55, %s58
      %p64 = scmp.eq.s32.totalorder %s19, 0
      %p65 = por %p63, %p64
      %p66 = scmp.ne.s32.totalorder %s55, %s58
      %p67 = scmp.eq.s32.totalorder %s24, 1
      %p68 = por %p66, %p67
      %p69 = scmp.ne.s32.totalorder %s58, %s59
      %p70 = scmp.eq.s32.totalorder %s24, 0
      %p71 = por %p69, %p70
      %p72 = scmp.ne.s32.totalorder %s58, %s59
      %p73 = scmp.eq.s32.totalorder %s25, 1
      %p74 = por %p72, %p73
      %p76 = scmp.ne.s32.totalorder %s59, %s75
      %p77 = scmp.eq.s32.totalorder %s25, 0
      %p78 = por %p76, %p77
      %s79 = ssub.s32 %s19, %s26
      %p80 = scmp.eq.s32.totalorder %s79, 0
      %s82 = sadd.s32 %s81, 1
      %s83 = scalar_select %p80, %s81, %s82
      %p86 = pneg %p80
      %p87 = scmp.eq.s32.totalorder %s19, 1
      %p88 = por %p86, %p87
      %p89 = scmp.ne.s32.totalorder %s81, %s84
      %p90 = scmp.eq.s32.totalorder %s19, 0
      %p91 = por %p89, %p90
      %p92 = scmp.ne.s32.totalorder %s81, %s84
      %p93 = scmp.eq.s32.totalorder %s24, 1
      %p94 = por %p92, %p93
      %p95 = scmp.ne.s32.totalorder %s84, %s85
      %p96 = scmp.eq.s32.totalorder %s24, 0
      %p97 = por %p95, %p96
      %p98 = scmp.ne.s32.totalorder %s84, %s85
      %p99 = scmp.eq.s32.totalorder %s25, 1
      %p100 = por %p98, %p99
      %p102 = scmp.ne.s32.totalorder %s85, %s101
      %p103 = scmp.eq.s32.totalorder %s25, 0
      %p104 = por %p102, %p103
      %s106 = sadd.s32 %s105, 1
      %p109 = scmp.eq.s32.totalorder %s19, 1
      %p110 = scmp.ne.s32.totalorder %s105, %s107
      %p111 = scmp.eq.s32.totalorder %s19, 0
      %p112 = por %p110, %p111
      %p113 = scmp.ne.s32.totalorder %s105, %s107
      %p114 = scmp.eq.s32.totalorder %s24, 1
      %p115 = por %p113, %p114
      %p116 = scmp.ne.s32.totalorder %s107, %s108
      %p117 = scmp.eq.s32.totalorder %s24, 0
      %p118 = por %p116, %p117
      %p119 = scmp.ne.s32.totalorder %s107, %s108
      %p120 = scmp.eq.s32.totalorder %s25, 1
      %p121 = por %p119, %p120
      %p123 = scmp.ne.s32.totalorder %s108, %s122
      %p124 = scmp.eq.s32.totalorder %s25, 0
      %p125 = por %p123, %p124
      %s126 = ssub.s32 %s19, %s26
      %p127 = scmp.eq.s32.totalorder %s126, 0
      %s129 = sadd.s32 %s128, 1
      %s130 = scalar_select %p127, %s128, %s129
      %p133 = pneg %p127
      %p134 = scmp.eq.s32.totalorder %s19, 1
      %p135 = por %p133, %p134
      %p136 = scmp.ne.s32.totalorder %s128, %s131
      %p137 = scmp.eq.s32.totalorder %s19, 0
      %p138 = por %p136, %p137
      %p139 = scmp.ne.s32.totalorder %s128, %s131
      %p140 = scmp.eq.s32.totalorder %s24, 1
      %p141 = por %p139, %p140
      %p142 = scmp.ne.s32.totalorder %s131, %s132
      %p143 = scmp.eq.s32.totalorder %s24, 0
      %p144 = por %p142, %p143
      %p145 = scmp.ne.s32.totalorder %s131, %s132
      %p146 = scmp.eq.s32.totalorder %s25, 1
      %p147 = por %p145, %p146
      %p149 = scmp.ne.s32.totalorder %s132, %s148
      %p150 = scmp.eq.s32.totalorder %s25, 0
      %p151 = por %p149, %p150
      %s153 = sadd.s32 %s152, 1
      %p156 = scmp.eq.s32.totalorder %s19, 1
      %p157 = scmp.ne.s32.totalorder %s152, %s154
      %p158 = scmp.eq.s32.totalorder %s19, 0
      %p159 = por %p157, %p158
      %p160 = scmp.ne.s32.totalorder %s152, %s154
      %p161 = scmp.eq.s32.totalorder %s24, 1
      %p162 = por %p160, %p161
      %p163 = scmp.ne.s32.totalorder %s154, %s155
      %p164 = scmp.eq.s32.totalorder %s24, 0
      %p165 = por %p163, %p164
      %p166 = scmp.ne.s32.totalorder %s154, %s155
      %p167 = scmp.eq.s32.totalorder %s25, 1
      %p168 = por %p166, %p167
      %p170 = scmp.ne.s32.totalorder %s155, %s169
      %p171 = scmp.eq.s32.totalorder %s25, 0
      %p172 = por %p170, %p171
      %s174 = sadd.s32 %s173, 1
      %p177 = scmp.eq.s32.totalorder %s19, 1
      %p178 = scmp.ne.s32.totalorder %s173, %s175
      %p179 = scmp.eq.s32.totalorder %s19, 0
      %p180 = por %p178, %p179
      %p181 = scmp.ne.s32.totalorder %s173, %s175
      %p182 = scmp.eq.s32.totalorder %s24, 1
      %p183 = por %p181, %p182
      %p184 = scmp.ne.s32.totalorder %s175, %s176
      %p185 = scmp.eq.s32.totalorder %s24, 0
      %p186 = por %p184, %p185
      %p187 = scmp.ne.s32.totalorder %s175, %s176
      %p188 = scmp.eq.s32.totalorder %s25, 1
      %p189 = por %p187, %p188
      %p191 = scmp.ne.s32.totalorder %s176, %s190
      %p192 = scmp.eq.s32.totalorder %s25, 0
      %p193 = por %p191, %p192
      %s195 = sadd.s32 %s194, 1
      %p198 = scmp.eq.s32.totalorder %s19, 1
      %p199 = scmp.ne.s32.totalorder %s194, %s196
      %p200 = scmp.eq.s32.totalorder %s19, 0
      %p201 = por %p199, %p200
      %p202 = scmp.ne.s32.totalorder %s194, %s196
      %p203 = scmp.eq.s32.totalorder %s24, 1
      %p204 = por %p202, %p203
      %p205 = scmp.ne.s32.totalorder %s196, %s197
      %p206 = scmp.eq.s32.totalorder %s24, 0
      %p207 = por %p205, %p206
      %p208 = scmp.ne.s32.totalorder %s196, %s197
      %p209 = scmp.eq.s32.totalorder %s25, 1
      %p210 = por %p208, %p209
      %p212 = scmp.ne.s32.totalorder %s197, %s211
      %p213 = scmp.eq.s32.totalorder %s25, 0
      %p214 = por %p212, %p213
      %s215 = ssub.s32 %s19, %s26
      %p216 = scmp.eq.s32.totalorder %s215, 0
      %s218 = sadd.s32 %s217, 1
      %s219 = scalar_select %p216, %s217, %s218
      %p222 = pneg %p216
      %p223 = scmp.eq.s32.totalorder %s19, 1
      %p224 = por %p222, %p223
      %p225 = scmp.ne.s32.totalorder %s217, %s220
      %p226 = scmp.eq.s32.totalorder %s19, 0
      %p227 = por %p225, %p226
      %p228 = scmp.ne.s32.totalorder %s217, %s220
      %p229 = scmp.eq.s32.totalorder %s24, 1
      %p230 = por %p228, %p229
      %p231 = scmp.ne.s32.totalorder %s220, %s221
      %p232 = scmp.eq.s32.totalorder %s24, 0
      %p233 = por %p231, %p232
      %p234 = scmp.ne.s32.totalorder %s220, %s221
      %p235 = scmp.eq.s32.totalorder %s25, 1
      %p236 = por %p234, %p235
      %p238 = scmp.ne.s32.totalorder %s221, %s237
      %p239 = scmp.eq.s32.totalorder %s25, 0
      %p240 = por %p238, %p239
      %p241 = scmp.le.s32.totalorder 1, %s19
      %p242 = scmp.lt.s32.totalorder %s19, 3
      %p243 = pnand %p241, %p242
      %p244 = pneg %p243
      // Predicated region
      $region9: #{tpu_custom_call.1} parent=5 // pred_check
        _
      $region10: #{tpu_custom_call.1} parent=5 // pred_check_branch
        %246 = sbr.rel (%p243) target = $region12
      $region11: #{tpu_custom_call.1} parent=5 // pred_region
        %s247 = ssub.s32 %s19, 1
        // Predicated region
        $region13: #{tpu_custom_call.1} parent=11 // pred_check
          %p248 = pneg %p118
        $region14: #{tpu_custom_call.1} parent=11 // pred_check_branch
          %250 = sbr.rel (%p248) target = $region16
        $region15: #{tpu_custom_call.1} parent=11 // pred_region
          %s252 = ssub.s32 768, 768
          %253 = vsyncadd [#allocation6], %s252
          %s254 = sshll.u32 [#allocation5], 4
          %s255 = int_to_ptr.vmem [resolvable:$true] %s254
          %260 = dma.hbm_to_vmem [thread:$0]  %s3, 768, %s255, [#allocation6], 384, 384, 24
        $region16: #{tpu_custom_call.1} parent=11 // pred_fallthru
          _
        // Predicated region
        $region17: #{tpu_custom_call.1} parent=11 // pred_check
          %p261 = pneg %p165
        $region18: #{tpu_custom_call.1} parent=11 // pred_check_branch
          %263 = sbr.rel (%p261) target = $region20
        $region19: #{tpu_custom_call.1} parent=11 // pred_region
          %s265 = ssub.s32 16, 16
          %266 = vsyncadd [#allocation4], %s265
          %s268 = sshll.u32 %s5, 4
          %s269 = int_to_ptr.vmem [resolvable:$true] %s268
          %271 = dma.vmem_to_smem %s269, 16, [#allocation7], [#allocation4]
        $region20: #{tpu_custom_call.1} parent=11 // pred_fallthru
          _
        // Predicated region
        $region21: #{tpu_custom_call.1} parent=11 // pred_check
          %p272 = pneg %p186
        $region22: #{tpu_custom_call.1} parent=11 // pred_check_branch
          %274 = sbr.rel (%p272) target = $region24
        $region23: #{tpu_custom_call.1} parent=11 // pred_region
          _
        $region24: #{tpu_custom_call.1} parent=11 // pred_fallthru
          _
        // Predicated region
        $region25: #{tpu_custom_call.1} parent=11 // pred_check
          %p275 = pneg %p207
        $region26: #{tpu_custom_call.1} parent=11 // pred_check_branch
          %277 = sbr.rel (%p275) target = $region28
        $region27: #{tpu_custom_call.1} parent=11 // pred_region
          _
        $region28: #{tpu_custom_call.1} parent=11 // pred_fallthru
          _
      $region12: #{tpu_custom_call.1} parent=5 // pred_fallthru
        _
      %p278 = scmp.lt.s32.totalorder %s19, 2
      // Predicated region
      $region29: #{tpu_custom_call.1} parent=5 // pred_check
        %p279 = pneg %p278
      $region30: #{tpu_custom_call.1} parent=5 // pred_check_branch
        %281 = sbr.rel (%p279) target = $region32
      $region31: #{tpu_custom_call.1} parent=5 // pred_region
        // Predicated region
        $region33: #{tpu_custom_call.1} parent=31 // pred_check
          %p282 = pneg %p39
        $region34: #{tpu_custom_call.1} parent=31 // pred_check_branch
          %284 = sbr.rel (%p282) target = $region36
        $region35: #{tpu_custom_call.1} parent=31 // pred_region
          %s285 = sand.u32 %s29, 1
          %s286 = scalar_lea.sflag [#allocation3], %s285
          %s287 = sand.u32 %s29, 1
          %s288 = smul.addr %s287, 384
          %s289 = scalar_lea.vmem [#allocation2], %s288
          %s290 = smul.u32 16, %s19
          %s292 = ssub.s32 6144, 6144
          %293 = vsyncadd %s286, %s292
          %s294 = smul.addr %s290, 6
          %s295 = smul.addr %s294, 64
          %s296 = scalar_lea.hbm %s0, %s295
          %s297 = sshll.u32 %s289, 4
          %s298 = int_to_ptr.vmem [resolvable:$true] %s297
          %303 = dma.hbm_to_vmem [thread:$0]  %s296, 6144, %s298, %s286, 384, 384, 24
        $region36: #{tpu_custom_call.1} parent=31 // pred_fallthru
          _
        // Predicated region
        $region37: #{tpu_custom_call.1} parent=31 // pred_check
          %p304 = pneg %p65
        $region38: #{tpu_custom_call.1} parent=31 // pred_check_branch
          %306 = sbr.rel (%p304) target = $region40
        $region39: #{tpu_custom_call.1} parent=31 // pred_region
          %s307 = smul.u32 2, %s19
          %p308 = scmp.lt.s32.totalorder %s307, 3
          %s309 = scalar_select %p308, %s307, 3
          %s310 = smul.addr %s309, 6
          %s311 = smul.addr %s310, 4
          %s312 = scalar_lea.vmem %s1, %s311
          %s313 = smul.u32 2, %s19
        $region40: #{tpu_custom_call.1} parent=31 // pred_fallthru
          _
        // Predicated region
        $region41: #{tpu_custom_call.1} parent=31 // pred_check
          %p314 = pneg %p91
        $region42: #{tpu_custom_call.1} parent=31 // pred_check_branch
          %316 = sbr.rel (%p314) target = $region44
        $region43: #{tpu_custom_call.1} parent=31 // pred_region
          %s317 = smul.u32 16, %s19
          %p318 = scmp.lt.s32.totalorder %s317, 31
          %s319 = scalar_select %p318, %s317, 31
          %s320 = smul.addr %s319, 2
          %s321 = scalar_lea.vmem %s2, %s320
          %s322 = smul.u32 16, %s19
        $region44: #{tpu_custom_call.1} parent=31 // pred_fallthru
          _
        // Predicated region
        $region45: #{tpu_custom_call.1} parent=31 // pred_check
          %p323 = pneg %p138
        $region46: #{tpu_custom_call.1} parent=31 // pred_check_branch
          %325 = sbr.rel (%p323) target = $region48
        $region47: #{tpu_custom_call.1} parent=31 // pred_region
          %s326 = smul.u32 2, %s19
          %p327 = scmp.lt.s32.totalorder %s326, 3
          %s328 = scalar_select %p327, %s326, 3
          %s329 = smul.addr %s328, 8
          %s330 = scalar_lea.vmem %s4, %s329
          %s331 = smul.u32 2, %s19
        $region48: #{tpu_custom_call.1} parent=31 // pred_fallthru
          _
      $region32: #{tpu_custom_call.1} parent=5 // pred_fallthru
        _
      %p332 = scmp.le.s32.totalorder 1, %s19
      %p333 = scmp.lt.s32.totalorder %s19, 3
      %p334 = pnand %p332, %p333
      %p335 = pneg %p334
      // Predicated region
      $region49: #{tpu_custom_call.1} parent=5 // pred_check
        _
      $region50: #{tpu_custom_call.1} parent=5 // pred_check_branch
        %337 = sbr.rel (%p334) target = $region52
      $region51: #{tpu_custom_call.1} parent=5 // pred_region
        %s338 = ssub.s32 %s19, 1
        %s339 = sand.u32 %s32, 1
        %s340 = scalar_lea.sflag [#allocation3], %s339
        %s341 = sand.u32 %s32, 1
        %s342 = smul.addr %s341, 384
        %s343 = scalar_lea.vmem [#allocation2], %s342
        // Predicated region
        $region53: #{tpu_custom_call.1} parent=51 // pred_check
          %p344 = pneg %p45
        $region54: #{tpu_custom_call.1} parent=51 // pred_check_branch
          %346 = sbr.rel (%p344) target = $region56
        $region55: #{tpu_custom_call.1} parent=51 // pred_region
          %347 = dma.done %s340, 6144
        $region56: #{tpu_custom_call.1} parent=51 // pred_fallthru
          _
        // Predicated region
        $region57: #{tpu_custom_call.1} parent=51 // pred_check
          %p348 = pneg %p118
        $region58: #{tpu_custom_call.1} parent=51 // pred_check_branch
          %350 = sbr.rel (%p348) target = $region60
        $region59: #{tpu_custom_call.1} parent=51 // pred_region
          %351 = dma.done [#allocation6], 768
        $region60: #{tpu_custom_call.1} parent=51 // pred_fallthru
          _
        // Predicated region
        $region61: #{tpu_custom_call.1} parent=51 // pred_check
          %p352 = pneg %p165
        $region62: #{tpu_custom_call.1} parent=51 // pred_check_branch
          %354 = sbr.rel (%p352) target = $region64
        $region63: #{tpu_custom_call.1} parent=51 // pred_region
          %355 = dma.done [#allocation4], 16
        $region64: #{tpu_custom_call.1} parent=51 // pred_fallthru
          _
        %356 = sfence
        %s357 = sand.u32 %s32, 1
        %s358 = scalar_lea.sflag [#allocation3], %s357
        %s359 = sand.u32 %s32, 1
        %s360 = smul.addr %s359, 384
        %s361 = scalar_lea.vmem [#allocation2], %s360
        %p362 = pneg %p45
        %p363 = pneg %p42
        %s364 = smul.u32 2, %s24
        %p365 = scmp.lt.s32.totalorder %s364, 3
        %s366 = scalar_select %p365, %s364, 3
        %s367 = smul.addr %s366, 6
        %s368 = smul.addr %s367, 4
        %s369 = scalar_lea.vmem %s1, %s368
        %p370 = pneg %p71
        %p371 = pneg %p68
        %s372 = smul.u32 16, %s24
        %p373 = scmp.lt.s32.totalorder %s372, 31
        %s374 = scalar_select %p373, %s372, 31
        %s375 = smul.addr %s374, 2
        %s376 = scalar_lea.vmem %s2, %s375
        %p377 = pneg %p97
        %p378 = pneg %p94
        %p379 = pneg %p118
        %p380 = pneg %p115
        %s381 = smul.u32 2, %s24
        %p382 = scmp.lt.s32.totalorder %s381, 3
        %s383 = scalar_select %p382, %s381, 3
        %s384 = smul.addr %s383, 8
        %s385 = scalar_lea.vmem %s4, %s384
        %p386 = pneg %p144
        %p387 = pneg %p141
        %p388 = pneg %p165
        %p389 = pneg %p162
        %p390 = pneg %p186
        %p391 = pneg %p183
        %p392 = pneg %p207
        %p393 = pneg %p204
        %p394 = pneg %p233
        %p395 = pneg %p230
        %s396 = smul.u32 2, %s24
        %p397 = scmp.lt.s32.totalorder %s396, 3
        %s398 = scalar_select %p397, %s396, 3
        %s399 = smul.addr %s398, 8
        %s400 = scalar_lea.vmem %s8, %s399
        %s401 = smul.u32 16, %s24
        %s402 = smul.u32 2, %s24
        %p403 = scmp.lt.s32.totalorder %s402, 3
        %s404 = scalar_select %p403, %s402, 3
        %s405 = smul.addr %s404, 6
        %s406 = smul.addr %s405, 4
        %s407 = scalar_lea.vmem %s1, %s406
        %s408 = smul.u32 2, %s24
        %s409 = smul.u32 16, %s24
        %p410 = scmp.lt.s32.totalorder %s409, 31
        %s411 = scalar_select %p410, %s409, 31
        %s412 = smul.addr %s411, 2
        %s413 = scalar_lea.vmem %s2, %s412
        %s414 = smul.u32 16, %s24
        %s415 = smul.u32 2, %s24
        %p416 = scmp.lt.s32.totalorder %s415, 3
        %s417 = scalar_select %p416, %s415, 3
        %s418 = smul.addr %s417, 8
        %s419 = scalar_lea.vmem %s4, %s418
        %s420 = smul.u32 2, %s24
        %s421 = smul.u32 2, %s24
        %p422 = scmp.lt.s32.totalorder %s421, 3
        %s423 = scalar_select %p422, %s421, 3
        %s424 = smul.addr %s423, 8
        %s425 = scalar_lea.vmem %s8, %s424
        %s426 = smul.u32 2, %s24
        %s428 = sld [smem:[#allocation7]]
        %s429 = sld [smem:[#allocation7 + $0x1]]
        %s430 = sld [smem:[#allocation7 + $0x2]]
        %s431 = sld [smem:[#allocation7 + $0x3]]
        %s432 = sld [smem:[#allocation7 + $0x4]]
        %v433 = vld [vmem:[%s413] sm:$0x3]
        %v434 = vld [vmem:[%s413 + $0x2] sm:$0x3]
        %v435 = vld [vmem:[%s413 + $0x4] sm:$0x3]
        %v436 = vld [vmem:[%s413 + $0x6] sm:$0x3]
        %v437 = vld [vmem:[%s413 + $0x8] sm:$0x3]
        %v438 = vld [vmem:[%s413 + $0xa] sm:$0x3]
        %v439 = vld [vmem:[%s413 + $0xc] sm:$0x3]
        %v440 = vld [vmem:[%s413 + $0xe] sm:$0x3]
        %v441 = vld [vmem:[%s413 + $0x10] sm:$0x3]
        %v442 = vld [vmem:[%s413 + $0x12] sm:$0x3]
        %v443 = vld [vmem:[%s413 + $0x14] sm:$0x3]
        %v444 = vld [vmem:[%s413 + $0x16] sm:$0x3]
        %v445 = vld [vmem:[%s413 + $0x18] sm:$0x3]
        %v446 = vld [vmem:[%s413 + $0x1a] sm:$0x3]
        %v447 = vld [vmem:[%s413 + $0x1c] sm:$0x3]
        %v448 = vld [vmem:[%s413 + $0x1e] sm:$0x3]
        %v449 = vstv %s429
        %v450 = vmul.f32 %v449, %v433
        %v451 = vmul.f32 %v449, %v434
        %v452 = vmul.f32 %v449, %v435
        %v453 = vmul.f32 %v449, %v436
        %v454 = vmul.f32 %v449, %v437
        %v455 = vmul.f32 %v449, %v438
        %v456 = vmul.f32 %v449, %v439
        %v457 = vmul.f32 %v449, %v440
        %v458 = vmul.f32 %v449, %v441
        %v459 = vmul.f32 %v449, %v442
        %v460 = vmul.f32 %v449, %v443
        %v461 = vmul.f32 %v449, %v444
        %v462 = vmul.f32 %v449, %v445
        %v463 = vmul.f32 %v449, %v446
        %v464 = vmul.f32 %v449, %v447
        %v465 = vmul.f32 %v449, %v448
        %v466 = vstv %s430
        %v467 = vmul.f32 %v466, %v433
        %v468 = vmul.f32 %v466, %v434
        %v469 = vmul.f32 %v466, %v435
        %v470 = vmul.f32 %v466, %v436
        %v471 = vmul.f32 %v466, %v437
        %v472 = vmul.f32 %v466, %v438
        %v473 = vmul.f32 %v466, %v439
        %v474 = vmul.f32 %v466, %v440
        %v475 = vmul.f32 %v466, %v441
        %v476 = vmul.f32 %v466, %v442
        %v477 = vmul.f32 %v466, %v443
        %v478 = vmul.f32 %v466, %v444
        %v479 = vmul.f32 %v466, %v445
        %v480 = vmul.f32 %v466, %v446
        %v481 = vmul.f32 %v466, %v447
        %v482 = vmul.f32 %v466, %v448
        %v499 = vrot.slane %v467, 1
        %v500 = vrot.slane %v468, 1
        %v501 = vrot.slane %v469, 1
        %v502 = vrot.slane %v470, 1
        %v503 = vrot.slane %v471, 1
        %v504 = vrot.slane %v472, 1
        %v505 = vrot.slane %v473, 1
        %v506 = vrot.slane %v474, 1
        %v507 = vrot.slane %v475, 1
        %v508 = vrot.slane %v476, 1
        %v509 = vrot.slane %v477, 1
        %v510 = vrot.slane %v478, 1
        %v511 = vrot.slane %v479, 1
        %v512 = vrot.slane %v480, 1
        %v513 = vrot.slane %v481, 1
        %v514 = vrot.slane %v482, 1
        %v531 = vadd.f32 %v450, %v499
        %v532 = vadd.f32 %v451, %v500
        %v533 = vadd.f32 %v452, %v501
        %v534 = vadd.f32 %v453, %v502
        %v535 = vadd.f32 %v454, %v503
        %v536 = vadd.f32 %v455, %v504
        %v537 = vadd.f32 %v456, %v505
        %v538 = vadd.f32 %v457, %v506
        %v539 = vadd.f32 %v458, %v507
        %v540 = vadd.f32 %v459, %v508
        %v541 = vadd.f32 %v460, %v509
        %v542 = vadd.f32 %v461, %v510
        %v543 = vadd.f32 %v462, %v511
        %v544 = vadd.f32 %v463, %v512
        %v545 = vadd.f32 %v464, %v513
        %v546 = vadd.f32 %v465, %v514
        %v547 = vld [vmem:[%s343] sm:$0xff]
        %v548 = vld [vmem:[%s343 + $0x8] sm:$0xff]
        %v549 = vld [vmem:[%s343 + $0x10] sm:$0xff]
        %v550 = vld [vmem:[%s343 + $0x18] sm:$0xff]
        %v551 = vld [vmem:[%s343 + $0x20] sm:$0xff]
        %v552 = vld [vmem:[%s343 + $0x28] sm:$0xff]
        %v553 = vld [vmem:[%s343 + $0x30] sm:$0xff]
        %v554 = vld [vmem:[%s343 + $0x38] sm:$0xff]
        %v555 = vld [vmem:[%s343 + $0x40] sm:$0xff]
        %v556 = vld [vmem:[%s343 + $0x48] sm:$0xff]
        %v557 = vld [vmem:[%s343 + $0x50] sm:$0xff]
        %v558 = vld [vmem:[%s343 + $0x58] sm:$0xff]
        %v559 = vld [vmem:[%s343 + $0x60] sm:$0xff]
        %v560 = vld [vmem:[%s343 + $0x68] sm:$0xff]
        %v561 = vld [vmem:[%s343 + $0x70] sm:$0xff]
        %v562 = vld [vmem:[%s343 + $0x78] sm:$0xff]
        %v563 = vld [vmem:[%s343 + $0x80] sm:$0xff]
        %v564 = vld [vmem:[%s343 + $0x88] sm:$0xff]
        %v565 = vld [vmem:[%s343 + $0x90] sm:$0xff]
        %v566 = vld [vmem:[%s343 + $0x98] sm:$0xff]
        %v567 = vld [vmem:[%s343 + $0xa0] sm:$0xff]
        %v568 = vld [vmem:[%s343 + $0xa8] sm:$0xff]
        %v569 = vld [vmem:[%s343 + $0xb0] sm:$0xff]
        %v570 = vld [vmem:[%s343 + $0xb8] sm:$0xff]
        %v571 = vld [vmem:[%s343 + $0xc0] sm:$0xff]
        %v572 = vld [vmem:[%s343 + $0xc8] sm:$0xff]
        %v573 = vld [vmem:[%s343 + $0xd0] sm:$0xff]
        %v574 = vld [vmem:[%s343 + $0xd8] sm:$0xff]
        %v575 = vld [vmem:[%s343 + $0xe0] sm:$0xff]
        %v576 = vld [vmem:[%s343 + $0xe8] sm:$0xff]
        %v577 = vld [vmem:[%s343 + $0xf0] sm:$0xff]
        %v578 = vld [vmem:[%s343 + $0xf8] sm:$0xff]
        %v579 = vld [vmem:[%s343 + $0x100] sm:$0xff]
        %v580 = vld [vmem:[%s343 + $0x108] sm:$0xff]
        %v581 = vld [vmem:[%s343 + $0x110] sm:$0xff]
        %v582 = vld [vmem:[%s343 + $0x118] sm:$0xff]
        %v583 = vld [vmem:[%s343 + $0x120] sm:$0xff]
        %v584 = vld [vmem:[%s343 + $0x128] sm:$0xff]
        %v585 = vld [vmem:[%s343 + $0x130] sm:$0xff]
        %v586 = vld [vmem:[%s343 + $0x138] sm:$0xff]
        %v587 = vld [vmem:[%s343 + $0x140] sm:$0xff]
        %v588 = vld [vmem:[%s343 + $0x148] sm:$0xff]
        %v589 = vld [vmem:[%s343 + $0x150] sm:$0xff]
        %v590 = vld [vmem:[%s343 + $0x158] sm:$0xff]
        %v591 = vld [vmem:[%s343 + $0x160] sm:$0xff]
        %v592 = vld [vmem:[%s343 + $0x168] sm:$0xff]
        %v593 = vld [vmem:[%s343 + $0x170] sm:$0xff]
        %v594 = vld [vmem:[%s343 + $0x178] sm:$0xff]
        %v595 = vunpack.c.l.bf16 %v547
        %v596 = vunpack.c.h.bf16 %v547
        %v597 = vunpack.c.l.bf16 %v548
        %v598 = vunpack.c.h.bf16 %v548
        %v599 = vunpack.c.l.bf16 %v549
        %v600 = vunpack.c.h.bf16 %v549
        %v601 = vunpack.c.l.bf16 %v550
        %v602 = vunpack.c.h.bf16 %v550
        %v603 = vunpack.c.l.bf16 %v551
        %v604 = vunpack.c.h.bf16 %v551
        %v605 = vunpack.c.l.bf16 %v552
        %v606 = vunpack.c.h.bf16 %v552
        %v607 = vunpack.c.l.bf16 %v553
        %v608 = vunpack.c.h.bf16 %v553
        %v609 = vunpack.c.l.bf16 %v554
        %v610 = vunpack.c.h.bf16 %v554
        %v611 = vunpack.c.l.bf16 %v555
        %v612 = vunpack.c.h.bf16 %v555
        %v613 = vunpack.c.l.bf16 %v556
        %v614 = vunpack.c.h.bf16 %v556
        %v615 = vunpack.c.l.bf16 %v557
        %v616 = vunpack.c.h.bf16 %v557
        %v617 = vunpack.c.l.bf16 %v558
        %v618 = vunpack.c.h.bf16 %v558
        %v619 = vunpack.c.l.bf16 %v559
        %v620 = vunpack.c.h.bf16 %v559
        %v621 = vunpack.c.l.bf16 %v560
        %v622 = vunpack.c.h.bf16 %v560
        %v623 = vunpack.c.l.bf16 %v561
        %v624 = vunpack.c.h.bf16 %v561
        %v625 = vunpack.c.l.bf16 %v562
        %v626 = vunpack.c.h.bf16 %v562
        %v627 = vunpack.c.l.bf16 %v563
        %v628 = vunpack.c.h.bf16 %v563
        %v629 = vunpack.c.l.bf16 %v564
        %v630 = vunpack.c.h.bf16 %v564
        %v631 = vunpack.c.l.bf16 %v565
        %v632 = vunpack.c.h.bf16 %v565
        %v633 = vunpack.c.l.bf16 %v566
        %v634 = vunpack.c.h.bf16 %v566
        %v635 = vunpack.c.l.bf16 %v567
        %v636 = vunpack.c.h.bf16 %v567
        %v637 = vunpack.c.l.bf16 %v568
        %v638 = vunpack.c.h.bf16 %v568
        %v639 = vunpack.c.l.bf16 %v569
        %v640 = vunpack.c.h.bf16 %v569
        %v641 = vunpack.c.l.bf16 %v570
        %v642 = vunpack.c.h.bf16 %v570
        %v643 = vunpack.c.l.bf16 %v571
        %v644 = vunpack.c.h.bf16 %v571
        %v645 = vunpack.c.l.bf16 %v572
        %v646 = vunpack.c.h.bf16 %v572
        %v647 = vunpack.c.l.bf16 %v573
        %v648 = vunpack.c.h.bf16 %v573
        %v649 = vunpack.c.l.bf16 %v574
        %v650 = vunpack.c.h.bf16 %v574
        %v651 = vunpack.c.l.bf16 %v575
        %v652 = vunpack.c.h.bf16 %v575
        %v653 = vunpack.c.l.bf16 %v576
        %v654 = vunpack.c.h.bf16 %v576
        %v655 = vunpack.c.l.bf16 %v577
        %v656 = vunpack.c.h.bf16 %v577
        %v657 = vunpack.c.l.bf16 %v578
        %v658 = vunpack.c.h.bf16 %v578
        %v659 = vunpack.c.l.bf16 %v579
        %v660 = vunpack.c.h.bf16 %v579
        %v661 = vunpack.c.l.bf16 %v580
        %v662 = vunpack.c.h.bf16 %v580
        %v663 = vunpack.c.l.bf16 %v581
        %v664 = vunpack.c.h.bf16 %v581
        %v665 = vunpack.c.l.bf16 %v582
        %v666 = vunpack.c.h.bf16 %v582
        %v667 = vunpack.c.l.bf16 %v583
        %v668 = vunpack.c.h.bf16 %v583
        %v669 = vunpack.c.l.bf16 %v584
        %v670 = vunpack.c.h.bf16 %v584
        %v671 = vunpack.c.l.bf16 %v585
        %v672 = vunpack.c.h.bf16 %v585
        %v673 = vunpack.c.l.bf16 %v586
        %v674 = vunpack.c.h.bf16 %v586
        %v675 = vunpack.c.l.bf16 %v587
        %v676 = vunpack.c.h.bf16 %v587
        %v677 = vunpack.c.l.bf16 %v588
        %v678 = vunpack.c.h.bf16 %v588
        %v679 = vunpack.c.l.bf16 %v589
        %v680 = vunpack.c.h.bf16 %v589
        %v681 = vunpack.c.l.bf16 %v590
        %v682 = vunpack.c.h.bf16 %v590
        %v683 = vunpack.c.l.bf16 %v591
        %v684 = vunpack.c.h.bf16 %v591
        %v685 = vunpack.c.l.bf16 %v592
        %v686 = vunpack.c.h.bf16 %v592
        %v687 = vunpack.c.l.bf16 %v593
        %v688 = vunpack.c.h.bf16 %v593
        %v689 = vunpack.c.l.bf16 %v594
        %v690 = vunpack.c.h.bf16 %v594
        %v691 = vlaneseq
        %v692 = vshrl.u32 %v691, 7
        %v693 = vsub.s32 0, %v692
        %v694 = vrot.slane %v531, %v693
        %696 = vbcast.lane.b32.xlu0 %v694, 256
        %v697 = vpop.permute.xlu0 %696
        %v698 = vlaneseq
        %v699 = vshrl.u32 %v698, 7
        %v700 = vsub.s32 0, %v699
        %v701 = vrot.slane %v532, %v700
        %703 = vbcast.lane.b32.xlu0 %v701, 256
        %v704 = vpop.permute.xlu0 %703
        %v705 = vlaneseq
        %v706 = vshrl.u32 %v705, 7
        %v707 = vsub.s32 0, %v706
        %v708 = vrot.slane %v533, %v707
        %710 = vbcast.lane.b32.xlu0 %v708, 256
        %v711 = vpop.permute.xlu0 %710
        %v712 = vlaneseq
        %v713 = vshrl.u32 %v712, 7
        %v714 = vsub.s32 0, %v713
        %v715 = vrot.slane %v534, %v714
        %717 = vbcast.lane.b32.xlu0 %v715, 256
        %v718 = vpop.permute.xlu0 %717
        %v719 = vlaneseq
        %v720 = vshrl.u32 %v719, 7
        %v721 = vsub.s32 0, %v720
        %v722 = vrot.slane %v535, %v721
        %724 = vbcast.lane.b32.xlu0 %v722, 256
        %v725 = vpop.permute.xlu0 %724
        %v726 = vlaneseq
        %v727 = vshrl.u32 %v726, 7
        %v728 = vsub.s32 0, %v727
        %v729 = vrot.slane %v536, %v728
        %731 = vbcast.lane.b32.xlu0 %v729, 256
        %v732 = vpop.permute.xlu0 %731
        %v733 = vlaneseq
        %v734 = vshrl.u32 %v733, 7
        %v735 = vsub.s32 0, %v734
        %v736 = vrot.slane %v537, %v735
        %738 = vbcast.lane.b32.xlu0 %v736, 256
        %v739 = vpop.permute.xlu0 %738
        %v740 = vlaneseq
        %v741 = vshrl.u32 %v740, 7
        %v742 = vsub.s32 0, %v741
        %v743 = vrot.slane %v538, %v742
        %745 = vbcast.lane.b32.xlu0 %v743, 256
        %v746 = vpop.permute.xlu0 %745
        %v747 = vlaneseq
        %v748 = vshrl.u32 %v747, 7
        %v749 = vsub.s32 0, %v748
        %v750 = vrot.slane %v539, %v749
        %752 = vbcast.lane.b32.xlu0 %v750, 256
        %v753 = vpop.permute.xlu0 %752
        %v754 = vlaneseq
        %v755 = vshrl.u32 %v754, 7
        %v756 = vsub.s32 0, %v755
        %v757 = vrot.slane %v540, %v756
        %759 = vbcast.lane.b32.xlu0 %v757, 256
        %v760 = vpop.permute.xlu0 %759
        %v761 = vlaneseq
        %v762 = vshrl.u32 %v761, 7
        %v763 = vsub.s32 0, %v762
        %v764 = vrot.slane %v541, %v763
        %766 = vbcast.lane.b32.xlu0 %v764, 256
        %v767 = vpop.permute.xlu0 %766
        %v768 = vlaneseq
        %v769 = vshrl.u32 %v768, 7
        %v770 = vsub.s32 0, %v769
        %v771 = vrot.slane %v542, %v770
        %773 = vbcast.lane.b32.xlu0 %v771, 256
        %v774 = vpop.permute.xlu0 %773
        %v775 = vlaneseq
        %v776 = vshrl.u32 %v775, 7
        %v777 = vsub.s32 0, %v776
        %v778 = vrot.slane %v543, %v777
        %780 = vbcast.lane.b32.xlu0 %v778, 256
        %v781 = vpop.permute.xlu0 %780
        %v782 = vlaneseq
        %v783 = vshrl.u32 %v782, 7
        %v784 = vsub.s32 0, %v783
        %v785 = vrot.slane %v544, %v784
        %787 = vbcast.lane.b32.xlu0 %v785, 256
        %v788 = vpop.permute.xlu0 %787
        %v789 = vlaneseq
        %v790 = vshrl.u32 %v789, 7
        %v791 = vsub.s32 0, %v790
        %v792 = vrot.slane %v545, %v791
        %794 = vbcast.lane.b32.xlu0 %v792, 256
        %v795 = vpop.permute.xlu0 %794
        %v796 = vlaneseq
        %v797 = vshrl.u32 %v796, 7
        %v798 = vsub.s32 0, %v797
        %v799 = vrot.slane %v546, %v798
        %801 = vbcast.lane.b32.xlu0 %v799, 256
        %v802 = vpop.permute.xlu0 %801
        %v803 = vmul.f32 %v595, %v697
        %v804 = vmul.f32 %v596, %v697
        %v805 = vmul.f32 %v597, %v697
        %v806 = vmul.f32 %v598, %v697
        %v807 = vmul.f32 %v599, %v697
        %v808 = vmul.f32 %v600, %v697
        %v809 = vmul.f32 %v601, %v704
        %v810 = vmul.f32 %v602, %v704
        %v811 = vmul.f32 %v603, %v704
        %v812 = vmul.f32 %v604, %v704
        %v813 = vmul.f32 %v605, %v704
        %v814 = vmul.f32 %v606, %v704
        %v815 = vmul.f32 %v607, %v711
        %v816 = vmul.f32 %v608, %v711
        %v817 = vmul.f32 %v609, %v711
        %v818 = vmul.f32 %v610, %v711
        %v819 = vmul.f32 %v611, %v711
        %v820 = vmul.f32 %v612, %v711
        %v821 = vmul.f32 %v613, %v718
        %v822 = vmul.f32 %v614, %v718
        %v823 = vmul.f32 %v615, %v718
        %v824 = vmul.f32 %v616, %v718
        %v825 = vmul.f32 %v617, %v718
        %v826 = vmul.f32 %v618, %v718
        %v827 = vmul.f32 %v619, %v725
        %v828 = vmul.f32 %v620, %v725
        %v829 = vmul.f32 %v621, %v725
        %v830 = vmul.f32 %v622, %v725
        %v831 = vmul.f32 %v623, %v725
        %v832 = vmul.f32 %v624, %v725
        %v833 = vmul.f32 %v625, %v732
        %v834 = vmul.f32 %v626, %v732
        %v835 = vmul.f32 %v627, %v732
        %v836 = vmul.f32 %v628, %v732
        %v837 = vmul.f32 %v629, %v732
        %v838 = vmul.f32 %v630, %v732
        %v839 = vmul.f32 %v631, %v739
        %v840 = vmul.f32 %v632, %v739
        %v841 = vmul.f32 %v633, %v739
        %v842 = vmul.f32 %v634, %v739
        %v843 = vmul.f32 %v635, %v739
        %v844 = vmul.f32 %v636, %v739
        %v845 = vmul.f32 %v637, %v746
        %v846 = vmul.f32 %v638, %v746
        %v847 = vmul.f32 %v639, %v746
        %v848 = vmul.f32 %v640, %v746
        %v849 = vmul.f32 %v641, %v746
        %v850 = vmul.f32 %v642, %v746
        %v851 = vmul.f32 %v643, %v753
        %v852 = vmul.f32 %v644, %v753
        %v853 = vmul.f32 %v645, %v753
        %v854 = vmul.f32 %v646, %v753
        %v855 = vmul.f32 %v647, %v753
        %v856 = vmul.f32 %v648, %v753
        %v857 = vmul.f32 %v649, %v760
        %v858 = vmul.f32 %v650, %v760
        %v859 = vmul.f32 %v651, %v760
        %v860 = vmul.f32 %v652, %v760
        %v861 = vmul.f32 %v653, %v760
        %v862 = vmul.f32 %v654, %v760
        %v863 = vmul.f32 %v655, %v767
        %v864 = vmul.f32 %v656, %v767
        %v865 = vmul.f32 %v657, %v767
        %v866 = vmul.f32 %v658, %v767
        %v867 = vmul.f32 %v659, %v767
        %v868 = vmul.f32 %v660, %v767
        %v869 = vmul.f32 %v661, %v774
        %v870 = vmul.f32 %v662, %v774
        %v871 = vmul.f32 %v663, %v774
        %v872 = vmul.f32 %v664, %v774
        %v873 = vmul.f32 %v665, %v774
        %v874 = vmul.f32 %v666, %v774
        %v875 = vmul.f32 %v667, %v781
        %v876 = vmul.f32 %v668, %v781
        %v877 = vmul.f32 %v669, %v781
        %v878 = vmul.f32 %v670, %v781
        %v879 = vmul.f32 %v671, %v781
        %v880 = vmul.f32 %v672, %v781
        %v881 = vmul.f32 %v673, %v788
        %v882 = vmul.f32 %v674, %v788
        %v883 = vmul.f32 %v675, %v788
        %v884 = vmul.f32 %v676, %v788
        %v885 = vmul.f32 %v677, %v788
        %v886 = vmul.f32 %v678, %v788
        %v887 = vmul.f32 %v679, %v795
        %v888 = vmul.f32 %v680, %v795
        %v889 = vmul.f32 %v681, %v795
        %v890 = vmul.f32 %v682, %v795
        %v891 = vmul.f32 %v683, %v795
        %v892 = vmul.f32 %v684, %v795
        %v893 = vmul.f32 %v685, %v802
        %v894 = vmul.f32 %v686, %v802
        %v895 = vmul.f32 %v687, %v802
        %v896 = vmul.f32 %v688, %v802
        %v897 = vmul.f32 %v689, %v802
        %v898 = vmul.f32 %v690, %v802
        %v899 = vrot.slane %v803, 4
        %v900 = vadd.f32 %v803, %v899
        %v901 = vrot.slane %v900, 2
        %v902 = vadd.f32 %v900, %v901
        %v903 = vrot.slane %v902, 1
        %v904 = vadd.f32 %v902, %v903
        %v905 = vrot.slane %v804, 4
        %v906 = vadd.f32 %v804, %v905
        %v907 = vrot.slane %v906, 2
        %v908 = vadd.f32 %v906, %v907
        %v909 = vrot.slane %v908, 1
        %v910 = vadd.f32 %v908, %v909
        %v911 = vrot.slane %v805, 4
        %v912 = vadd.f32 %v805, %v911
        %v913 = vrot.slane %v912, 2
        %v914 = vadd.f32 %v912, %v913
        %v915 = vrot.slane %v914, 1
        %v916 = vadd.f32 %v914, %v915
        %v917 = vrot.slane %v806, 4
        %v918 = vadd.f32 %v806, %v917
        %v919 = vrot.slane %v918, 2
        %v920 = vadd.f32 %v918, %v919
        %v921 = vrot.slane %v920, 1
        %v922 = vadd.f32 %v920, %v921
        %v923 = vrot.slane %v807, 4
        %v924 = vadd.f32 %v807, %v923
        %v925 = vrot.slane %v924, 2
        %v926 = vadd.f32 %v924, %v925
        %v927 = vrot.slane %v926, 1
        %v928 = vadd.f32 %v926, %v927
        %v929 = vrot.slane %v808, 4
        %v930 = vadd.f32 %v808, %v929
        %v931 = vrot.slane %v930, 2
        %v932 = vadd.f32 %v930, %v931
        %v933 = vrot.slane %v932, 1
        %v934 = vadd.f32 %v932, %v933
        %v935 = vrot.slane %v809, 4
        %v936 = vadd.f32 %v809, %v935
        %v937 = vrot.slane %v936, 2
        %v938 = vadd.f32 %v936, %v937
        %v939 = vrot.slane %v938, 1
        %v940 = vadd.f32 %v938, %v939
        %v941 = vrot.slane %v810, 4
        %v942 = vadd.f32 %v810, %v941
        %v943 = vrot.slane %v942, 2
        %v944 = vadd.f32 %v942, %v943
        %v945 = vrot.slane %v944, 1
        %v946 = vadd.f32 %v944, %v945
        %v947 = vrot.slane %v811, 4
        %v948 = vadd.f32 %v811, %v947
        %v949 = vrot.slane %v948, 2
        %v950 = vadd.f32 %v948, %v949
        %v951 = vrot.slane %v950, 1
        %v952 = vadd.f32 %v950, %v951
        %v953 = vrot.slane %v812, 4
        %v954 = vadd.f32 %v812, %v953
        %v955 = vrot.slane %v954, 2
        %v956 = vadd.f32 %v954, %v955
        %v957 = vrot.slane %v956, 1
        %v958 = vadd.f32 %v956, %v957
        %v959 = vrot.slane %v813, 4
        %v960 = vadd.f32 %v813, %v959
        %v961 = vrot.slane %v960, 2
        %v962 = vadd.f32 %v960, %v961
        %v963 = vrot.slane %v962, 1
        %v964 = vadd.f32 %v962, %v963
        %v965 = vrot.slane %v814, 4
        %v966 = vadd.f32 %v814, %v965
        %v967 = vrot.slane %v966, 2
        %v968 = vadd.f32 %v966, %v967
        %v969 = vrot.slane %v968, 1
        %v970 = vadd.f32 %v968, %v969
        %v971 = vrot.slane %v815, 4
        %v972 = vadd.f32 %v815, %v971
        %v973 = vrot.slane %v972, 2
        %v974 = vadd.f32 %v972, %v973
        %v975 = vrot.slane %v974, 1
        %v976 = vadd.f32 %v974, %v975
        %v977 = vrot.slane %v816, 4
        %v978 = vadd.f32 %v816, %v977
        %v979 = vrot.slane %v978, 2
        %v980 = vadd.f32 %v978, %v979
        %v981 = vrot.slane %v980, 1
        %v982 = vadd.f32 %v980, %v981
        %v983 = vrot.slane %v817, 4
        %v984 = vadd.f32 %v817, %v983
        %v985 = vrot.slane %v984, 2
        %v986 = vadd.f32 %v984, %v985
        %v987 = vrot.slane %v986, 1
        %v988 = vadd.f32 %v986, %v987
        %v989 = vrot.slane %v818, 4
        %v990 = vadd.f32 %v818, %v989
        %v991 = vrot.slane %v990, 2
        %v992 = vadd.f32 %v990, %v991
        %v993 = vrot.slane %v992, 1
        %v994 = vadd.f32 %v992, %v993
        %v995 = vrot.slane %v819, 4
        %v996 = vadd.f32 %v819, %v995
        %v997 = vrot.slane %v996, 2
        %v998 = vadd.f32 %v996, %v997
        %v999 = vrot.slane %v998, 1
        %v1000 = vadd.f32 %v998, %v999
        %v1001 = vrot.slane %v820, 4
        %v1002 = vadd.f32 %v820, %v1001
        %v1003 = vrot.slane %v1002, 2
        %v1004 = vadd.f32 %v1002, %v1003
        %v1005 = vrot.slane %v1004, 1
        %v1006 = vadd.f32 %v1004, %v1005
        %v1007 = vrot.slane %v821, 4
        %v1008 = vadd.f32 %v821, %v1007
        %v1009 = vrot.slane %v1008, 2
        %v1010 = vadd.f32 %v1008, %v1009
        %v1011 = vrot.slane %v1010, 1
        %v1012 = vadd.f32 %v1010, %v1011
        %v1013 = vrot.slane %v822, 4
        %v1014 = vadd.f32 %v822, %v1013
        %v1015 = vrot.slane %v1014, 2
        %v1016 = vadd.f32 %v1014, %v1015
        %v1017 = vrot.slane %v1016, 1
        %v1018 = vadd.f32 %v1016, %v1017
        %v1019 = vrot.slane %v823, 4
        %v1020 = vadd.f32 %v823, %v1019
        %v1021 = vrot.slane %v1020, 2
        %v1022 = vadd.f32 %v1020, %v1021
        %v1023 = vrot.slane %v1022, 1
        %v1024 = vadd.f32 %v1022, %v1023
        %v1025 = vrot.slane %v824, 4
        %v1026 = vadd.f32 %v824, %v1025
        %v1027 = vrot.slane %v1026, 2
        %v1028 = vadd.f32 %v1026, %v1027
        %v1029 = vrot.slane %v1028, 1
        %v1030 = vadd.f32 %v1028, %v1029
        %v1031 = vrot.slane %v825, 4
        %v1032 = vadd.f32 %v825, %v1031
        %v1033 = vrot.slane %v1032, 2
        %v1034 = vadd.f32 %v1032, %v1033
        %v1035 = vrot.slane %v1034, 1
        %v1036 = vadd.f32 %v1034, %v1035
        %v1037 = vrot.slane %v826, 4
        %v1038 = vadd.f32 %v826, %v1037
        %v1039 = vrot.slane %v1038, 2
        %v1040 = vadd.f32 %v1038, %v1039
        %v1041 = vrot.slane %v1040, 1
        %v1042 = vadd.f32 %v1040, %v1041
        %v1043 = vrot.slane %v827, 4
        %v1044 = vadd.f32 %v827, %v1043
        %v1045 = vrot.slane %v1044, 2
        %v1046 = vadd.f32 %v1044, %v1045
        %v1047 = vrot.slane %v1046, 1
        %v1048 = vadd.f32 %v1046, %v1047
        %v1049 = vrot.slane %v828, 4
        %v1050 = vadd.f32 %v828, %v1049
        %v1051 = vrot.slane %v1050, 2
        %v1052 = vadd.f32 %v1050, %v1051
        %v1053 = vrot.slane %v1052, 1
        %v1054 = vadd.f32 %v1052, %v1053
        %v1055 = vrot.slane %v829, 4
        %v1056 = vadd.f32 %v829, %v1055
        %v1057 = vrot.slane %v1056, 2
        %v1058 = vadd.f32 %v1056, %v1057
        %v1059 = vrot.slane %v1058, 1
        %v1060 = vadd.f32 %v1058, %v1059
        %v1061 = vrot.slane %v830, 4
        %v1062 = vadd.f32 %v830, %v1061
        %v1063 = vrot.slane %v1062, 2
        %v1064 = vadd.f32 %v1062, %v1063
        %v1065 = vrot.slane %v1064, 1
        %v1066 = vadd.f32 %v1064, %v1065
        %v1067 = vrot.slane %v831, 4
        %v1068 = vadd.f32 %v831, %v1067
        %v1069 = vrot.slane %v1068, 2
        %v1070 = vadd.f32 %v1068, %v1069
        %v1071 = vrot.slane %v1070, 1
        %v1072 = vadd.f32 %v1070, %v1071
        %v1073 = vrot.slane %v832, 4
        %v1074 = vadd.f32 %v832, %v1073
        %v1075 = vrot.slane %v1074, 2
        %v1076 = vadd.f32 %v1074, %v1075
        %v1077 = vrot.slane %v1076, 1
        %v1078 = vadd.f32 %v1076, %v1077
        %v1079 = vrot.slane %v833, 4
        %v1080 = vadd.f32 %v833, %v1079
        %v1081 = vrot.slane %v1080, 2
        %v1082 = vadd.f32 %v1080, %v1081
        %v1083 = vrot.slane %v1082, 1
        %v1084 = vadd.f32 %v1082, %v1083
        %v1085 = vrot.slane %v834, 4
        %v1086 = vadd.f32 %v834, %v1085
        %v1087 = vrot.slane %v1086, 2
        %v1088 = vadd.f32 %v1086, %v1087
        %v1089 = vrot.slane %v1088, 1
        %v1090 = vadd.f32 %v1088, %v1089
        %v1091 = vrot.slane %v835, 4
        %v1092 = vadd.f32 %v835, %v1091
        %v1093 = vrot.slane %v1092, 2
        %v1094 = vadd.f32 %v1092, %v1093
        %v1095 = vrot.slane %v1094, 1
        %v1096 = vadd.f32 %v1094, %v1095
        %v1097 = vrot.slane %v836, 4
        %v1098 = vadd.f32 %v836, %v1097
        %v1099 = vrot.slane %v1098, 2
        %v1100 = vadd.f32 %v1098, %v1099
        %v1101 = vrot.slane %v1100, 1
        %v1102 = vadd.f32 %v1100, %v1101
        %v1103 = vrot.slane %v837, 4
        %v1104 = vadd.f32 %v837, %v1103
        %v1105 = vrot.slane %v1104, 2
        %v1106 = vadd.f32 %v1104, %v1105
        %v1107 = vrot.slane %v1106, 1
        %v1108 = vadd.f32 %v1106, %v1107
        %v1109 = vrot.slane %v838, 4
        %v1110 = vadd.f32 %v838, %v1109
        %v1111 = vrot.slane %v1110, 2
        %v1112 = vadd.f32 %v1110, %v1111
        %v1113 = vrot.slane %v1112, 1
        %v1114 = vadd.f32 %v1112, %v1113
        %v1115 = vrot.slane %v839, 4
        %v1116 = vadd.f32 %v839, %v1115
        %v1117 = vrot.slane %v1116, 2
        %v1118 = vadd.f32 %v1116, %v1117
        %v1119 = vrot.slane %v1118, 1
        %v1120 = vadd.f32 %v1118, %v1119
        %v1121 = vrot.slane %v840, 4
        %v1122 = vadd.f32 %v840, %v1121
        %v1123 = vrot.slane %v1122, 2
        %v1124 = vadd.f32 %v1122, %v1123
        %v1125 = vrot.slane %v1124, 1
        %v1126 = vadd.f32 %v1124, %v1125
        %v1127 = vrot.slane %v841, 4
        %v1128 = vadd.f32 %v841, %v1127
        %v1129 = vrot.slane %v1128, 2
        %v1130 = vadd.f32 %v1128, %v1129
        %v1131 = vrot.slane %v1130, 1
        %v1132 = vadd.f32 %v1130, %v1131
        %v1133 = vrot.slane %v842, 4
        %v1134 = vadd.f32 %v842, %v1133
        %v1135 = vrot.slane %v1134, 2
        %v1136 = vadd.f32 %v1134, %v1135
        %v1137 = vrot.slane %v1136, 1
        %v1138 = vadd.f32 %v1136, %v1137
        %v1139 = vrot.slane %v843, 4
        %v1140 = vadd.f32 %v843, %v1139
        %v1141 = vrot.slane %v1140, 2
        %v1142 = vadd.f32 %v1140, %v1141
        %v1143 = vrot.slane %v1142, 1
        %v1144 = vadd.f32 %v1142, %v1143
        %v1145 = vrot.slane %v844, 4
        %v1146 = vadd.f32 %v844, %v1145
        %v1147 = vrot.slane %v1146, 2
        %v1148 = vadd.f32 %v1146, %v1147
        %v1149 = vrot.slane %v1148, 1
        %v1150 = vadd.f32 %v1148, %v1149
        %v1151 = vrot.slane %v845, 4
        %v1152 = vadd.f32 %v845, %v1151
        %v1153 = vrot.slane %v1152, 2
        %v1154 = vadd.f32 %v1152, %v1153
        %v1155 = vrot.slane %v1154, 1
        %v1156 = vadd.f32 %v1154, %v1155
        %v1157 = vrot.slane %v846, 4
        %v1158 = vadd.f32 %v846, %v1157
        %v1159 = vrot.slane %v1158, 2
        %v1160 = vadd.f32 %v1158, %v1159
        %v1161 = vrot.slane %v1160, 1
        %v1162 = vadd.f32 %v1160, %v1161
        %v1163 = vrot.slane %v847, 4
        %v1164 = vadd.f32 %v847, %v1163
        %v1165 = vrot.slane %v1164, 2
        %v1166 = vadd.f32 %v1164, %v1165
        %v1167 = vrot.slane %v1166, 1
        %v1168 = vadd.f32 %v1166, %v1167
        %v1169 = vrot.slane %v848, 4
        %v1170 = vadd.f32 %v848, %v1169
        %v1171 = vrot.slane %v1170, 2
        %v1172 = vadd.f32 %v1170, %v1171
        %v1173 = vrot.slane %v1172, 1
        %v1174 = vadd.f32 %v1172, %v1173
        %v1175 = vrot.slane %v849, 4
        %v1176 = vadd.f32 %v849, %v1175
        %v1177 = vrot.slane %v1176, 2
        %v1178 = vadd.f32 %v1176, %v1177
        %v1179 = vrot.slane %v1178, 1
        %v1180 = vadd.f32 %v1178, %v1179
        %v1181 = vrot.slane %v850, 4
        %v1182 = vadd.f32 %v850, %v1181
        %v1183 = vrot.slane %v1182, 2
        %v1184 = vadd.f32 %v1182, %v1183
        %v1185 = vrot.slane %v1184, 1
        %v1186 = vadd.f32 %v1184, %v1185
        %v1187 = vrot.slane %v851, 4
        %v1188 = vadd.f32 %v851, %v1187
        %v1189 = vrot.slane %v1188, 2
        %v1190 = vadd.f32 %v1188, %v1189
        %v1191 = vrot.slane %v1190, 1
        %v1192 = vadd.f32 %v1190, %v1191
        %v1193 = vrot.slane %v852, 4
        %v1194 = vadd.f32 %v852, %v1193
        %v1195 = vrot.slane %v1194, 2
        %v1196 = vadd.f32 %v1194, %v1195
        %v1197 = vrot.slane %v1196, 1
        %v1198 = vadd.f32 %v1196, %v1197
        %v1199 = vrot.slane %v853, 4
        %v1200 = vadd.f32 %v853, %v1199
        %v1201 = vrot.slane %v1200, 2
        %v1202 = vadd.f32 %v1200, %v1201
        %v1203 = vrot.slane %v1202, 1
        %v1204 = vadd.f32 %v1202, %v1203
        %v1205 = vrot.slane %v854, 4
        %v1206 = vadd.f32 %v854, %v1205
        %v1207 = vrot.slane %v1206, 2
        %v1208 = vadd.f32 %v1206, %v1207
        %v1209 = vrot.slane %v1208, 1
        %v1210 = vadd.f32 %v1208, %v1209
        %v1211 = vrot.slane %v855, 4
        %v1212 = vadd.f32 %v855, %v1211
        %v1213 = vrot.slane %v1212, 2
        %v1214 = vadd.f32 %v1212, %v1213
        %v1215 = vrot.slane %v1214, 1
        %v1216 = vadd.f32 %v1214, %v1215
        %v1217 = vrot.slane %v856, 4
        %v1218 = vadd.f32 %v856, %v1217
        %v1219 = vrot.slane %v1218, 2
        %v1220 = vadd.f32 %v1218, %v1219
        %v1221 = vrot.slane %v1220, 1
        %v1222 = vadd.f32 %v1220, %v1221
        %v1223 = vrot.slane %v857, 4
        %v1224 = vadd.f32 %v857, %v1223
        %v1225 = vrot.slane %v1224, 2
        %v1226 = vadd.f32 %v1224, %v1225
        %v1227 = vrot.slane %v1226, 1
        %v1228 = vadd.f32 %v1226, %v1227
        %v1229 = vrot.slane %v858, 4
        %v1230 = vadd.f32 %v858, %v1229
        %v1231 = vrot.slane %v1230, 2
        %v1232 = vadd.f32 %v1230, %v1231
        %v1233 = vrot.slane %v1232, 1
        %v1234 = vadd.f32 %v1232, %v1233
        %v1235 = vrot.slane %v859, 4
        %v1236 = vadd.f32 %v859, %v1235
        %v1237 = vrot.slane %v1236, 2
        %v1238 = vadd.f32 %v1236, %v1237
        %v1239 = vrot.slane %v1238, 1
        %v1240 = vadd.f32 %v1238, %v1239
        %v1241 = vrot.slane %v860, 4
        %v1242 = vadd.f32 %v860, %v1241
        %v1243 = vrot.slane %v1242, 2
        %v1244 = vadd.f32 %v1242, %v1243
        %v1245 = vrot.slane %v1244, 1
        %v1246 = vadd.f32 %v1244, %v1245
        %v1247 = vrot.slane %v861, 4
        %v1248 = vadd.f32 %v861, %v1247
        %v1249 = vrot.slane %v1248, 2
        %v1250 = vadd.f32 %v1248, %v1249
        %v1251 = vrot.slane %v1250, 1
        %v1252 = vadd.f32 %v1250, %v1251
        %v1253 = vrot.slane %v862, 4
        %v1254 = vadd.f32 %v862, %v1253
        %v1255 = vrot.slane %v1254, 2
        %v1256 = vadd.f32 %v1254, %v1255
        %v1257 = vrot.slane %v1256, 1
        %v1258 = vadd.f32 %v1256, %v1257
        %v1259 = vrot.slane %v863, 4
        %v1260 = vadd.f32 %v863, %v1259
        %v1261 = vrot.slane %v1260, 2
        %v1262 = vadd.f32 %v1260, %v1261
        %v1263 = vrot.slane %v1262, 1
        %v1264 = vadd.f32 %v1262, %v1263
        %v1265 = vrot.slane %v864, 4
        %v1266 = vadd.f32 %v864, %v1265
        %v1267 = vrot.slane %v1266, 2
        %v1268 = vadd.f32 %v1266, %v1267
        %v1269 = vrot.slane %v1268, 1
        %v1270 = vadd.f32 %v1268, %v1269
        %v1271 = vrot.slane %v865, 4
        %v1272 = vadd.f32 %v865, %v1271
        %v1273 = vrot.slane %v1272, 2
        %v1274 = vadd.f32 %v1272, %v1273
        %v1275 = vrot.slane %v1274, 1
        %v1276 = vadd.f32 %v1274, %v1275
        %v1277 = vrot.slane %v866, 4
        %v1278 = vadd.f32 %v866, %v1277
        %v1279 = vrot.slane %v1278, 2
        %v1280 = vadd.f32 %v1278, %v1279
        %v1281 = vrot.slane %v1280, 1
        %v1282 = vadd.f32 %v1280, %v1281
        %v1283 = vrot.slane %v867, 4
        %v1284 = vadd.f32 %v867, %v1283
        %v1285 = vrot.slane %v1284, 2
        %v1286 = vadd.f32 %v1284, %v1285
        %v1287 = vrot.slane %v1286, 1
        %v1288 = vadd.f32 %v1286, %v1287
        %v1289 = vrot.slane %v868, 4
        %v1290 = vadd.f32 %v868, %v1289
        %v1291 = vrot.slane %v1290, 2
        %v1292 = vadd.f32 %v1290, %v1291
        %v1293 = vrot.slane %v1292, 1
        %v1294 = vadd.f32 %v1292, %v1293
        %v1295 = vrot.slane %v869, 4
        %v1296 = vadd.f32 %v869, %v1295
        %v1297 = vrot.slane %v1296, 2
        %v1298 = vadd.f32 %v1296, %v1297
        %v1299 = vrot.slane %v1298, 1
        %v1300 = vadd.f32 %v1298, %v1299
        %v1301 = vrot.slane %v870, 4
        %v1302 = vadd.f32 %v870, %v1301
        %v1303 = vrot.slane %v1302, 2
        %v1304 = vadd.f32 %v1302, %v1303
        %v1305 = vrot.slane %v1304, 1
        %v1306 = vadd.f32 %v1304, %v1305
        %v1307 = vrot.slane %v871, 4
        %v1308 = vadd.f32 %v871, %v1307
        %v1309 = vrot.slane %v1308, 2
        %v1310 = vadd.f32 %v1308, %v1309
        %v1311 = vrot.slane %v1310, 1
        %v1312 = vadd.f32 %v1310, %v1311
        %v1313 = vrot.slane %v872, 4
        %v1314 = vadd.f32 %v872, %v1313
        %v1315 = vrot.slane %v1314, 2
        %v1316 = vadd.f32 %v1314, %v1315
        %v1317 = vrot.slane %v1316, 1
        %v1318 = vadd.f32 %v1316, %v1317
        %v1319 = vrot.slane %v873, 4
        %v1320 = vadd.f32 %v873, %v1319
        %v1321 = vrot.slane %v1320, 2
        %v1322 = vadd.f32 %v1320, %v1321
        %v1323 = vrot.slane %v1322, 1
        %v1324 = vadd.f32 %v1322, %v1323
        %v1325 = vrot.slane %v874, 4
        %v1326 = vadd.f32 %v874, %v1325
        %v1327 = vrot.slane %v1326, 2
        %v1328 = vadd.f32 %v1326, %v1327
        %v1329 = vrot.slane %v1328, 1
        %v1330 = vadd.f32 %v1328, %v1329
        %v1331 = vrot.slane %v875, 4
        %v1332 = vadd.f32 %v875, %v1331
        %v1333 = vrot.slane %v1332, 2
        %v1334 = vadd.f32 %v1332, %v1333
        %v1335 = vrot.slane %v1334, 1
        %v1336 = vadd.f32 %v1334, %v1335
        %v1337 = vrot.slane %v876, 4
        %v1338 = vadd.f32 %v876, %v1337
        %v1339 = vrot.slane %v1338, 2
        %v1340 = vadd.f32 %v1338, %v1339
        %v1341 = vrot.slane %v1340, 1
        %v1342 = vadd.f32 %v1340, %v1341
        %v1343 = vrot.slane %v877, 4
        %v1344 = vadd.f32 %v877, %v1343
        %v1345 = vrot.slane %v1344, 2
        %v1346 = vadd.f32 %v1344, %v1345
        %v1347 = vrot.slane %v1346, 1
        %v1348 = vadd.f32 %v1346, %v1347
        %v1349 = vrot.slane %v878, 4
        %v1350 = vadd.f32 %v878, %v1349
        %v1351 = vrot.slane %v1350, 2
        %v1352 = vadd.f32 %v1350, %v1351
        %v1353 = vrot.slane %v1352, 1
        %v1354 = vadd.f32 %v1352, %v1353
        %v1355 = vrot.slane %v879, 4
        %v1356 = vadd.f32 %v879, %v1355
        %v1357 = vrot.slane %v1356, 2
        %v1358 = vadd.f32 %v1356, %v1357
        %v1359 = vrot.slane %v1358, 1
        %v1360 = vadd.f32 %v1358, %v1359
        %v1361 = vrot.slane %v880, 4
        %v1362 = vadd.f32 %v880, %v1361
        %v1363 = vrot.slane %v1362, 2
        %v1364 = vadd.f32 %v1362, %v1363
        %v1365 = vrot.slane %v1364, 1
        %v1366 = vadd.f32 %v1364, %v1365
        %v1367 = vrot.slane %v881, 4
        %v1368 = vadd.f32 %v881, %v1367
        %v1369 = vrot.slane %v1368, 2
        %v1370 = vadd.f32 %v1368, %v1369
        %v1371 = vrot.slane %v1370, 1
        %v1372 = vadd.f32 %v1370, %v1371
        %v1373 = vrot.slane %v882, 4
        %v1374 = vadd.f32 %v882, %v1373
        %v1375 = vrot.slane %v1374, 2
        %v1376 = vadd.f32 %v1374, %v1375
        %v1377 = vrot.slane %v1376, 1
        %v1378 = vadd.f32 %v1376, %v1377
        %v1379 = vrot.slane %v883, 4
        %v1380 = vadd.f32 %v883, %v1379
        %v1381 = vrot.slane %v1380, 2
        %v1382 = vadd.f32 %v1380, %v1381
        %v1383 = vrot.slane %v1382, 1
        %v1384 = vadd.f32 %v1382, %v1383
        %v1385 = vrot.slane %v884, 4
        %v1386 = vadd.f32 %v884, %v1385
        %v1387 = vrot.slane %v1386, 2
        %v1388 = vadd.f32 %v1386, %v1387
        %v1389 = vrot.slane %v1388, 1
        %v1390 = vadd.f32 %v1388, %v1389
        %v1391 = vrot.slane %v885, 4
        %v1392 = vadd.f32 %v885, %v1391
        %v1393 = vrot.slane %v1392, 2
        %v1394 = vadd.f32 %v1392, %v1393
        %v1395 = vrot.slane %v1394, 1
        %v1396 = vadd.f32 %v1394, %v1395
        %v1397 = vrot.slane %v886, 4
        %v1398 = vadd.f32 %v886, %v1397
        %v1399 = vrot.slane %v1398, 2
        %v1400 = vadd.f32 %v1398, %v1399
        %v1401 = vrot.slane %v1400, 1
        %v1402 = vadd.f32 %v1400, %v1401
        %v1403 = vrot.slane %v887, 4
        %v1404 = vadd.f32 %v887, %v1403
        %v1405 = vrot.slane %v1404, 2
        %v1406 = vadd.f32 %v1404, %v1405
        %v1407 = vrot.slane %v1406, 1
        %v1408 = vadd.f32 %v1406, %v1407
        %v1409 = vrot.slane %v888, 4
        %v1410 = vadd.f32 %v888, %v1409
        %v1411 = vrot.slane %v1410, 2
        %v1412 = vadd.f32 %v1410, %v1411
        %v1413 = vrot.slane %v1412, 1
        %v1414 = vadd.f32 %v1412, %v1413
        %v1415 = vrot.slane %v889, 4
        %v1416 = vadd.f32 %v889, %v1415
        %v1417 = vrot.slane %v1416, 2
        %v1418 = vadd.f32 %v1416, %v1417
        %v1419 = vrot.slane %v1418, 1
        %v1420 = vadd.f32 %v1418, %v1419
        %v1421 = vrot.slane %v890, 4
        %v1422 = vadd.f32 %v890, %v1421
        %v1423 = vrot.slane %v1422, 2
        %v1424 = vadd.f32 %v1422, %v1423
        %v1425 = vrot.slane %v1424, 1
        %v1426 = vadd.f32 %v1424, %v1425
        %v1427 = vrot.slane %v891, 4
        %v1428 = vadd.f32 %v891, %v1427
        %v1429 = vrot.slane %v1428, 2
        %v1430 = vadd.f32 %v1428, %v1429
        %v1431 = vrot.slane %v1430, 1
        %v1432 = vadd.f32 %v1430, %v1431
        %v1433 = vrot.slane %v892, 4
        %v1434 = vadd.f32 %v892, %v1433
        %v1435 = vrot.slane %v1434, 2
        %v1436 = vadd.f32 %v1434, %v1435
        %v1437 = vrot.slane %v1436, 1
        %v1438 = vadd.f32 %v1436, %v1437
        %v1439 = vrot.slane %v893, 4
        %v1440 = vadd.f32 %v893, %v1439
        %v1441 = vrot.slane %v1440, 2
        %v1442 = vadd.f32 %v1440, %v1441
        %v1443 = vrot.slane %v1442, 1
        %v1444 = vadd.f32 %v1442, %v1443
        %v1445 = vrot.slane %v894, 4
        %v1446 = vadd.f32 %v894, %v1445
        %v1447 = vrot.slane %v1446, 2
        %v1448 = vadd.f32 %v1446, %v1447
        %v1449 = vrot.slane %v1448, 1
        %v1450 = vadd.f32 %v1448, %v1449
        %v1451 = vrot.slane %v895, 4
        %v1452 = vadd.f32 %v895, %v1451
        %v1453 = vrot.slane %v1452, 2
        %v1454 = vadd.f32 %v1452, %v1453
        %v1455 = vrot.slane %v1454, 1
        %v1456 = vadd.f32 %v1454, %v1455
        %v1457 = vrot.slane %v896, 4
        %v1458 = vadd.f32 %v896, %v1457
        %v1459 = vrot.slane %v1458, 2
        %v1460 = vadd.f32 %v1458, %v1459
        %v1461 = vrot.slane %v1460, 1
        %v1462 = vadd.f32 %v1460, %v1461
        %v1463 = vrot.slane %v897, 4
        %v1464 = vadd.f32 %v897, %v1463
        %v1465 = vrot.slane %v1464, 2
        %v1466 = vadd.f32 %v1464, %v1465
        %v1467 = vrot.slane %v1466, 1
        %v1468 = vadd.f32 %v1466, %v1467
        %v1469 = vrot.slane %v898, 4
        %v1470 = vadd.f32 %v898, %v1469
        %v1471 = vrot.slane %v1470, 2
        %v1472 = vadd.f32 %v1470, %v1471
        %v1473 = vrot.slane %v1472, 1
        %v1474 = vadd.f32 %v1472, %v1473
        %v1475 = vld [vmem:[%s419] sm:$0xff]
        %v1476 = vld [vmem:[%s419 + $0x8] sm:$0xff]
        %v1477 = vpack.c.bf16 %v1476, %v1475
        %v1478 = vld [vmem:[#allocation5] sm:$0xff]
        %v1479 = vld [vmem:[#allocation5 + $0x8] sm:$0xff]
        %v1480 = vld [vmem:[#allocation5 + $0x10] sm:$0xff]
        %v1481 = vld [vmem:[#allocation5 + $0x18] sm:$0xff]
        %v1482 = vld [vmem:[#allocation5 + $0x20] sm:$0xff]
        %v1483 = vld [vmem:[#allocation5 + $0x28] sm:$0xff]
        %v1490 = vunpack.c.l.b16 %v1478
        %v1491 = vunpack.c.h.b16 %v1478
        %v1492 = vunpack.c.l.b16 %v1479
        %v1493 = vunpack.c.h.b16 %v1479
        %v1494 = vunpack.c.l.b16 %v1480
        %v1495 = vunpack.c.h.b16 %v1480
        %v1496 = vunpack.c.l.b16 %v1481
        %v1497 = vunpack.c.h.b16 %v1481
        %v1498 = vunpack.c.l.b16 %v1482
        %v1499 = vunpack.c.h.b16 %v1482
        %v1500 = vunpack.c.l.b16 %v1483
        %v1501 = vunpack.c.h.b16 %v1483
        %v1502 = vpack.c.b16 %v1496, %v1490
        %v1503 = vpack.c.b16 %v1497, %v1491
        %v1504 = vpack.c.b16 %v1498, %v1492
        %v1505 = vpack.c.b16 %v1499, %v1493
        %v1506 = vpack.c.b16 %v1500, %v1494
        %v1507 = vpack.c.b16 %v1501, %v1495
        %vm1514 = vcmask 130048
        %v1516 = vsel %vm1514, %v1477, 0
        %1518 = vmatprep.subr.bf16.mxu0 %v1503
        %1519 = vmatpush1.bf16.msra.mxu0 %v1502
        %1520 = vmatprep.subr.bf16.mxu0 0
        %1521 = vmatpush1.bf16.msra.mxu0 0
        %1522 = vmatprep.subr.bf16.mxu0 0
        %1523 = vmatpush1.bf16.msra.mxu0 0
        %1524 = vmatprep.subr.bf16.mxu0 0
        %1525 = vmatpush1.bf16.msra.mxu0 0
        %1526 = vmatprep.subr.bf16.mxu0 0
        %1527 = vmatpush1.bf16.msra.mxu0 0
        %1528 = vmatprep.subr.bf16.mxu0 0
        %1529 = vmatpush1.bf16.msra.mxu0 0
        %1530 = vmatprep.subr.bf16.mxu0 0
        %1531 = vmatpush1.bf16.msra.mxu0 0
        %1532 = vmatprep.subr.bf16.mxu0 0
        %1533 = vmatpush1.bf16.msra.mxu0 0
        %1534 = vmatprep.subr.bf16.mxu0 0
        %1535 = vmatpush1.bf16.msra.mxu0 0
        %1536 = vmatprep.subr.bf16.mxu0 0
        %1537 = vmatpush1.bf16.msra.mxu0 0
        %1538 = vmatprep.subr.bf16.mxu0 0
        %1539 = vmatpush1.bf16.msra.mxu0 0
        %1540 = vmatprep.subr.bf16.mxu0 0
        %1541 = vmatpush1.bf16.msra.mxu0 0
        %1542 = vmatprep.subr.bf16.mxu0 0
        %1543 = vmatpush1.bf16.msra.mxu0 0
        %1544 = vmatprep.subr.bf16.mxu0 0
        %1545 = vmatpush1.bf16.msra.mxu0 0
        %1546 = vmatprep.subr.bf16.mxu0 0
        %1547 = vmatpush1.bf16.msra.mxu0 0
        %1548 = vmatprep.subr.bf16.mxu0 0
        %1549 = vmatpush1.bf16.msra.mxu0 0
        %1550 = vmatprep.mubr.bf16.mxu0 0
        %1551 = vmatmul.mubr.bf16.gmra.mrb[0].mxu0 %v1516
        %v1552 = vpop.f32.mrb[0].mxu0
        %v1553 = vadd.f32 0.0, %v1552
        %v1554 = vpop.f32.mrb[0].mxu0
        %v1555 = vadd.f32 0.0, %v1554
        %v1556 = vpop.f32.mrb[0].mxu0
        %v1557 = vadd.f32 0.0, %v1556
        %v1558 = vpop.f32.mrb[0].mxu0
        %v1559 = vadd.f32 0.0, %v1558
        %1560 = vdwg.mxu0
        %1561 = vmatprep.subr.bf16.mxu0 %v1505
        %1562 = vmatpush1.bf16.msra.mxu0 %v1504
        %1563 = vmatprep.subr.bf16.mxu0 0
        %1564 = vmatpush1.bf16.msra.mxu0 0
        %1565 = vmatprep.subr.bf16.mxu0 0
        %1566 = vmatpush1.bf16.msra.mxu0 0
        %1567 = vmatprep.subr.bf16.mxu0 0
        %1568 = vmatpush1.bf16.msra.mxu0 0
        %1569 = vmatprep.subr.bf16.mxu0 0
        %1570 = vmatpush1.bf16.msra.mxu0 0
        %1571 = vmatprep.subr.bf16.mxu0 0
        %1572 = vmatpush1.bf16.msra.mxu0 0
        %1573 = vmatprep.subr.bf16.mxu0 0
        %1574 = vmatpush1.bf16.msra.mxu0 0
        %1575 = vmatprep.subr.bf16.mxu0 0
        %1576 = vmatpush1.bf16.msra.mxu0 0
        %1577 = vmatprep.subr.bf16.mxu0 0
        %1578 = vmatpush1.bf16.msra.mxu0 0
        %1579 = vmatprep.subr.bf16.mxu0 0
        %1580 = vmatpush1.bf16.msra.mxu0 0
        %1581 = vmatprep.subr.bf16.mxu0 0
        %1582 = vmatpush1.bf16.msra.mxu0 0
        %1583 = vmatprep.subr.bf16.mxu0 0
        %1584 = vmatpush1.bf16.msra.mxu0 0
        %1585 = vmatprep.subr.bf16.mxu0 0
        %1586 = vmatpush1.bf16.msra.mxu0 0
        %1587 = vmatprep.subr.bf16.mxu0 0
        %1588 = vmatpush1.bf16.msra.mxu0 0
        %1589 = vmatprep.subr.bf16.mxu0 0
        %1590 = vmatpush1.bf16.msra.mxu0 0
        %1591 = vmatprep.subr.bf16.mxu0 0
        %1592 = vmatpush1.bf16.msra.mxu0 0
        %1593 = vmatprep.mubr.bf16.mxu0 0
        %1594 = vmatmul.mubr.bf16.gmra.mrb[0].mxu0 %v1516
        %v1595 = vpop.f32.mrb[0].mxu0
        %v1596 = vadd.f32 0.0, %v1595
        %v1597 = vpop.f32.mrb[0].mxu0
        %v1598 = vadd.f32 0.0, %v1597
        %v1599 = vpop.f32.mrb[0].mxu0
        %v1600 = vadd.f32 0.0, %v1599
        %v1601 = vpop.f32.mrb[0].mxu0
        %v1602 = vadd.f32 0.0, %v1601
        %1603 = vdwg.mxu0
        %1604 = vmatprep.subr.bf16.mxu0 %v1507
        %1605 = vmatpush1.bf16.msra.mxu0 %v1506
        %1606 = vmatprep.subr.bf16.mxu0 0
        %1607 = vmatpush1.bf16.msra.mxu0 0
        %1608 = vmatprep.subr.bf16.mxu0 0
        %1609 = vmatpush1.bf16.msra.mxu0 0
        %1610 = vmatprep.subr.bf16.mxu0 0
        %1611 = vmatpush1.bf16.msra.mxu0 0
        %1612 = vmatprep.subr.bf16.mxu0 0
        %1613 = vmatpush1.bf16.msra.mxu0 0
        %1614 = vmatprep.subr.bf16.mxu0 0
        %1615 = vmatpush1.bf16.msra.mxu0 0
        %1616 = vmatprep.subr.bf16.mxu0 0
        %1617 = vmatpush1.bf16.msra.mxu0 0
        %1618 = vmatprep.subr.bf16.mxu0 0
        %1619 = vmatpush1.bf16.msra.mxu0 0
        %1620 = vmatprep.subr.bf16.mxu0 0
        %1621 = vmatpush1.bf16.msra.mxu0 0
        %1622 = vmatprep.subr.bf16.mxu0 0
        %1623 = vmatpush1.bf16.msra.mxu0 0
        %1624 = vmatprep.subr.bf16.mxu0 0
        %1625 = vmatpush1.bf16.msra.mxu0 0
        %1626 = vmatprep.subr.bf16.mxu0 0
        %1627 = vmatpush1.bf16.msra.mxu0 0
        %1628 = vmatprep.subr.bf16.mxu0 0
        %1629 = vmatpush1.bf16.msra.mxu0 0
        %1630 = vmatprep.subr.bf16.mxu0 0
        %1631 = vmatpush1.bf16.msra.mxu0 0
        %1632 = vmatprep.subr.bf16.mxu0 0
        %1633 = vmatpush1.bf16.msra.mxu0 0
        %1634 = vmatprep.subr.bf16.mxu0 0
        %1635 = vmatpush1.bf16.msra.mxu0 0
        %1636 = vmatprep.mubr.bf16.mxu0 0
        %1637 = vmatmul.mubr.bf16.gmra.mrb[0].mxu0 %v1516
        %v1638 = vpop.f32.mrb[0].mxu0
        %v1639 = vadd.f32 0.0, %v1638
        %v1640 = vpop.f32.mrb[0].mxu0
        %v1641 = vadd.f32 0.0, %v1640
        %v1642 = vpop.f32.mrb[0].mxu0
        %v1643 = vadd.f32 0.0, %v1642
        %v1644 = vpop.f32.mrb[0].mxu0
        %v1645 = vadd.f32 0.0, %v1644
        %1646 = vdwg.mxu0
        %v1647 = vld [vmem:[%s407] sm:$0xff]
        %v1648 = vld [vmem:[%s407 + $0x8] sm:$0xff]
        %v1649 = vld [vmem:[%s407 + $0x10] sm:$0xff]
        %v1650 = vld [vmem:[%s407 + $0x18] sm:$0xff]
        %v1651 = vld [vmem:[%s407 + $0x20] sm:$0xff]
        %v1652 = vld [vmem:[%s407 + $0x28] sm:$0xff]
        %v1653 = vunpack.c.l.bf16 %v1647
        %v1654 = vunpack.c.h.bf16 %v1647
        %v1655 = vunpack.c.l.bf16 %v1648
        %v1656 = vunpack.c.h.bf16 %v1648
        %v1657 = vunpack.c.l.bf16 %v1649
        %v1658 = vunpack.c.h.bf16 %v1649
        %v1659 = vunpack.c.l.bf16 %v1650
        %v1660 = vunpack.c.h.bf16 %v1650
        %v1661 = vunpack.c.l.bf16 %v1651
        %v1662 = vunpack.c.h.bf16 %v1651
        %v1663 = vunpack.c.l.bf16 %v1652
        %v1664 = vunpack.c.h.bf16 %v1652
        %v1665 = vstv %s428
        %v1666 = vmul.f32 %v1665, %v1653
        %v1667 = vmul.f32 %v1665, %v1654
        %v1668 = vmul.f32 %v1665, %v1655
        %v1669 = vmul.f32 %v1665, %v1656
        %v1670 = vmul.f32 %v1665, %v1657
        %v1671 = vmul.f32 %v1665, %v1658
        %v1672 = vmul.f32 %v1665, %v1659
        %v1673 = vmul.f32 %v1665, %v1660
        %v1674 = vmul.f32 %v1665, %v1661
        %v1675 = vmul.f32 %v1665, %v1662
        %v1676 = vmul.f32 %v1665, %v1663
        %v1677 = vmul.f32 %v1665, %v1664
        %vm1774 = vcmask 1041409
        %v1775 = vsel %vm1774, %v940, %v904
        %vm1776 = vcmask 1042434
        %v1777 = vsel %vm1776, %v976, %v1775
        %vm1778 = vcmask 1043459
        %v1779 = vsel %vm1778, %v1012, %v1777
        %vm1780 = vcmask 1044484
        %v1781 = vsel %vm1780, %v1048, %v1779
        %vm1782 = vcmask 1045509
        %v1783 = vsel %vm1782, %v1084, %v1781
        %vm1784 = vcmask 1046534
        %v1785 = vsel %vm1784, %v1120, %v1783
        %vm1786 = vcmask 1047559
        %v1787 = vsel %vm1786, %v1156, %v1785
        %v1788 = vsel %vm1774, %v946, %v910
        %v1789 = vsel %vm1776, %v982, %v1788
        %v1790 = vsel %vm1778, %v1018, %v1789
        %v1791 = vsel %vm1780, %v1054, %v1790
        %v1792 = vsel %vm1782, %v1090, %v1791
        %v1793 = vsel %vm1784, %v1126, %v1792
        %v1794 = vsel %vm1786, %v1162, %v1793
        %v1795 = vsel %vm1774, %v952, %v916
        %v1796 = vsel %vm1776, %v988, %v1795
        %v1797 = vsel %vm1778, %v1024, %v1796
        %v1798 = vsel %vm1780, %v1060, %v1797
        %v1799 = vsel %vm1782, %v1096, %v1798
        %v1800 = vsel %vm1784, %v1132, %v1799
        %v1801 = vsel %vm1786, %v1168, %v1800
        %v1802 = vsel %vm1774, %v958, %v922
        %v1803 = vsel %vm1776, %v994, %v1802
        %v1804 = vsel %vm1778, %v1030, %v1803
        %v1805 = vsel %vm1780, %v1066, %v1804
        %v1806 = vsel %vm1782, %v1102, %v1805
        %v1807 = vsel %vm1784, %v1138, %v1806
        %v1808 = vsel %vm1786, %v1174, %v1807
        %v1809 = vsel %vm1774, %v964, %v928
        %v1810 = vsel %vm1776, %v1000, %v1809
        %v1811 = vsel %vm1778, %v1036, %v1810
        %v1812 = vsel %vm1780, %v1072, %v1811
        %v1813 = vsel %vm1782, %v1108, %v1812
        %v1814 = vsel %vm1784, %v1144, %v1813
        %v1815 = vsel %vm1786, %v1180, %v1814
        %v1816 = vsel %vm1774, %v970, %v934
        %v1817 = vsel %vm1776, %v1006, %v1816
        %v1818 = vsel %vm1778, %v1042, %v1817
        %v1819 = vsel %vm1780, %v1078, %v1818
        %v1820 = vsel %vm1782, %v1114, %v1819
        %v1821 = vsel %vm1784, %v1150, %v1820
        %v1822 = vsel %vm1786, %v1186, %v1821
        %v1823 = vsel %vm1774, %v1228, %v1192
        %v1824 = vsel %vm1776, %v1264, %v1823
        %v1825 = vsel %vm1778, %v1300, %v1824
        %v1826 = vsel %vm1780, %v1336, %v1825
        %v1827 = vsel %vm1782, %v1372, %v1826
        %v1828 = vsel %vm1784, %v1408, %v1827
        %v1829 = vsel %vm1786, %v1444, %v1828
        %v1830 = vsel %vm1774, %v1234, %v1198
        %v1831 = vsel %vm1776, %v1270, %v1830
        %v1832 = vsel %vm1778, %v1306, %v1831
        %v1833 = vsel %vm1780, %v1342, %v1832
        %v1834 = vsel %vm1782, %v1378, %v1833
        %v1835 = vsel %vm1784, %v1414, %v1834
        %v1836 = vsel %vm1786, %v1450, %v1835
        %v1837 = vsel %vm1774, %v1240, %v1204
        %v1838 = vsel %vm1776, %v1276, %v1837
        %v1839 = vsel %vm1778, %v1312, %v1838
        %v1840 = vsel %vm1780, %v1348, %v1839
        %v1841 = vsel %vm1782, %v1384, %v1840
        %v1842 = vsel %vm1784, %v1420, %v1841
        %v1843 = vsel %vm1786, %v1456, %v1842
        %v1844 = vsel %vm1774, %v1246, %v1210
        %v1845 = vsel %vm1776, %v1282, %v1844
        %v1846 = vsel %vm1778, %v1318, %v1845
        %v1847 = vsel %vm1780, %v1354, %v1846
        %v1848 = vsel %vm1782, %v1390, %v1847
        %v1849 = vsel %vm1784, %v1426, %v1848
        %v1850 = vsel %vm1786, %v1462, %v1849
        %v1851 = vsel %vm1774, %v1252, %v1216
        %v1852 = vsel %vm1776, %v1288, %v1851
        %v1853 = vsel %vm1778, %v1324, %v1852
        %v1854 = vsel %vm1780, %v1360, %v1853
        %v1855 = vsel %vm1782, %v1396, %v1854
        %v1856 = vsel %vm1784, %v1432, %v1855
        %v1857 = vsel %vm1786, %v1468, %v1856
        %v1858 = vsel %vm1774, %v1258, %v1222
        %v1859 = vsel %vm1776, %v1294, %v1858
        %v1860 = vsel %vm1778, %v1330, %v1859
        %v1861 = vsel %vm1780, %v1366, %v1860
        %v1862 = vsel %vm1782, %v1402, %v1861
        %v1863 = vsel %vm1784, %v1438, %v1862
        %v1864 = vsel %vm1786, %v1474, %v1863
        %v1877 = vadd.f32 %v1666, %v1787
        %v1878 = vadd.f32 %v1667, %v1794
        %v1879 = vadd.f32 %v1668, %v1801
        %v1880 = vadd.f32 %v1669, %v1808
        %v1881 = vadd.f32 %v1670, %v1815
        %v1882 = vadd.f32 %v1671, %v1822
        %v1883 = vadd.f32 %v1672, %v1829
        %v1884 = vadd.f32 %v1673, %v1836
        %v1885 = vadd.f32 %v1674, %v1843
        %v1886 = vadd.f32 %v1675, %v1850
        %v1887 = vadd.f32 %v1676, %v1857
        %v1888 = vadd.f32 %v1677, %v1864
        %v1889 = vstv %s431
        %v1890 = vmul.f32 %v1889, %v1553
        %v1891 = vmul.f32 %v1889, %v1555
        %v1892 = vmul.f32 %v1889, %v1596
        %v1893 = vmul.f32 %v1889, %v1598
        %v1894 = vmul.f32 %v1889, %v1639
        %v1895 = vmul.f32 %v1889, %v1641
        %v1896 = vmul.f32 %v1889, %v1557
        %v1897 = vmul.f32 %v1889, %v1559
        %v1898 = vmul.f32 %v1889, %v1600
        %v1899 = vmul.f32 %v1889, %v1602
        %v1900 = vmul.f32 %v1889, %v1643
        %v1901 = vmul.f32 %v1889, %v1645
        %v1902 = vadd.f32 %v1877, %v1890
        %v1903 = vadd.f32 %v1878, %v1891
        %v1904 = vadd.f32 %v1879, %v1892
        %v1905 = vadd.f32 %v1880, %v1893
        %v1906 = vadd.f32 %v1881, %v1894
        %v1907 = vadd.f32 %v1882, %v1895
        %v1908 = vadd.f32 %v1883, %v1896
        %v1909 = vadd.f32 %v1884, %v1897
        %v1910 = vadd.f32 %v1885, %v1898
        %v1911 = vadd.f32 %v1886, %v1899
        %v1912 = vadd.f32 %v1887, %v1900
        %v1913 = vadd.f32 %v1888, %v1901
        %v1914 = vstv %s432
        %v1915 = vadd.f32 %v1902, %v1914
        %v1916 = vadd.f32 %v1903, %v1914
        %v1917 = vadd.f32 %v1904, %v1914
        %v1918 = vadd.f32 %v1905, %v1914
        %v1919 = vadd.f32 %v1906, %v1914
        %v1920 = vadd.f32 %v1907, %v1914
        %v1921 = vadd.f32 %v1908, %v1914
        %v1922 = vadd.f32 %v1909, %v1914
        %v1923 = vadd.f32 %v1910, %v1914
        %v1924 = vadd.f32 %v1911, %v1914
        %v1925 = vadd.f32 %v1912, %v1914
        %v1926 = vadd.f32 %v1913, %v1914
        %v1927 = vld [vmem:[%s6] sm:$0xff]
        %v1928 = vld [vmem:[%s6 + $0x8] sm:$0xf]
        %v1941 = vcombine.low %v1915, %v1916
        %v1942 = vcombine.high %v1915, %v1916
        %v1943 = vcombine.low %v1917, %v1918
        %v1944 = vcombine.high %v1917, %v1918
        %v1945 = vcombine.low %v1919, %v1920
        %v1946 = vcombine.high %v1919, %v1920
        %v1948 = vunpack.c.l.s4 1966171168
        %v1949 = vunpack.c.0.s8 %v1948
        %v1950 = vlaneseq
        %v1951 = vshrl.u32 %v1950, 7
        %v1952 = vsub.s32 %v1949, %v1951
        %v1953 = vrot.slane %v1941, %v1952
        %v1955 = vunpack.c.l.s4 1966171168
        %v1956 = vunpack.c.0.s8 %v1955
        %v1957 = vlaneseq
        %v1958 = vshrl.u32 %v1957, 7
        %v1959 = vsub.s32 %v1956, %v1958
        %v1960 = vrot.slane %v1942, %v1959
        %v1962 = vunpack.c.l.s4 1966171168
        %v1963 = vunpack.c.0.s8 %v1962
        %v1964 = vlaneseq
        %v1965 = vshrl.u32 %v1964, 7
        %v1966 = vsub.s32 %v1963, %v1965
        %v1967 = vrot.slane %v1943, %v1966
        %v1969 = vunpack.c.l.s4 1966171168
        %v1970 = vunpack.c.0.s8 %v1969
        %v1971 = vlaneseq
        %v1972 = vshrl.u32 %v1971, 7
        %v1973 = vsub.s32 %v1970, %v1972
        %v1974 = vrot.slane %v1944, %v1973
        %v1976 = vunpack.c.l.s4 1966171168
        %v1977 = vunpack.c.0.s8 %v1976
        %v1978 = vlaneseq
        %v1979 = vshrl.u32 %v1978, 7
        %v1980 = vsub.s32 %v1977, %v1979
        %v1981 = vrot.slane %v1945, %v1980
        %v1983 = vunpack.c.l.s4 1966171168
        %v1984 = vunpack.c.0.s8 %v1983
        %v1985 = vlaneseq
        %v1986 = vshrl.u32 %v1985, 7
        %v1987 = vsub.s32 %v1984, %v1986
        %v1988 = vrot.slane %v1946, %v1987
        %v1989 = vcombine.low %v1953, %v1967
        %v1990 = vcombine.high %v1953, %v1967
        %v1991 = vcombine.low %v1960, %v1974
        %v1992 = vcombine.high %v1960, %v1974
        %v1993 = vcombine.high %v1981, %v1981
        %v1994 = vcombine.high %v1988, %v1988
        %v1996 = vunpack.c.l.s4 1966171168
        %v1997 = vunpack.c.0.s8 %v1996
        %v1998 = vlaneseq
        %v1999 = vshrl.u32 %v1998, 7
        %v2000 = vsub.s32 %v1997, %v1999
        %v2001 = vrot.slane %v1989, %v2000
        %v2003 = vunpack.c.l.s4 1966171168
        %v2004 = vunpack.c.0.s8 %v2003
        %v2005 = vlaneseq
        %v2006 = vshrl.u32 %v2005, 7
        %v2007 = vsub.s32 %v2004, %v2006
        %v2008 = vrot.slane %v1991, %v2007
        %v2010 = vunpack.c.l.s4 1966171168
        %v2011 = vunpack.c.0.s8 %v2010
        %v2012 = vlaneseq
        %v2013 = vshrl.u32 %v2012, 7
        %v2014 = vsub.s32 %v2011, %v2013
        %v2015 = vrot.slane %v1990, %v2014
        %v2017 = vunpack.c.l.s4 1966171168
        %v2018 = vunpack.c.0.s8 %v2017
        %v2019 = vlaneseq
        %v2020 = vshrl.u32 %v2019, 7
        %v2021 = vsub.s32 %v2018, %v2020
        %v2022 = vrot.slane %v1992, %v2021
        %v2024 = vunpack.c.l.s4 1966171168
        %v2025 = vunpack.c.0.s8 %v2024
        %v2026 = vlaneseq
        %v2027 = vshrl.u32 %v2026, 7
        %v2028 = vsub.s32 %v2025, %v2027
        %v2029 = vrot.slane %v1981, %v2028
        %v2031 = vunpack.c.l.s4 1966171168
        %v2032 = vunpack.c.0.s8 %v2031
        %v2033 = vlaneseq
        %v2034 = vshrl.u32 %v2033, 7
        %v2035 = vsub.s32 %v2032, %v2034
        %v2036 = vrot.slane %v1988, %v2035
        %v2038 = vunpack.c.l.s4 1966171168
        %v2039 = vunpack.c.0.s8 %v2038
        %v2040 = vlaneseq
        %v2041 = vshrl.u32 %v2040, 7
        %v2042 = vsub.s32 %v2039, %v2041
        %v2043 = vrot.slane %v1993, %v2042
        %v2045 = vunpack.c.l.s4 1966171168
        %v2046 = vunpack.c.0.s8 %v2045
        %v2047 = vlaneseq
        %v2048 = vshrl.u32 %v2047, 7
        %v2049 = vsub.s32 %v2046, %v2048
        %v2050 = vrot.slane %v1994, %v2049
        %v2051 = vcombine.low %v2001, %v2029
        %v2052 = vcombine.high %v2001, %v2029
        %v2053 = vcombine.low %v2008, %v2036
        %v2054 = vcombine.high %v2008, %v2036
        %v2055 = vcombine.low %v2015, %v2043
        %v2056 = vcombine.high %v2015, %v2043
        %v2057 = vcombine.low %v2022, %v2050
        %v2058 = vcombine.high %v2022, %v2050
        %v2059 = vcombine.low %v1921, %v1922
        %v2060 = vcombine.high %v1921, %v1922
        %v2061 = vcombine.low %v1923, %v1924
        %v2062 = vcombine.high %v1923, %v1924
        %v2063 = vcombine.low %v1925, %v1926
        %v2064 = vcombine.high %v1925, %v1926
        %v2066 = vunpack.c.l.s4 1966171168
        %v2067 = vunpack.c.0.s8 %v2066
        %v2068 = vlaneseq
        %v2069 = vshrl.u32 %v2068, 7
        %v2070 = vsub.s32 %v2067, %v2069
        %v2071 = vrot.slane %v2059, %v2070
        %v2073 = vunpack.c.l.s4 1966171168
        %v2074 = vunpack.c.0.s8 %v2073
        %v2075 = vlaneseq
        %v2076 = vshrl.u32 %v2075, 7
        %v2077 = vsub.s32 %v2074, %v2076
        %v2078 = vrot.slane %v2060, %v2077
        %v2080 = vunpack.c.l.s4 1966171168
        %v2081 = vunpack.c.0.s8 %v2080
        %v2082 = vlaneseq
        %v2083 = vshrl.u32 %v2082, 7
        %v2084 = vsub.s32 %v2081, %v2083
        %v2085 = vrot.slane %v2061, %v2084
        %v2087 = vunpack.c.l.s4 1966171168
        %v2088 = vunpack.c.0.s8 %v2087
        %v2089 = vlaneseq
        %v2090 = vshrl.u32 %v2089, 7
        %v2091 = vsub.s32 %v2088, %v2090
        %v2092 = vrot.slane %v2062, %v2091
        %v2094 = vunpack.c.l.s4 1966171168
        %v2095 = vunpack.c.0.s8 %v2094
        %v2096 = vlaneseq
        %v2097 = vshrl.u32 %v2096, 7
        %v2098 = vsub.s32 %v2095, %v2097
        %v2099 = vrot.slane %v2063, %v2098
        %v2101 = vunpack.c.l.s4 1966171168
        %v2102 = vunpack.c.0.s8 %v2101
        %v2103 = vlaneseq
        %v2104 = vshrl.u32 %v2103, 7
        %v2105 = vsub.s32 %v2102, %v2104
        %v2106 = vrot.slane %v2064, %v2105
        %v2107 = vcombine.low %v2071, %v2085
        %v2108 = vcombine.high %v2071, %v2085
        %v2109 = vcombine.low %v2078, %v2092
        %v2110 = vcombine.high %v2078, %v2092
        %v2111 = vcombine.high %v2099, %v2099
        %v2112 = vcombine.high %v2106, %v2106
        %v2114 = vunpack.c.l.s4 1966171168
        %v2115 = vunpack.c.0.s8 %v2114
        %v2116 = vlaneseq
        %v2117 = vshrl.u32 %v2116, 7
        %v2118 = vsub.s32 %v2115, %v2117
        %v2119 = vrot.slane %v2107, %v2118
        %v2121 = vunpack.c.l.s4 1966171168
        %v2122 = vunpack.c.0.s8 %v2121
        %v2123 = vlaneseq
        %v2124 = vshrl.u32 %v2123, 7
        %v2125 = vsub.s32 %v2122, %v2124
        %v2126 = vrot.slane %v2109, %v2125
        %v2128 = vunpack.c.l.s4 1966171168
        %v2129 = vunpack.c.0.s8 %v2128
        %v2130 = vlaneseq
        %v2131 = vshrl.u32 %v2130, 7
        %v2132 = vsub.s32 %v2129, %v2131
        %v2133 = vrot.slane %v2108, %v2132
        %v2135 = vunpack.c.l.s4 1966171168
        %v2136 = vunpack.c.0.s8 %v2135
        %v2137 = vlaneseq
        %v2138 = vshrl.u32 %v2137, 7
        %v2139 = vsub.s32 %v2136, %v2138
        %v2140 = vrot.slane %v2110, %v2139
        %v2142 = vunpack.c.l.s4 1966171168
        %v2143 = vunpack.c.0.s8 %v2142
        %v2144 = vlaneseq
        %v2145 = vshrl.u32 %v2144, 7
        %v2146 = vsub.s32 %v2143, %v2145
        %v2147 = vrot.slane %v2099, %v2146
        %v2149 = vunpack.c.l.s4 1966171168
        %v2150 = vunpack.c.0.s8 %v2149
        %v2151 = vlaneseq
        %v2152 = vshrl.u32 %v2151, 7
        %v2153 = vsub.s32 %v2150, %v2152
        %v2154 = vrot.slane %v2106, %v2153
        %v2156 = vunpack.c.l.s4 1966171168
        %v2157 = vunpack.c.0.s8 %v2156
        %v2158 = vlaneseq
        %v2159 = vshrl.u32 %v2158, 7
        %v2160 = vsub.s32 %v2157, %v2159
        %v2161 = vrot.slane %v2111, %v2160
        %v2163 = vunpack.c.l.s4 1966171168
        %v2164 = vunpack.c.0.s8 %v2163
        %v2165 = vlaneseq
        %v2166 = vshrl.u32 %v2165, 7
        %v2167 = vsub.s32 %v2164, %v2166
        %v2168 = vrot.slane %v2112, %v2167
        %v2169 = vcombine.low %v2119, %v2147
        %v2170 = vcombine.high %v2119, %v2147
        %v2171 = vcombine.low %v2126, %v2154
        %v2172 = vcombine.high %v2126, %v2154
        %v2173 = vcombine.low %v2133, %v2161
        %v2174 = vcombine.high %v2133, %v2161
        %v2175 = vcombine.low %v2140, %v2168
        %v2176 = vcombine.high %v2140, %v2168
        %v2177 = vlaneseq
        %v2178 = vshrl.u32 %v2177, 7
        %v2179 = vsub.s32 0, %v2178
        %v2180 = vrot.slane %v2051, %v2179
        %v2181 = vlaneseq
        %v2182 = vshrl.u32 %v2181, 7
        %v2183 = vsub.s32 1, %v2182
        %v2184 = vrot.slane %v2051, %v2183
        %v2185 = vlaneseq
        %v2186 = vshrl.u32 %v2185, 7
        %v2187 = vsub.s32 2, %v2186
        %v2188 = vrot.slane %v2051, %v2187
        %v2189 = vlaneseq
        %v2190 = vshrl.u32 %v2189, 7
        %v2191 = vsub.s32 3, %v2190
        %v2192 = vrot.slane %v2051, %v2191
        %v2193 = vlaneseq
        %v2194 = vshrl.u32 %v2193, 7
        %v2195 = vsub.s32 4, %v2194
        %v2196 = vrot.slane %v2051, %v2195
        %v2197 = vlaneseq
        %v2198 = vshrl.u32 %v2197, 7
        %v2199 = vsub.s32 5, %v2198
        %v2200 = vrot.slane %v2051, %v2199
        %v2201 = vlaneseq
        %v2202 = vshrl.u32 %v2201, 7
        %v2203 = vsub.s32 0, %v2202
        %v2204 = vrot.slane %v2055, %v2203
        %v2205 = vlaneseq
        %v2206 = vshrl.u32 %v2205, 7
        %v2207 = vsub.s32 1, %v2206
        %v2208 = vrot.slane %v2055, %v2207
        %v2209 = vlaneseq
        %v2210 = vshrl.u32 %v2209, 7
        %v2211 = vsub.s32 2, %v2210
        %v2212 = vrot.slane %v2055, %v2211
        %v2213 = vlaneseq
        %v2214 = vshrl.u32 %v2213, 7
        %v2215 = vsub.s32 3, %v2214
        %v2216 = vrot.slane %v2055, %v2215
        %v2217 = vlaneseq
        %v2218 = vshrl.u32 %v2217, 7
        %v2219 = vsub.s32 4, %v2218
        %v2220 = vrot.slane %v2055, %v2219
        %v2221 = vlaneseq
        %v2222 = vshrl.u32 %v2221, 7
        %v2223 = vsub.s32 5, %v2222
        %v2224 = vrot.slane %v2055, %v2223
        %v2225 = vlaneseq
        %v2226 = vshrl.u32 %v2225, 7
        %v2227 = vsub.s32 0, %v2226
        %v2228 = vrot.slane %v2052, %v2227
        %v2229 = vlaneseq
        %v2230 = vshrl.u32 %v2229, 7
        %v2231 = vsub.s32 1, %v2230
        %v2232 = vrot.slane %v2052, %v2231
        %v2233 = vlaneseq
        %v2234 = vshrl.u32 %v2233, 7
        %v2235 = vsub.s32 2, %v2234
        %v2236 = vrot.slane %v2052, %v2235
        %v2237 = vlaneseq
        %v2238 = vshrl.u32 %v2237, 7
        %v2239 = vsub.s32 3, %v2238
        %v2240 = vrot.slane %v2052, %v2239
        %v2241 = vlaneseq
        %v2242 = vshrl.u32 %v2241, 7
        %v2243 = vsub.s32 4, %v2242
        %v2244 = vrot.slane %v2052, %v2243
        %v2245 = vlaneseq
        %v2246 = vshrl.u32 %v2245, 7
        %v2247 = vsub.s32 5, %v2246
        %v2248 = vrot.slane %v2052, %v2247
        %v2249 = vlaneseq
        %v2250 = vshrl.u32 %v2249, 7
        %v2251 = vsub.s32 0, %v2250
        %v2252 = vrot.slane %v2056, %v2251
        %v2253 = vlaneseq
        %v2254 = vshrl.u32 %v2253, 7
        %v2255 = vsub.s32 1, %v2254
        %v2256 = vrot.slane %v2056, %v2255
        %v2257 = vlaneseq
        %v2258 = vshrl.u32 %v2257, 7
        %v2259 = vsub.s32 2, %v2258
        %v2260 = vrot.slane %v2056, %v2259
        %v2261 = vlaneseq
        %v2262 = vshrl.u32 %v2261, 7
        %v2263 = vsub.s32 3, %v2262
        %v2264 = vrot.slane %v2056, %v2263
        %v2265 = vlaneseq
        %v2266 = vshrl.u32 %v2265, 7
        %v2267 = vsub.s32 4, %v2266
        %v2268 = vrot.slane %v2056, %v2267
        %v2269 = vlaneseq
        %v2270 = vshrl.u32 %v2269, 7
        %v2271 = vsub.s32 5, %v2270
        %v2272 = vrot.slane %v2056, %v2271
        %v2273 = vlaneseq
        %v2274 = vshrl.u32 %v2273, 7
        %v2275 = vsub.s32 0, %v2274
        %v2276 = vrot.slane %v2053, %v2275
        %v2277 = vlaneseq
        %v2278 = vshrl.u32 %v2277, 7
        %v2279 = vsub.s32 1, %v2278
        %v2280 = vrot.slane %v2053, %v2279
        %v2281 = vlaneseq
        %v2282 = vshrl.u32 %v2281, 7
        %v2283 = vsub.s32 2, %v2282
        %v2284 = vrot.slane %v2053, %v2283
        %v2285 = vlaneseq
        %v2286 = vshrl.u32 %v2285, 7
        %v2287 = vsub.s32 3, %v2286
        %v2288 = vrot.slane %v2053, %v2287
        %v2289 = vlaneseq
        %v2290 = vshrl.u32 %v2289, 7
        %v2291 = vsub.s32 4, %v2290
        %v2292 = vrot.slane %v2053, %v2291
        %v2293 = vlaneseq
        %v2294 = vshrl.u32 %v2293, 7
        %v2295 = vsub.s32 5, %v2294
        %v2296 = vrot.slane %v2053, %v2295
        %v2297 = vlaneseq
        %v2298 = vshrl.u32 %v2297, 7
        %v2299 = vsub.s32 0, %v2298
        %v2300 = vrot.slane %v2057, %v2299
        %v2301 = vlaneseq
        %v2302 = vshrl.u32 %v2301, 7
        %v2303 = vsub.s32 1, %v2302
        %v2304 = vrot.slane %v2057, %v2303
        %v2305 = vlaneseq
        %v2306 = vshrl.u32 %v2305, 7
        %v2307 = vsub.s32 2, %v2306
        %v2308 = vrot.slane %v2057, %v2307
        %v2309 = vlaneseq
        %v2310 = vshrl.u32 %v2309, 7
        %v2311 = vsub.s32 3, %v2310
        %v2312 = vrot.slane %v2057, %v2311
        %v2313 = vlaneseq
        %v2314 = vshrl.u32 %v2313, 7
        %v2315 = vsub.s32 4, %v2314
        %v2316 = vrot.slane %v2057, %v2315
        %v2317 = vlaneseq
        %v2318 = vshrl.u32 %v2317, 7
        %v2319 = vsub.s32 5, %v2318
        %v2320 = vrot.slane %v2057, %v2319
        %v2321 = vlaneseq
        %v2322 = vshrl.u32 %v2321, 7
        %v2323 = vsub.s32 0, %v2322
        %v2324 = vrot.slane %v2054, %v2323
        %v2325 = vlaneseq
        %v2326 = vshrl.u32 %v2325, 7
        %v2327 = vsub.s32 1, %v2326
        %v2328 = vrot.slane %v2054, %v2327
        %v2329 = vlaneseq
        %v2330 = vshrl.u32 %v2329, 7
        %v2331 = vsub.s32 2, %v2330
        %v2332 = vrot.slane %v2054, %v2331
        %v2333 = vlaneseq
        %v2334 = vshrl.u32 %v2333, 7
        %v2335 = vsub.s32 3, %v2334
        %v2336 = vrot.slane %v2054, %v2335
        %v2337 = vlaneseq
        %v2338 = vshrl.u32 %v2337, 7
        %v2339 = vsub.s32 4, %v2338
        %v2340 = vrot.slane %v2054, %v2339
        %v2341 = vlaneseq
        %v2342 = vshrl.u32 %v2341, 7
        %v2343 = vsub.s32 5, %v2342
        %v2344 = vrot.slane %v2054, %v2343
        %v2345 = vlaneseq
        %v2346 = vshrl.u32 %v2345, 7
        %v2347 = vsub.s32 0, %v2346
        %v2348 = vrot.slane %v2058, %v2347
        %v2349 = vlaneseq
        %v2350 = vshrl.u32 %v2349, 7
        %v2351 = vsub.s32 1, %v2350
        %v2352 = vrot.slane %v2058, %v2351
        %v2353 = vlaneseq
        %v2354 = vshrl.u32 %v2353, 7
        %v2355 = vsub.s32 2, %v2354
        %v2356 = vrot.slane %v2058, %v2355
        %v2357 = vlaneseq
        %v2358 = vshrl.u32 %v2357, 7
        %v2359 = vsub.s32 3, %v2358
        %v2360 = vrot.slane %v2058, %v2359
        %v2361 = vlaneseq
        %v2362 = vshrl.u32 %v2361, 7
        %v2363 = vsub.s32 4, %v2362
        %v2364 = vrot.slane %v2058, %v2363
        %v2365 = vlaneseq
        %v2366 = vshrl.u32 %v2365, 7
        %v2367 = vsub.s32 5, %v2366
        %v2368 = vrot.slane %v2058, %v2367
        %v2369 = vlaneseq
        %v2370 = vshrl.u32 %v2369, 7
        %v2371 = vsub.s32 0, %v2370
        %v2372 = vrot.slane %v2169, %v2371
        %v2373 = vlaneseq
        %v2374 = vshrl.u32 %v2373, 7
        %v2375 = vsub.s32 1, %v2374
        %v2376 = vrot.slane %v2169, %v2375
        %v2377 = vlaneseq
        %v2378 = vshrl.u32 %v2377, 7
        %v2379 = vsub.s32 2, %v2378
        %v2380 = vrot.slane %v2169, %v2379
        %v2381 = vlaneseq
        %v2382 = vshrl.u32 %v2381, 7
        %v2383 = vsub.s32 3, %v2382
        %v2384 = vrot.slane %v2169, %v2383
        %v2385 = vlaneseq
        %v2386 = vshrl.u32 %v2385, 7
        %v2387 = vsub.s32 4, %v2386
        %v2388 = vrot.slane %v2169, %v2387
        %v2389 = vlaneseq
        %v2390 = vshrl.u32 %v2389, 7
        %v2391 = vsub.s32 5, %v2390
        %v2392 = vrot.slane %v2169, %v2391
        %v2393 = vlaneseq
        %v2394 = vshrl.u32 %v2393, 7
        %v2395 = vsub.s32 0, %v2394
        %v2396 = vrot.slane %v2173, %v2395
        %v2397 = vlaneseq
        %v2398 = vshrl.u32 %v2397, 7
        %v2399 = vsub.s32 1, %v2398
        %v2400 = vrot.slane %v2173, %v2399
        %v2401 = vlaneseq
        %v2402 = vshrl.u32 %v2401, 7
        %v2403 = vsub.s32 2, %v2402
        %v2404 = vrot.slane %v2173, %v2403
        %v2405 = vlaneseq
        %v2406 = vshrl.u32 %v2405, 7
        %v2407 = vsub.s32 3, %v2406
        %v2408 = vrot.slane %v2173, %v2407
        %v2409 = vlaneseq
        %v2410 = vshrl.u32 %v2409, 7
        %v2411 = vsub.s32 4, %v2410
        %v2412 = vrot.slane %v2173, %v2411
        %v2413 = vlaneseq
        %v2414 = vshrl.u32 %v2413, 7
        %v2415 = vsub.s32 5, %v2414
        %v2416 = vrot.slane %v2173, %v2415
        %v2417 = vlaneseq
        %v2418 = vshrl.u32 %v2417, 7
        %v2419 = vsub.s32 0, %v2418
        %v2420 = vrot.slane %v2170, %v2419
        %v2421 = vlaneseq
        %v2422 = vshrl.u32 %v2421, 7
        %v2423 = vsub.s32 1, %v2422
        %v2424 = vrot.slane %v2170, %v2423
        %v2425 = vlaneseq
        %v2426 = vshrl.u32 %v2425, 7
        %v2427 = vsub.s32 2, %v2426
        %v2428 = vrot.slane %v2170, %v2427
        %v2429 = vlaneseq
        %v2430 = vshrl.u32 %v2429, 7
        %v2431 = vsub.s32 3, %v2430
        %v2432 = vrot.slane %v2170, %v2431
        %v2433 = vlaneseq
        %v2434 = vshrl.u32 %v2433, 7
        %v2435 = vsub.s32 4, %v2434
        %v2436 = vrot.slane %v2170, %v2435
        %v2437 = vlaneseq
        %v2438 = vshrl.u32 %v2437, 7
        %v2439 = vsub.s32 5, %v2438
        %v2440 = vrot.slane %v2170, %v2439
        %v2441 = vlaneseq
        %v2442 = vshrl.u32 %v2441, 7
        %v2443 = vsub.s32 0, %v2442
        %v2444 = vrot.slane %v2174, %v2443
        %v2445 = vlaneseq
        %v2446 = vshrl.u32 %v2445, 7
        %v2447 = vsub.s32 1, %v2446
        %v2448 = vrot.slane %v2174, %v2447
        %v2449 = vlaneseq
        %v2450 = vshrl.u32 %v2449, 7
        %v2451 = vsub.s32 2, %v2450
        %v2452 = vrot.slane %v2174, %v2451
        %v2453 = vlaneseq
        %v2454 = vshrl.u32 %v2453, 7
        %v2455 = vsub.s32 3, %v2454
        %v2456 = vrot.slane %v2174, %v2455
        %v2457 = vlaneseq
        %v2458 = vshrl.u32 %v2457, 7
        %v2459 = vsub.s32 4, %v2458
        %v2460 = vrot.slane %v2174, %v2459
        %v2461 = vlaneseq
        %v2462 = vshrl.u32 %v2461, 7
        %v2463 = vsub.s32 5, %v2462
        %v2464 = vrot.slane %v2174, %v2463
        %v2465 = vlaneseq
        %v2466 = vshrl.u32 %v2465, 7
        %v2467 = vsub.s32 0, %v2466
        %v2468 = vrot.slane %v2171, %v2467
        %v2469 = vlaneseq
        %v2470 = vshrl.u32 %v2469, 7
        %v2471 = vsub.s32 1, %v2470
        %v2472 = vrot.slane %v2171, %v2471
        %v2473 = vlaneseq
        %v2474 = vshrl.u32 %v2473, 7
        %v2475 = vsub.s32 2, %v2474
        %v2476 = vrot.slane %v2171, %v2475
        %v2477 = vlaneseq
        %v2478 = vshrl.u32 %v2477, 7
        %v2479 = vsub.s32 3, %v2478
        %v2480 = vrot.slane %v2171, %v2479
        %v2481 = vlaneseq
        %v2482 = vshrl.u32 %v2481, 7
        %v2483 = vsub.s32 4, %v2482
        %v2484 = vrot.slane %v2171, %v2483
        %v2485 = vlaneseq
        %v2486 = vshrl.u32 %v2485, 7
        %v2487 = vsub.s32 5, %v2486
        %v2488 = vrot.slane %v2171, %v2487
        %v2489 = vlaneseq
        %v2490 = vshrl.u32 %v2489, 7
        %v2491 = vsub.s32 0, %v2490
        %v2492 = vrot.slane %v2175, %v2491
        %v2493 = vlaneseq
        %v2494 = vshrl.u32 %v2493, 7
        %v2495 = vsub.s32 1, %v2494
        %v2496 = vrot.slane %v2175, %v2495
        %v2497 = vlaneseq
        %v2498 = vshrl.u32 %v2497, 7
        %v2499 = vsub.s32 2, %v2498
        %v2500 = vrot.slane %v2175, %v2499
        %v2501 = vlaneseq
        %v2502 = vshrl.u32 %v2501, 7
        %v2503 = vsub.s32 3, %v2502
        %v2504 = vrot.slane %v2175, %v2503
        %v2505 = vlaneseq
        %v2506 = vshrl.u32 %v2505, 7
        %v2507 = vsub.s32 4, %v2506
        %v2508 = vrot.slane %v2175, %v2507
        %v2509 = vlaneseq
        %v2510 = vshrl.u32 %v2509, 7
        %v2511 = vsub.s32 5, %v2510
        %v2512 = vrot.slane %v2175, %v2511
        %v2513 = vlaneseq
        %v2514 = vshrl.u32 %v2513, 7
        %v2515 = vsub.s32 0, %v2514
        %v2516 = vrot.slane %v2172, %v2515
        %v2517 = vlaneseq
        %v2518 = vshrl.u32 %v2517, 7
        %v2519 = vsub.s32 1, %v2518
        %v2520 = vrot.slane %v2172, %v2519
        %v2521 = vlaneseq
        %v2522 = vshrl.u32 %v2521, 7
        %v2523 = vsub.s32 2, %v2522
        %v2524 = vrot.slane %v2172, %v2523
        %v2525 = vlaneseq
        %v2526 = vshrl.u32 %v2525, 7
        %v2527 = vsub.s32 3, %v2526
        %v2528 = vrot.slane %v2172, %v2527
        %v2529 = vlaneseq
        %v2530 = vshrl.u32 %v2529, 7
        %v2531 = vsub.s32 4, %v2530
        %v2532 = vrot.slane %v2172, %v2531
        %v2533 = vlaneseq
        %v2534 = vshrl.u32 %v2533, 7
        %v2535 = vsub.s32 5, %v2534
        %v2536 = vrot.slane %v2172, %v2535
        %v2537 = vlaneseq
        %v2538 = vshrl.u32 %v2537, 7
        %v2539 = vsub.s32 0, %v2538
        %v2540 = vrot.slane %v2176, %v2539
        %v2541 = vlaneseq
        %v2542 = vshrl.u32 %v2541, 7
        %v2543 = vsub.s32 1, %v2542
        %v2544 = vrot.slane %v2176, %v2543
        %v2545 = vlaneseq
        %v2546 = vshrl.u32 %v2545, 7
        %v2547 = vsub.s32 2, %v2546
        %v2548 = vrot.slane %v2176, %v2547
        %v2549 = vlaneseq
        %v2550 = vshrl.u32 %v2549, 7
        %v2551 = vsub.s32 3, %v2550
        %v2552 = vrot.slane %v2176, %v2551
        %v2553 = vlaneseq
        %v2554 = vshrl.u32 %v2553, 7
        %v2555 = vsub.s32 4, %v2554
        %v2556 = vrot.slane %v2176, %v2555
        %v2557 = vlaneseq
        %v2558 = vshrl.u32 %v2557, 7
        %v2559 = vsub.s32 5, %v2558
        %v2560 = vrot.slane %v2176, %v2559
        %v2659 = vcombine.high %v1927, %v1927
        %v2661 = vunpack.c.l.s4 1983009808
        %v2662 = vunpack.c.0.s8 %v2661
        %v2663 = vlaneseq
        %v2664 = vshrl.u32 %v2663, 7
        %v2665 = vsub.s32 %v2662, %v2664
        %v2666 = vrot.slane %v1927, %v2665
        %v2668 = vunpack.c.l.s4 1983009808
        %v2669 = vunpack.c.0.s8 %v2668
        %v2670 = vlaneseq
        %v2671 = vshrl.u32 %v2670, 7
        %v2672 = vsub.s32 %v2669, %v2671
        %v2673 = vrot.slane %v2659, %v2672
        %v2674 = vcombine.high %v2666, %v2666
        %v2675 = vcombine.high %v2673, %v2673
        %v2677 = vunpack.c.l.s4 1983009808
        %v2678 = vunpack.c.0.s8 %v2677
        %v2679 = vlaneseq
        %v2680 = vshrl.u32 %v2679, 7
        %v2681 = vsub.s32 %v2678, %v2680
        %v2682 = vrot.slane %v1928, %v2681
        %v2683 = vcombine.high %v2682, %v2682
        %v2690 = vmul.f32 %v2180, %v2666
        %v2691 = vmul.f32 %v2184, %v2674
        %v2692 = vmul.f32 %v2188, %v2673
        %v2693 = vmul.f32 %v2192, %v2675
        %v2694 = vmul.f32 %v2196, %v2682
        %v2695 = vmul.f32 %v2200, %v2683
        %v2696 = vmul.f32 %v2204, %v2666
        %v2697 = vmul.f32 %v2208, %v2674
        %v2698 = vmul.f32 %v2212, %v2673
        %v2699 = vmul.f32 %v2216, %v2675
        %v2700 = vmul.f32 %v2220, %v2682
        %v2701 = vmul.f32 %v2224, %v2683
        %v2702 = vmul.f32 %v2228, %v2666
        %v2703 = vmul.f32 %v2232, %v2674
        %v2704 = vmul.f32 %v2236, %v2673
        %v2705 = vmul.f32 %v2240, %v2675
        %v2706 = vmul.f32 %v2244, %v2682
        %v2707 = vmul.f32 %v2248, %v2683
        %v2708 = vmul.f32 %v2252, %v2666
        %v2709 = vmul.f32 %v2256, %v2674
        %v2710 = vmul.f32 %v2260, %v2673
        %v2711 = vmul.f32 %v2264, %v2675
        %v2712 = vmul.f32 %v2268, %v2682
        %v2713 = vmul.f32 %v2272, %v2683
        %v2714 = vmul.f32 %v2276, %v2666
        %v2715 = vmul.f32 %v2280, %v2674
        %v2716 = vmul.f32 %v2284, %v2673
        %v2717 = vmul.f32 %v2288, %v2675
        %v2718 = vmul.f32 %v2292, %v2682
        %v2719 = vmul.f32 %v2296, %v2683
        %v2720 = vmul.f32 %v2300, %v2666
        %v2721 = vmul.f32 %v2304, %v2674
        %v2722 = vmul.f32 %v2308, %v2673
        %v2723 = vmul.f32 %v2312, %v2675
        %v2724 = vmul.f32 %v2316, %v2682
        %v2725 = vmul.f32 %v2320, %v2683
        %v2726 = vmul.f32 %v2324, %v2666
        %v2727 = vmul.f32 %v2328, %v2674
        %v2728 = vmul.f32 %v2332, %v2673
        %v2729 = vmul.f32 %v2336, %v2675
        %v2730 = vmul.f32 %v2340, %v2682
        %v2731 = vmul.f32 %v2344, %v2683
        %v2732 = vmul.f32 %v2348, %v2666
        %v2733 = vmul.f32 %v2352, %v2674
        %v2734 = vmul.f32 %v2356, %v2673
        %v2735 = vmul.f32 %v2360, %v2675
        %v2736 = vmul.f32 %v2364, %v2682
        %v2737 = vmul.f32 %v2368, %v2683
        %v2738 = vmul.f32 %v2372, %v2666
        %v2739 = vmul.f32 %v2376, %v2674
        %v2740 = vmul.f32 %v2380, %v2673
        %v2741 = vmul.f32 %v2384, %v2675
        %v2742 = vmul.f32 %v2388, %v2682
        %v2743 = vmul.f32 %v2392, %v2683
        %v2744 = vmul.f32 %v2396, %v2666
        %v2745 = vmul.f32 %v2400, %v2674
        %v2746 = vmul.f32 %v2404, %v2673
        %v2747 = vmul.f32 %v2408, %v2675
        %v2748 = vmul.f32 %v2412, %v2682
        %v2749 = vmul.f32 %v2416, %v2683
        %v2750 = vmul.f32 %v2420, %v2666
        %v2751 = vmul.f32 %v2424, %v2674
        %v2752 = vmul.f32 %v2428, %v2673
        %v2753 = vmul.f32 %v2432, %v2675
        %v2754 = vmul.f32 %v2436, %v2682
        %v2755 = vmul.f32 %v2440, %v2683
        %v2756 = vmul.f32 %v2444, %v2666
        %v2757 = vmul.f32 %v2448, %v2674
        %v2758 = vmul.f32 %v2452, %v2673
        %v2759 = vmul.f32 %v2456, %v2675
        %v2760 = vmul.f32 %v2460, %v2682
        %v2761 = vmul.f32 %v2464, %v2683
        %v2762 = vmul.f32 %v2468, %v2666
        %v2763 = vmul.f32 %v2472, %v2674
        %v2764 = vmul.f32 %v2476, %v2673
        %v2765 = vmul.f32 %v2480, %v2675
        %v2766 = vmul.f32 %v2484, %v2682
        %v2767 = vmul.f32 %v2488, %v2683
        %v2768 = vmul.f32 %v2492, %v2666
        %v2769 = vmul.f32 %v2496, %v2674
        %v2770 = vmul.f32 %v2500, %v2673
        %v2771 = vmul.f32 %v2504, %v2675
        %v2772 = vmul.f32 %v2508, %v2682
        %v2773 = vmul.f32 %v2512, %v2683
        %v2774 = vmul.f32 %v2516, %v2666
        %v2775 = vmul.f32 %v2520, %v2674
        %v2776 = vmul.f32 %v2524, %v2673
        %v2777 = vmul.f32 %v2528, %v2675
        %v2778 = vmul.f32 %v2532, %v2682
        %v2779 = vmul.f32 %v2536, %v2683
        %v2780 = vmul.f32 %v2540, %v2666
        %v2781 = vmul.f32 %v2544, %v2674
        %v2782 = vmul.f32 %v2548, %v2673
        %v2783 = vmul.f32 %v2552, %v2675
        %v2784 = vmul.f32 %v2556, %v2682
        %v2785 = vmul.f32 %v2560, %v2683
        %vm2786 = vcmask 1041408
        %v2787 = vsel %vm2786, %v2690, 0.0
        %v2788 = vsel %vm2786, %v2691, 0.0
        %v2789 = vadd.f32 %v2787, %v2788
        %v2790 = vsel %vm2786, %v2692, 0.0
        %v2791 = vadd.f32 %v2789, %v2790
        %v2792 = vsel %vm2786, %v2693, 0.0
        %v2793 = vadd.f32 %v2791, %v2792
        %v2794 = vsel %vm2786, %v2694, 0.0
        %v2795 = vadd.f32 %v2793, %v2794
        %v2796 = vsel %vm2786, %v2695, 0.0
        %v2797 = vadd.f32 %v2795, %v2796
        %2798 = vadd.xlane.f32.xlu0 %v2797
        %v2799 = vpop.xlane.xlu0 %2798
        %v2800 = vsel %vm2786, %v2696, 0.0
        %v2801 = vsel %vm2786, %v2697, 0.0
        %v2802 = vadd.f32 %v2800, %v2801
        %v2803 = vsel %vm2786, %v2698, 0.0
        %v2804 = vadd.f32 %v2802, %v2803
        %v2805 = vsel %vm2786, %v2699, 0.0
        %v2806 = vadd.f32 %v2804, %v2805
        %v2807 = vsel %vm2786, %v2700, 0.0
        %v2808 = vadd.f32 %v2806, %v2807
        %v2809 = vsel %vm2786, %v2701, 0.0
        %v2810 = vadd.f32 %v2808, %v2809
        %2811 = vadd.xlane.f32.xlu0 %v2810
        %v2812 = vpop.xlane.xlu0 %2811
        %v2813 = vsel %vm2786, %v2702, 0.0
        %v2814 = vsel %vm2786, %v2703, 0.0
        %v2815 = vadd.f32 %v2813, %v2814
        %v2816 = vsel %vm2786, %v2704, 0.0
        %v2817 = vadd.f32 %v2815, %v2816
        %v2818 = vsel %vm2786, %v2705, 0.0
        %v2819 = vadd.f32 %v2817, %v2818
        %v2820 = vsel %vm2786, %v2706, 0.0
        %v2821 = vadd.f32 %v2819, %v2820
        %v2822 = vsel %vm2786, %v2707, 0.0
        %v2823 = vadd.f32 %v2821, %v2822
        %2824 = vadd.xlane.f32.xlu0 %v2823
        %v2825 = vpop.xlane.xlu0 %2824
        %v2826 = vsel %vm2786, %v2708, 0.0
        %v2827 = vsel %vm2786, %v2709, 0.0
        %v2828 = vadd.f32 %v2826, %v2827
        %v2829 = vsel %vm2786, %v2710, 0.0
        %v2830 = vadd.f32 %v2828, %v2829
        %v2831 = vsel %vm2786, %v2711, 0.0
        %v2832 = vadd.f32 %v2830, %v2831
        %v2833 = vsel %vm2786, %v2712, 0.0
        %v2834 = vadd.f32 %v2832, %v2833
        %v2835 = vsel %vm2786, %v2713, 0.0
        %v2836 = vadd.f32 %v2834, %v2835
        %2837 = vadd.xlane.f32.xlu0 %v2836
        %v2838 = vpop.xlane.xlu0 %2837
        %v2839 = vsel %vm2786, %v2714, 0.0
        %v2840 = vsel %vm2786, %v2715, 0.0
        %v2841 = vadd.f32 %v2839, %v2840
        %v2842 = vsel %vm2786, %v2716, 0.0
        %v2843 = vadd.f32 %v2841, %v2842
        %v2844 = vsel %vm2786, %v2717, 0.0
        %v2845 = vadd.f32 %v2843, %v2844
        %v2846 = vsel %vm2786, %v2718, 0.0
        %v2847 = vadd.f32 %v2845, %v2846
        %v2848 = vsel %vm2786, %v2719, 0.0
        %v2849 = vadd.f32 %v2847, %v2848
        %2850 = vadd.xlane.f32.xlu0 %v2849
        %v2851 = vpop.xlane.xlu0 %2850
        %v2852 = vsel %vm2786, %v2720, 0.0
        %v2853 = vsel %vm2786, %v2721, 0.0
        %v2854 = vadd.f32 %v2852, %v2853
        %v2855 = vsel %vm2786, %v2722, 0.0
        %v2856 = vadd.f32 %v2854, %v2855
        %v2857 = vsel %vm2786, %v2723, 0.0
        %v2858 = vadd.f32 %v2856, %v2857
        %v2859 = vsel %vm2786, %v2724, 0.0
        %v2860 = vadd.f32 %v2858, %v2859
        %v2861 = vsel %vm2786, %v2725, 0.0
        %v2862 = vadd.f32 %v2860, %v2861
        %2863 = vadd.xlane.f32.xlu0 %v2862
        %v2864 = vpop.xlane.xlu0 %2863
        %v2865 = vsel %vm2786, %v2726, 0.0
        %v2866 = vsel %vm2786, %v2727, 0.0
        %v2867 = vadd.f32 %v2865, %v2866
        %v2868 = vsel %vm2786, %v2728, 0.0
        %v2869 = vadd.f32 %v2867, %v2868
        %v2870 = vsel %vm2786, %v2729, 0.0
        %v2871 = vadd.f32 %v2869, %v2870
        %v2872 = vsel %vm2786, %v2730, 0.0
        %v2873 = vadd.f32 %v2871, %v2872
        %v2874 = vsel %vm2786, %v2731, 0.0
        %v2875 = vadd.f32 %v2873, %v2874
        %2876 = vadd.xlane.f32.xlu0 %v2875
        %v2877 = vpop.xlane.xlu0 %2876
        %v2878 = vsel %vm2786, %v2732, 0.0
        %v2879 = vsel %vm2786, %v2733, 0.0
        %v2880 = vadd.f32 %v2878, %v2879
        %v2881 = vsel %vm2786, %v2734, 0.0
        %v2882 = vadd.f32 %v2880, %v2881
        %v2883 = vsel %vm2786, %v2735, 0.0
        %v2884 = vadd.f32 %v2882, %v2883
        %v2885 = vsel %vm2786, %v2736, 0.0
        %v2886 = vadd.f32 %v2884, %v2885
        %v2887 = vsel %vm2786, %v2737, 0.0
        %v2888 = vadd.f32 %v2886, %v2887
        %2889 = vadd.xlane.f32.xlu0 %v2888
        %v2890 = vpop.xlane.xlu0 %2889
        %v2891 = vsel %vm2786, %v2738, 0.0
        %v2892 = vsel %vm2786, %v2739, 0.0
        %v2893 = vadd.f32 %v2891, %v2892
        %v2894 = vsel %vm2786, %v2740, 0.0
        %v2895 = vadd.f32 %v2893, %v2894
        %v2896 = vsel %vm2786, %v2741, 0.0
        %v2897 = vadd.f32 %v2895, %v2896
        %v2898 = vsel %vm2786, %v2742, 0.0
        %v2899 = vadd.f32 %v2897, %v2898
        %v2900 = vsel %vm2786, %v2743, 0.0
        %v2901 = vadd.f32 %v2899, %v2900
        %2902 = vadd.xlane.f32.xlu0 %v2901
        %v2903 = vpop.xlane.xlu0 %2902
        %v2904 = vsel %vm2786, %v2744, 0.0
        %v2905 = vsel %vm2786, %v2745, 0.0
        %v2906 = vadd.f32 %v2904, %v2905
        %v2907 = vsel %vm2786, %v2746, 0.0
        %v2908 = vadd.f32 %v2906, %v2907
        %v2909 = vsel %vm2786, %v2747, 0.0
        %v2910 = vadd.f32 %v2908, %v2909
        %v2911 = vsel %vm2786, %v2748, 0.0
        %v2912 = vadd.f32 %v2910, %v2911
        %v2913 = vsel %vm2786, %v2749, 0.0
        %v2914 = vadd.f32 %v2912, %v2913
        %2915 = vadd.xlane.f32.xlu0 %v2914
        %v2916 = vpop.xlane.xlu0 %2915
        %v2917 = vsel %vm2786, %v2750, 0.0
        %v2918 = vsel %vm2786, %v2751, 0.0
        %v2919 = vadd.f32 %v2917, %v2918
        %v2920 = vsel %vm2786, %v2752, 0.0
        %v2921 = vadd.f32 %v2919, %v2920
        %v2922 = vsel %vm2786, %v2753, 0.0
        %v2923 = vadd.f32 %v2921, %v2922
        %v2924 = vsel %vm2786, %v2754, 0.0
        %v2925 = vadd.f32 %v2923, %v2924
        %v2926 = vsel %vm2786, %v2755, 0.0
        %v2927 = vadd.f32 %v2925, %v2926
        %2928 = vadd.xlane.f32.xlu0 %v2927
        %v2929 = vpop.xlane.xlu0 %2928
        %v2930 = vsel %vm2786, %v2756, 0.0
        %v2931 = vsel %vm2786, %v2757, 0.0
        %v2932 = vadd.f32 %v2930, %v2931
        %v2933 = vsel %vm2786, %v2758, 0.0
        %v2934 = vadd.f32 %v2932, %v2933
        %v2935 = vsel %vm2786, %v2759, 0.0
        %v2936 = vadd.f32 %v2934, %v2935
        %v2937 = vsel %vm2786, %v2760, 0.0
        %v2938 = vadd.f32 %v2936, %v2937
        %v2939 = vsel %vm2786, %v2761, 0.0
        %v2940 = vadd.f32 %v2938, %v2939
        %2941 = vadd.xlane.f32.xlu0 %v2940
        %v2942 = vpop.xlane.xlu0 %2941
        %v2943 = vsel %vm2786, %v2762, 0.0
        %v2944 = vsel %vm2786, %v2763, 0.0
        %v2945 = vadd.f32 %v2943, %v2944
        %v2946 = vsel %vm2786, %v2764, 0.0
        %v2947 = vadd.f32 %v2945, %v2946
        %v2948 = vsel %vm2786, %v2765, 0.0
        %v2949 = vadd.f32 %v2947, %v2948
        %v2950 = vsel %vm2786, %v2766, 0.0
        %v2951 = vadd.f32 %v2949, %v2950
        %v2952 = vsel %vm2786, %v2767, 0.0
        %v2953 = vadd.f32 %v2951, %v2952
        %2954 = vadd.xlane.f32.xlu0 %v2953
        %v2955 = vpop.xlane.xlu0 %2954
        %v2956 = vsel %vm2786, %v2768, 0.0
        %v2957 = vsel %vm2786, %v2769, 0.0
        %v2958 = vadd.f32 %v2956, %v2957
        %v2959 = vsel %vm2786, %v2770, 0.0
        %v2960 = vadd.f32 %v2958, %v2959
        %v2961 = vsel %vm2786, %v2771, 0.0
        %v2962 = vadd.f32 %v2960, %v2961
        %v2963 = vsel %vm2786, %v2772, 0.0
        %v2964 = vadd.f32 %v2962, %v2963
        %v2965 = vsel %vm2786, %v2773, 0.0
        %v2966 = vadd.f32 %v2964, %v2965
        %2967 = vadd.xlane.f32.xlu0 %v2966
        %v2968 = vpop.xlane.xlu0 %2967
        %v2969 = vsel %vm2786, %v2774, 0.0
        %v2970 = vsel %vm2786, %v2775, 0.0
        %v2971 = vadd.f32 %v2969, %v2970
        %v2972 = vsel %vm2786, %v2776, 0.0
        %v2973 = vadd.f32 %v2971, %v2972
        %v2974 = vsel %vm2786, %v2777, 0.0
        %v2975 = vadd.f32 %v2973, %v2974
        %v2976 = vsel %vm2786, %v2778, 0.0
        %v2977 = vadd.f32 %v2975, %v2976
        %v2978 = vsel %vm2786, %v2779, 0.0
        %v2979 = vadd.f32 %v2977, %v2978
        %2980 = vadd.xlane.f32.xlu0 %v2979
        %v2981 = vpop.xlane.xlu0 %2980
        %v2982 = vsel %vm2786, %v2780, 0.0
        %v2983 = vsel %vm2786, %v2781, 0.0
        %v2984 = vadd.f32 %v2982, %v2983
        %v2985 = vsel %vm2786, %v2782, 0.0
        %v2986 = vadd.f32 %v2984, %v2985
        %v2987 = vsel %vm2786, %v2783, 0.0
        %v2988 = vadd.f32 %v2986, %v2987
        %v2989 = vsel %vm2786, %v2784, 0.0
        %v2990 = vadd.f32 %v2988, %v2989
        %v2991 = vsel %vm2786, %v2785, 0.0
        %v2992 = vadd.f32 %v2990, %v2991
        %2993 = vadd.xlane.f32.xlu0 %v2992
        %v2994 = vpop.xlane.xlu0 %2993
        %v2995 = vld [vmem:[%s7] sm:$0x1]
        %v2997 = vlaneseq
        %v2998 = vshrl.u32 %v2997, 7
        %v2999 = vsub.s32 0, %v2998
        %v3000 = vrot.slane %v2995, %v2999
        %3002 = vbcast.lane.b32.xlu0 %v3000, 256
        %v3003 = vpop.permute.xlu0 %3002
        %v3005 = vadd.f32 %v2799, %v3003
        %v3006 = vadd.f32 %v2812, %v3003
        %v3007 = vadd.f32 %v2825, %v3003
        %v3008 = vadd.f32 %v2838, %v3003
        %v3009 = vadd.f32 %v2851, %v3003
        %v3010 = vadd.f32 %v2864, %v3003
        %v3011 = vadd.f32 %v2877, %v3003
        %v3012 = vadd.f32 %v2890, %v3003
        %v3013 = vadd.f32 %v2903, %v3003
        %v3014 = vadd.f32 %v2916, %v3003
        %v3015 = vadd.f32 %v2929, %v3003
        %v3016 = vadd.f32 %v2942, %v3003
        %v3017 = vadd.f32 %v2955, %v3003
        %v3018 = vadd.f32 %v2968, %v3003
        %v3019 = vadd.f32 %v2981, %v3003
        %v3020 = vadd.f32 %v2994, %v3003
        %v3021 = vxor.u32 %v3005, 2147483648
        %v3022 = vxor.u32 %v3006, 2147483648
        %v3023 = vxor.u32 %v3007, 2147483648
        %v3024 = vxor.u32 %v3008, 2147483648
        %v3025 = vxor.u32 %v3009, 2147483648
        %v3026 = vxor.u32 %v3010, 2147483648
        %v3027 = vxor.u32 %v3011, 2147483648
        %v3028 = vxor.u32 %v3012, 2147483648
        %v3029 = vxor.u32 %v3013, 2147483648
        %v3030 = vxor.u32 %v3014, 2147483648
        %v3031 = vxor.u32 %v3015, 2147483648
        %v3032 = vxor.u32 %v3016, 2147483648
        %v3033 = vxor.u32 %v3017, 2147483648
        %v3034 = vxor.u32 %v3018, 2147483648
        %v3035 = vxor.u32 %v3019, 2147483648
        %v3036 = vxor.u32 %v3020, 2147483648
        %v3037 = vmul.f32 %v3021, 1.442695
        %v3038 = vpow.pop %v3037
        %v3039 = vmul.f32 %v3022, 1.442695
        %v3040 = vpow.pop %v3039
        %v3041 = vmul.f32 %v3023, 1.442695
        %v3042 = vpow.pop %v3041
        %v3043 = vmul.f32 %v3024, 1.442695
        %v3044 = vpow.pop %v3043
        %v3045 = vmul.f32 %v3025, 1.442695
        %v3046 = vpow.pop %v3045
        %v3047 = vmul.f32 %v3026, 1.442695
        %v3048 = vpow.pop %v3047
        %v3049 = vmul.f32 %v3027, 1.442695
        %v3050 = vpow.pop %v3049
        %v3051 = vmul.f32 %v3028, 1.442695
        %v3052 = vpow.pop %v3051
        %v3053 = vmul.f32 %v3029, 1.442695
        %v3054 = vpow.pop %v3053
        %v3055 = vmul.f32 %v3030, 1.442695
        %v3056 = vpow.pop %v3055
        %v3057 = vmul.f32 %v3031, 1.442695
        %v3058 = vpow.pop %v3057
        %v3059 = vmul.f32 %v3032, 1.442695
        %v3060 = vpow.pop %v3059
        %v3061 = vmul.f32 %v3033, 1.442695
        %v3062 = vpow.pop %v3061
        %v3063 = vmul.f32 %v3034, 1.442695
        %v3064 = vpow.pop %v3063
        %v3065 = vmul.f32 %v3035, 1.442695
        %v3066 = vpow.pop %v3065
        %v3067 = vmul.f32 %v3036, 1.442695
        %v3068 = vpow.pop %v3067
        %v3069 = vadd.f32 %v3038, 1.0
        %v3070 = vadd.f32 %v3040, 1.0
        %v3071 = vadd.f32 %v3042, 1.0
        %v3072 = vadd.f32 %v3044, 1.0
        %v3073 = vadd.f32 %v3046, 1.0
        %v3074 = vadd.f32 %v3048, 1.0
        %v3075 = vadd.f32 %v3050, 1.0
        %v3076 = vadd.f32 %v3052, 1.0
        %v3077 = vadd.f32 %v3054, 1.0
        %v3078 = vadd.f32 %v3056, 1.0
        %v3079 = vadd.f32 %v3058, 1.0
        %v3080 = vadd.f32 %v3060, 1.0
        %v3081 = vadd.f32 %v3062, 1.0
        %v3082 = vadd.f32 %v3064, 1.0
        %v3083 = vadd.f32 %v3066, 1.0
        %v3084 = vadd.f32 %v3068, 1.0
        %v3085 = vrcp.pop %v3069
        %v3086 = vmul.f32 1.0, %v3085
        %v3087 = vrcp.pop %v3070
        %v3088 = vmul.f32 1.0, %v3087
        %v3089 = vrcp.pop %v3071
        %v3090 = vmul.f32 1.0, %v3089
        %v3091 = vrcp.pop %v3072
        %v3092 = vmul.f32 1.0, %v3091
        %v3093 = vrcp.pop %v3073
        %v3094 = vmul.f32 1.0, %v3093
        %v3095 = vrcp.pop %v3074
        %v3096 = vmul.f32 1.0, %v3095
        %v3097 = vrcp.pop %v3075
        %v3098 = vmul.f32 1.0, %v3097
        %v3099 = vrcp.pop %v3076
        %v3100 = vmul.f32 1.0, %v3099
        %v3101 = vrcp.pop %v3077
        %v3102 = vmul.f32 1.0, %v3101
        %v3103 = vrcp.pop %v3078
        %v3104 = vmul.f32 1.0, %v3103
        %v3105 = vrcp.pop %v3079
        %v3106 = vmul.f32 1.0, %v3105
        %v3107 = vrcp.pop %v3080
        %v3108 = vmul.f32 1.0, %v3107
        %v3109 = vrcp.pop %v3081
        %v3110 = vmul.f32 1.0, %v3109
        %v3111 = vrcp.pop %v3082
        %v3112 = vmul.f32 1.0, %v3111
        %v3113 = vrcp.pop %v3083
        %v3114 = vmul.f32 1.0, %v3113
        %v3115 = vrcp.pop %v3084
        %v3116 = vmul.f32 1.0, %v3115
        %3133 = vset.pattern.permute.xlu0 0
        %3134 = vperm.xlu0 %3133, %v3086
        %v3135 = vpop.permute.xlu0 %3134
        %3136 = vset.pattern.permute.xlu0 0
        %3137 = vperm.xlu0 %3136, %v3088
        %v3138 = vpop.permute.xlu0 %3137
        %3139 = vset.pattern.permute.xlu0 0
        %3140 = vperm.xlu0 %3139, %v3090
        %v3141 = vpop.permute.xlu0 %3140
        %3142 = vset.pattern.permute.xlu0 0
        %3143 = vperm.xlu0 %3142, %v3092
        %v3144 = vpop.permute.xlu0 %3143
        %3145 = vset.pattern.permute.xlu0 0
        %3146 = vperm.xlu0 %3145, %v3094
        %v3147 = vpop.permute.xlu0 %3146
        %3148 = vset.pattern.permute.xlu0 0
        %3149 = vperm.xlu0 %3148, %v3096
        %v3150 = vpop.permute.xlu0 %3149
        %3151 = vset.pattern.permute.xlu0 0
        %3152 = vperm.xlu0 %3151, %v3098
        %v3153 = vpop.permute.xlu0 %3152
        %3154 = vset.pattern.permute.xlu0 0
        %3155 = vperm.xlu0 %3154, %v3100
        %v3156 = vpop.permute.xlu0 %3155
        %3157 = vset.pattern.permute.xlu0 0
        %3158 = vperm.xlu0 %3157, %v3102
        %v3159 = vpop.permute.xlu0 %3158
        %3160 = vset.pattern.permute.xlu0 0
        %3161 = vperm.xlu0 %3160, %v3104
        %v3162 = vpop.permute.xlu0 %3161
        %3163 = vset.pattern.permute.xlu0 0
        %3164 = vperm.xlu0 %3163, %v3106
        %v3165 = vpop.permute.xlu0 %3164
        %3166 = vset.pattern.permute.xlu0 0
        %3167 = vperm.xlu0 %3166, %v3108
        %v3168 = vpop.permute.xlu0 %3167
        %3169 = vset.pattern.permute.xlu0 0
        %3170 = vperm.xlu0 %3169, %v3110
        %v3171 = vpop.permute.xlu0 %3170
        %3172 = vset.pattern.permute.xlu0 0
        %3173 = vperm.xlu0 %3172, %v3112
        %v3174 = vpop.permute.xlu0 %3173
        %3175 = vset.pattern.permute.xlu0 0
        %3176 = vperm.xlu0 %3175, %v3114
        %v3177 = vpop.permute.xlu0 %3176
        %3178 = vset.pattern.permute.xlu0 0
        %3179 = vperm.xlu0 %3178, %v3116
        %v3180 = vpop.permute.xlu0 %3179
        %v3181 = vlaneseq
        %v3182 = vand.u32 %v3181, 127
        %v3183 = vlaneseq
        %v3184 = vshrl.u32 %v3183, 7
        %v3185 = vsub.s32 %v3182, %v3184
        %v3186 = vrot.slane %v3135, %v3185
        %v3187 = vlaneseq
        %v3188 = vshrl.u32 %v3187, 7
        %v3189 = vsub.s32 %v3182, %v3188
        %v3190 = vrot.slane %v3138, %v3189
        %v3191 = vlaneseq
        %v3192 = vshrl.u32 %v3191, 7
        %v3193 = vsub.s32 %v3182, %v3192
        %v3194 = vrot.slane %v3141, %v3193
        %v3195 = vlaneseq
        %v3196 = vshrl.u32 %v3195, 7
        %v3197 = vsub.s32 %v3182, %v3196
        %v3198 = vrot.slane %v3144, %v3197
        %v3199 = vlaneseq
        %v3200 = vshrl.u32 %v3199, 7
        %v3201 = vsub.s32 %v3182, %v3200
        %v3202 = vrot.slane %v3147, %v3201
        %v3203 = vlaneseq
        %v3204 = vshrl.u32 %v3203, 7
        %v3205 = vsub.s32 %v3182, %v3204
        %v3206 = vrot.slane %v3150, %v3205
        %v3207 = vlaneseq
        %v3208 = vshrl.u32 %v3207, 7
        %v3209 = vsub.s32 %v3182, %v3208
        %v3210 = vrot.slane %v3153, %v3209
        %v3211 = vlaneseq
        %v3212 = vshrl.u32 %v3211, 7
        %v3213 = vsub.s32 %v3182, %v3212
        %v3214 = vrot.slane %v3156, %v3213
        %v3215 = vlaneseq
        %v3216 = vshrl.u32 %v3215, 7
        %v3217 = vsub.s32 %v3182, %v3216
        %v3218 = vrot.slane %v3159, %v3217
        %v3219 = vlaneseq
        %v3220 = vshrl.u32 %v3219, 7
        %v3221 = vsub.s32 %v3182, %v3220
        %v3222 = vrot.slane %v3162, %v3221
        %v3223 = vlaneseq
        %v3224 = vshrl.u32 %v3223, 7
        %v3225 = vsub.s32 %v3182, %v3224
        %v3226 = vrot.slane %v3165, %v3225
        %v3227 = vlaneseq
        %v3228 = vshrl.u32 %v3227, 7
        %v3229 = vsub.s32 %v3182, %v3228
        %v3230 = vrot.slane %v3168, %v3229
        %v3231 = vlaneseq
        %v3232 = vshrl.u32 %v3231, 7
        %v3233 = vsub.s32 %v3182, %v3232
        %v3234 = vrot.slane %v3171, %v3233
        %v3235 = vlaneseq
        %v3236 = vshrl.u32 %v3235, 7
        %v3237 = vsub.s32 %v3182, %v3236
        %v3238 = vrot.slane %v3174, %v3237
        %v3239 = vlaneseq
        %v3240 = vshrl.u32 %v3239, 7
        %v3241 = vsub.s32 %v3182, %v3240
        %v3242 = vrot.slane %v3177, %v3241
        %v3243 = vlaneseq
        %v3244 = vshrl.u32 %v3243, 7
        %v3245 = vsub.s32 %v3182, %v3244
        %v3246 = vrot.slane %v3180, %v3245
        %v3247 = vsel %vm1774, %v3190, %v3186
        %v3248 = vsel %vm1776, %v3194, %v3247
        %v3249 = vsel %vm1778, %v3198, %v3248
        %v3250 = vsel %vm1780, %v3202, %v3249
        %v3251 = vsel %vm1782, %v3206, %v3250
        %v3252 = vsel %vm1784, %v3210, %v3251
        %v3253 = vsel %vm1786, %v3214, %v3252
        %v3254 = vsel %vm1774, %v3222, %v3218
        %v3255 = vsel %vm1776, %v3226, %v3254
        %v3256 = vsel %vm1778, %v3230, %v3255
        %v3257 = vsel %vm1780, %v3234, %v3256
        %v3258 = vsel %vm1782, %v3238, %v3257
        %v3259 = vsel %vm1784, %v3242, %v3258
        %v3260 = vsel %vm1786, %v3246, %v3259
        %vm3263 = vcmask 15360
        %v3264 = vsel %vm3263, %v3253, -inf
        %3265 = vmax.xlane.f32.xlu0 %v3264
        %v3266 = vpop.xlane.xlu0 %3265
        %v3267 = vsel %vm3263, %v3260, -inf
        %3268 = vmax.xlane.f32.xlu0 %v3267
        %v3269 = vpop.xlane.xlu0 %3268
        %v3272 = vlaneseq
        %v3273 = vshrl.u32 %v3272, 7
        %v3274 = vsub.s32 0, %v3273
        %v3275 = vrot.slane %v3266, %v3274
        %v3276 = vlaneseq
        %v3277 = vshrl.u32 %v3276, 7
        %v3278 = vsub.s32 1, %v3277
        %v3279 = vrot.slane %v3266, %v3278
        %v3280 = vlaneseq
        %v3281 = vshrl.u32 %v3280, 7
        %v3282 = vsub.s32 2, %v3281
        %v3283 = vrot.slane %v3266, %v3282
        %v3284 = vlaneseq
        %v3285 = vshrl.u32 %v3284, 7
        %v3286 = vsub.s32 3, %v3285
        %v3287 = vrot.slane %v3266, %v3286
        %v3288 = vlaneseq
        %v3289 = vshrl.u32 %v3288, 7
        %v3290 = vsub.s32 4, %v3289
        %v3291 = vrot.slane %v3266, %v3290
        %v3292 = vlaneseq
        %v3293 = vshrl.u32 %v3292, 7
        %v3294 = vsub.s32 5, %v3293
        %v3295 = vrot.slane %v3266, %v3294
        %v3296 = vlaneseq
        %v3297 = vshrl.u32 %v3296, 7
        %v3298 = vsub.s32 6, %v3297
        %v3299 = vrot.slane %v3266, %v3298
        %v3300 = vlaneseq
        %v3301 = vshrl.u32 %v3300, 7
        %v3302 = vsub.s32 7, %v3301
        %v3303 = vrot.slane %v3266, %v3302
        %v3304 = vlaneseq
        %v3305 = vshrl.u32 %v3304, 7
        %v3306 = vsub.s32 0, %v3305
        %v3307 = vrot.slane %v3269, %v3306
        %v3308 = vlaneseq
        %v3309 = vshrl.u32 %v3308, 7
        %v3310 = vsub.s32 1, %v3309
        %v3311 = vrot.slane %v3269, %v3310
        %v3312 = vlaneseq
        %v3313 = vshrl.u32 %v3312, 7
        %v3314 = vsub.s32 2, %v3313
        %v3315 = vrot.slane %v3269, %v3314
        %v3316 = vlaneseq
        %v3317 = vshrl.u32 %v3316, 7
        %v3318 = vsub.s32 3, %v3317
        %v3319 = vrot.slane %v3269, %v3318
        %v3320 = vlaneseq
        %v3321 = vshrl.u32 %v3320, 7
        %v3322 = vsub.s32 4, %v3321
        %v3323 = vrot.slane %v3269, %v3322
        %v3324 = vlaneseq
        %v3325 = vshrl.u32 %v3324, 7
        %v3326 = vsub.s32 5, %v3325
        %v3327 = vrot.slane %v3269, %v3326
        %v3328 = vlaneseq
        %v3329 = vshrl.u32 %v3328, 7
        %v3330 = vsub.s32 6, %v3329
        %v3331 = vrot.slane %v3269, %v3330
        %v3332 = vlaneseq
        %v3333 = vshrl.u32 %v3332, 7
        %v3334 = vsub.s32 7, %v3333
        %v3335 = vrot.slane %v3269, %v3334
        %v3352 = vsub.f32 %v3086, %v3275
        %v3353 = vsub.f32 %v3088, %v3279
        %v3354 = vsub.f32 %v3090, %v3283
        %v3355 = vsub.f32 %v3092, %v3287
        %v3356 = vsub.f32 %v3094, %v3291
        %v3357 = vsub.f32 %v3096, %v3295
        %v3358 = vsub.f32 %v3098, %v3299
        %v3359 = vsub.f32 %v3100, %v3303
        %v3360 = vsub.f32 %v3102, %v3307
        %v3361 = vsub.f32 %v3104, %v3311
        %v3362 = vsub.f32 %v3106, %v3315
        %v3363 = vsub.f32 %v3108, %v3319
        %v3364 = vsub.f32 %v3110, %v3323
        %v3365 = vsub.f32 %v3112, %v3327
        %v3366 = vsub.f32 %v3114, %v3331
        %v3367 = vsub.f32 %v3116, %v3335
        %v3368 = vmul.f32 %v3352, 1.442695
        %v3369 = vpow.pop %v3368
        %v3370 = vmul.f32 %v3353, 1.442695
        %v3371 = vpow.pop %v3370
        %v3372 = vmul.f32 %v3354, 1.442695
        %v3373 = vpow.pop %v3372
        %v3374 = vmul.f32 %v3355, 1.442695
        %v3375 = vpow.pop %v3374
        %v3376 = vmul.f32 %v3356, 1.442695
        %v3377 = vpow.pop %v3376
        %v3378 = vmul.f32 %v3357, 1.442695
        %v3379 = vpow.pop %v3378
        %v3380 = vmul.f32 %v3358, 1.442695
        %v3381 = vpow.pop %v3380
        %v3382 = vmul.f32 %v3359, 1.442695
        %v3383 = vpow.pop %v3382
        %v3384 = vmul.f32 %v3360, 1.442695
        %v3385 = vpow.pop %v3384
        %v3386 = vmul.f32 %v3361, 1.442695
        %v3387 = vpow.pop %v3386
        %v3388 = vmul.f32 %v3362, 1.442695
        %v3389 = vpow.pop %v3388
        %v3390 = vmul.f32 %v3363, 1.442695
        %v3391 = vpow.pop %v3390
        %v3392 = vmul.f32 %v3364, 1.442695
        %v3393 = vpow.pop %v3392
        %v3394 = vmul.f32 %v3365, 1.442695
        %v3395 = vpow.pop %v3394
        %v3396 = vmul.f32 %v3366, 1.442695
        %v3397 = vpow.pop %v3396
        %v3398 = vmul.f32 %v3367, 1.442695
        %v3399 = vpow.pop %v3398
        %3416 = vset.pattern.permute.xlu0 0
        %3417 = vperm.xlu0 %3416, %v3369
        %v3418 = vpop.permute.xlu0 %3417
        %3419 = vset.pattern.permute.xlu0 0
        %3420 = vperm.xlu0 %3419, %v3371
        %v3421 = vpop.permute.xlu0 %3420
        %3422 = vset.pattern.permute.xlu0 0
        %3423 = vperm.xlu0 %3422, %v3373
        %v3424 = vpop.permute.xlu0 %3423
        %3425 = vset.pattern.permute.xlu0 0
        %3426 = vperm.xlu0 %3425, %v3375
        %v3427 = vpop.permute.xlu0 %3426
        %3428 = vset.pattern.permute.xlu0 0
        %3429 = vperm.xlu0 %3428, %v3377
        %v3430 = vpop.permute.xlu0 %3429
        %3431 = vset.pattern.permute.xlu0 0
        %3432 = vperm.xlu0 %3431, %v3379
        %v3433 = vpop.permute.xlu0 %3432
        %3434 = vset.pattern.permute.xlu0 0
        %3435 = vperm.xlu0 %3434, %v3381
        %v3436 = vpop.permute.xlu0 %3435
        %3437 = vset.pattern.permute.xlu0 0
        %3438 = vperm.xlu0 %3437, %v3383
        %v3439 = vpop.permute.xlu0 %3438
        %3440 = vset.pattern.permute.xlu0 0
        %3441 = vperm.xlu0 %3440, %v3385
        %v3442 = vpop.permute.xlu0 %3441
        %3443 = vset.pattern.permute.xlu0 0
        %3444 = vperm.xlu0 %3443, %v3387
        %v3445 = vpop.permute.xlu0 %3444
        %3446 = vset.pattern.permute.xlu0 0
        %3447 = vperm.xlu0 %3446, %v3389
        %v3448 = vpop.permute.xlu0 %3447
        %3449 = vset.pattern.permute.xlu0 0
        %3450 = vperm.xlu0 %3449, %v3391
        %v3451 = vpop.permute.xlu0 %3450
        %3452 = vset.pattern.permute.xlu0 0
        %3453 = vperm.xlu0 %3452, %v3393
        %v3454 = vpop.permute.xlu0 %3453
        %3455 = vset.pattern.permute.xlu0 0
        %3456 = vperm.xlu0 %3455, %v3395
        %v3457 = vpop.permute.xlu0 %3456
        %3458 = vset.pattern.permute.xlu0 0
        %3459 = vperm.xlu0 %3458, %v3397
        %v3460 = vpop.permute.xlu0 %3459
        %3461 = vset.pattern.permute.xlu0 0
        %3462 = vperm.xlu0 %3461, %v3399
        %v3463 = vpop.permute.xlu0 %3462
        %v3464 = vlaneseq
        %v3465 = vshrl.u32 %v3464, 7
        %v3466 = vsub.s32 %v3182, %v3465
        %v3467 = vrot.slane %v3418, %v3466
        %v3468 = vlaneseq
        %v3469 = vshrl.u32 %v3468, 7
        %v3470 = vsub.s32 %v3182, %v3469
        %v3471 = vrot.slane %v3421, %v3470
        %v3472 = vlaneseq
        %v3473 = vshrl.u32 %v3472, 7
        %v3474 = vsub.s32 %v3182, %v3473
        %v3475 = vrot.slane %v3424, %v3474
        %v3476 = vlaneseq
        %v3477 = vshrl.u32 %v3476, 7
        %v3478 = vsub.s32 %v3182, %v3477
        %v3479 = vrot.slane %v3427, %v3478
        %v3480 = vlaneseq
        %v3481 = vshrl.u32 %v3480, 7
        %v3482 = vsub.s32 %v3182, %v3481
        %v3483 = vrot.slane %v3430, %v3482
        %v3484 = vlaneseq
        %v3485 = vshrl.u32 %v3484, 7
        %v3486 = vsub.s32 %v3182, %v3485
        %v3487 = vrot.slane %v3433, %v3486
        %v3488 = vlaneseq
        %v3489 = vshrl.u32 %v3488, 7
        %v3490 = vsub.s32 %v3182, %v3489
        %v3491 = vrot.slane %v3436, %v3490
        %v3492 = vlaneseq
        %v3493 = vshrl.u32 %v3492, 7
        %v3494 = vsub.s32 %v3182, %v3493
        %v3495 = vrot.slane %v3439, %v3494
        %v3496 = vlaneseq
        %v3497 = vshrl.u32 %v3496, 7
        %v3498 = vsub.s32 %v3182, %v3497
        %v3499 = vrot.slane %v3442, %v3498
        %v3500 = vlaneseq
        %v3501 = vshrl.u32 %v3500, 7
        %v3502 = vsub.s32 %v3182, %v3501
        %v3503 = vrot.slane %v3445, %v3502
        %v3504 = vlaneseq
        %v3505 = vshrl.u32 %v3504, 7
        %v3506 = vsub.s32 %v3182, %v3505
        %v3507 = vrot.slane %v3448, %v3506
        %v3508 = vlaneseq
        %v3509 = vshrl.u32 %v3508, 7
        %v3510 = vsub.s32 %v3182, %v3509
        %v3511 = vrot.slane %v3451, %v3510
        %v3512 = vlaneseq
        %v3513 = vshrl.u32 %v3512, 7
        %v3514 = vsub.s32 %v3182, %v3513
        %v3515 = vrot.slane %v3454, %v3514
        %v3516 = vlaneseq
        %v3517 = vshrl.u32 %v3516, 7
        %v3518 = vsub.s32 %v3182, %v3517
        %v3519 = vrot.slane %v3457, %v3518
        %v3520 = vlaneseq
        %v3521 = vshrl.u32 %v3520, 7
        %v3522 = vsub.s32 %v3182, %v3521
        %v3523 = vrot.slane %v3460, %v3522
        %v3524 = vlaneseq
        %v3525 = vshrl.u32 %v3524, 7
        %v3526 = vsub.s32 %v3182, %v3525
        %v3527 = vrot.slane %v3463, %v3526
        %v3528 = vsel %vm1774, %v3471, %v3467
        %v3529 = vsel %vm1776, %v3475, %v3528
        %v3530 = vsel %vm1778, %v3479, %v3529
        %v3531 = vsel %vm1780, %v3483, %v3530
        %v3532 = vsel %vm1782, %v3487, %v3531
        %v3533 = vsel %vm1784, %v3491, %v3532
        %v3534 = vsel %vm1786, %v3495, %v3533
        %v3535 = vsel %vm1774, %v3503, %v3499
        %v3536 = vsel %vm1776, %v3507, %v3535
        %v3537 = vsel %vm1778, %v3511, %v3536
        %v3538 = vsel %vm1780, %v3515, %v3537
        %v3539 = vsel %vm1782, %v3519, %v3538
        %v3540 = vsel %vm1784, %v3523, %v3539
        %v3541 = vsel %vm1786, %v3527, %v3540
        %v3544 = vsel %vm3263, %v3534, 0.0
        %3545 = vadd.xlane.f32.xlu0 %v3544
        %v3546 = vpop.xlane.xlu0 %3545
        %v3547 = vsel %vm3263, %v3541, 0.0
        %3548 = vadd.xlane.f32.xlu0 %v3547
        %v3549 = vpop.xlane.xlu0 %3548
        %v3552 = vlaneseq
        %v3553 = vshrl.u32 %v3552, 7
        %v3554 = vsub.s32 0, %v3553
        %v3555 = vrot.slane %v3546, %v3554
        %v3556 = vlaneseq
        %v3557 = vshrl.u32 %v3556, 7
        %v3558 = vsub.s32 1, %v3557
        %v3559 = vrot.slane %v3546, %v3558
        %v3560 = vlaneseq
        %v3561 = vshrl.u32 %v3560, 7
        %v3562 = vsub.s32 2, %v3561
        %v3563 = vrot.slane %v3546, %v3562
        %v3564 = vlaneseq
        %v3565 = vshrl.u32 %v3564, 7
        %v3566 = vsub.s32 3, %v3565
        %v3567 = vrot.slane %v3546, %v3566
        %v3568 = vlaneseq
        %v3569 = vshrl.u32 %v3568, 7
        %v3570 = vsub.s32 4, %v3569
        %v3571 = vrot.slane %v3546, %v3570
        %v3572 = vlaneseq
        %v3573 = vshrl.u32 %v3572, 7
        %v3574 = vsub.s32 5, %v3573
        %v3575 = vrot.slane %v3546, %v3574
        %v3576 = vlaneseq
        %v3577 = vshrl.u32 %v3576, 7
        %v3578 = vsub.s32 6, %v3577
        %v3579 = vrot.slane %v3546, %v3578
        %v3580 = vlaneseq
        %v3581 = vshrl.u32 %v3580, 7
        %v3582 = vsub.s32 7, %v3581
        %v3583 = vrot.slane %v3546, %v3582
        %v3584 = vlaneseq
        %v3585 = vshrl.u32 %v3584, 7
        %v3586 = vsub.s32 0, %v3585
        %v3587 = vrot.slane %v3549, %v3586
        %v3588 = vlaneseq
        %v3589 = vshrl.u32 %v3588, 7
        %v3590 = vsub.s32 1, %v3589
        %v3591 = vrot.slane %v3549, %v3590
        %v3592 = vlaneseq
        %v3593 = vshrl.u32 %v3592, 7
        %v3594 = vsub.s32 2, %v3593
        %v3595 = vrot.slane %v3549, %v3594
        %v3596 = vlaneseq
        %v3597 = vshrl.u32 %v3596, 7
        %v3598 = vsub.s32 3, %v3597
        %v3599 = vrot.slane %v3549, %v3598
        %v3600 = vlaneseq
        %v3601 = vshrl.u32 %v3600, 7
        %v3602 = vsub.s32 4, %v3601
        %v3603 = vrot.slane %v3549, %v3602
        %v3604 = vlaneseq
        %v3605 = vshrl.u32 %v3604, 7
        %v3606 = vsub.s32 5, %v3605
        %v3607 = vrot.slane %v3549, %v3606
        %v3608 = vlaneseq
        %v3609 = vshrl.u32 %v3608, 7
        %v3610 = vsub.s32 6, %v3609
        %v3611 = vrot.slane %v3549, %v3610
        %v3612 = vlaneseq
        %v3613 = vshrl.u32 %v3612, 7
        %v3614 = vsub.s32 7, %v3613
        %v3615 = vrot.slane %v3549, %v3614
        %v3632 = vrcp.pop %v3555
        %v3633 = vmul.f32 %v3369, %v3632
        %v3634 = vrcp.pop %v3559
        %v3635 = vmul.f32 %v3371, %v3634
        %v3636 = vrcp.pop %v3563
        %v3637 = vmul.f32 %v3373, %v3636
        %v3638 = vrcp.pop %v3567
        %v3639 = vmul.f32 %v3375, %v3638
        %v3640 = vrcp.pop %v3571
        %v3641 = vmul.f32 %v3377, %v3640
        %v3642 = vrcp.pop %v3575
        %v3643 = vmul.f32 %v3379, %v3642
        %v3644 = vrcp.pop %v3579
        %v3645 = vmul.f32 %v3381, %v3644
        %v3646 = vrcp.pop %v3583
        %v3647 = vmul.f32 %v3383, %v3646
        %v3648 = vrcp.pop %v3587
        %v3649 = vmul.f32 %v3385, %v3648
        %v3650 = vrcp.pop %v3591
        %v3651 = vmul.f32 %v3387, %v3650
        %v3652 = vrcp.pop %v3595
        %v3653 = vmul.f32 %v3389, %v3652
        %v3654 = vrcp.pop %v3599
        %v3655 = vmul.f32 %v3391, %v3654
        %v3656 = vrcp.pop %v3603
        %v3657 = vmul.f32 %v3393, %v3656
        %v3658 = vrcp.pop %v3607
        %v3659 = vmul.f32 %v3395, %v3658
        %v3660 = vrcp.pop %v3611
        %v3661 = vmul.f32 %v3397, %v3660
        %v3662 = vrcp.pop %v3615
        %v3663 = vmul.f32 %v3399, %v3662
        %3680 = vset.pattern.permute.xlu0 0
        %3681 = vperm.xlu0 %3680, %v3633
        %v3682 = vpop.permute.xlu0 %3681
        %3683 = vset.pattern.permute.xlu0 0
        %3684 = vperm.xlu0 %3683, %v3635
        %v3685 = vpop.permute.xlu0 %3684
        %3686 = vset.pattern.permute.xlu0 0
        %3687 = vperm.xlu0 %3686, %v3637
        %v3688 = vpop.permute.xlu0 %3687
        %3689 = vset.pattern.permute.xlu0 0
        %3690 = vperm.xlu0 %3689, %v3639
        %v3691 = vpop.permute.xlu0 %3690
        %3692 = vset.pattern.permute.xlu0 0
        %3693 = vperm.xlu0 %3692, %v3641
        %v3694 = vpop.permute.xlu0 %3693
        %3695 = vset.pattern.permute.xlu0 0
        %3696 = vperm.xlu0 %3695, %v3643
        %v3697 = vpop.permute.xlu0 %3696
        %3698 = vset.pattern.permute.xlu0 0
        %3699 = vperm.xlu0 %3698, %v3645
        %v3700 = vpop.permute.xlu0 %3699
        %3701 = vset.pattern.permute.xlu0 0
        %3702 = vperm.xlu0 %3701, %v3647
        %v3703 = vpop.permute.xlu0 %3702
        %3704 = vset.pattern.permute.xlu0 0
        %3705 = vperm.xlu0 %3704, %v3649
        %v3706 = vpop.permute.xlu0 %3705
        %3707 = vset.pattern.permute.xlu0 0
        %3708 = vperm.xlu0 %3707, %v3651
        %v3709 = vpop.permute.xlu0 %3708
        %3710 = vset.pattern.permute.xlu0 0
        %3711 = vperm.xlu0 %3710, %v3653
        %v3712 = vpop.permute.xlu0 %3711
        %3713 = vset.pattern.permute.xlu0 0
        %3714 = vperm.xlu0 %3713, %v3655
        %v3715 = vpop.permute.xlu0 %3714
        %3716 = vset.pattern.permute.xlu0 0
        %3717 = vperm.xlu0 %3716, %v3657
        %v3718 = vpop.permute.xlu0 %3717
        %3719 = vset.pattern.permute.xlu0 0
        %3720 = vperm.xlu0 %3719, %v3659
        %v3721 = vpop.permute.xlu0 %3720
        %3722 = vset.pattern.permute.xlu0 0
        %3723 = vperm.xlu0 %3722, %v3661
        %v3724 = vpop.permute.xlu0 %3723
        %3725 = vset.pattern.permute.xlu0 0
        %3726 = vperm.xlu0 %3725, %v3663
        %v3727 = vpop.permute.xlu0 %3726
        %v3728 = vlaneseq
        %v3729 = vshrl.u32 %v3728, 7
        %v3730 = vsub.s32 %v3182, %v3729
        %v3731 = vrot.slane %v3682, %v3730
        %v3732 = vlaneseq
        %v3733 = vshrl.u32 %v3732, 7
        %v3734 = vsub.s32 %v3182, %v3733
        %v3735 = vrot.slane %v3685, %v3734
        %v3736 = vlaneseq
        %v3737 = vshrl.u32 %v3736, 7
        %v3738 = vsub.s32 %v3182, %v3737
        %v3739 = vrot.slane %v3688, %v3738
        %v3740 = vlaneseq
        %v3741 = vshrl.u32 %v3740, 7
        %v3742 = vsub.s32 %v3182, %v3741
        %v3743 = vrot.slane %v3691, %v3742
        %v3744 = vlaneseq
        %v3745 = vshrl.u32 %v3744, 7
        %v3746 = vsub.s32 %v3182, %v3745
        %v3747 = vrot.slane %v3694, %v3746
        %v3748 = vlaneseq
        %v3749 = vshrl.u32 %v3748, 7
        %v3750 = vsub.s32 %v3182, %v3749
        %v3751 = vrot.slane %v3697, %v3750
        %v3752 = vlaneseq
        %v3753 = vshrl.u32 %v3752, 7
        %v3754 = vsub.s32 %v3182, %v3753
        %v3755 = vrot.slane %v3700, %v3754
        %v3756 = vlaneseq
        %v3757 = vshrl.u32 %v3756, 7
        %v3758 = vsub.s32 %v3182, %v3757
        %v3759 = vrot.slane %v3703, %v3758
        %v3760 = vlaneseq
        %v3761 = vshrl.u32 %v3760, 7
        %v3762 = vsub.s32 %v3182, %v3761
        %v3763 = vrot.slane %v3706, %v3762
        %v3764 = vlaneseq
        %v3765 = vshrl.u32 %v3764, 7
        %v3766 = vsub.s32 %v3182, %v3765
        %v3767 = vrot.slane %v3709, %v3766
        %v3768 = vlaneseq
        %v3769 = vshrl.u32 %v3768, 7
        %v3770 = vsub.s32 %v3182, %v3769
        %v3771 = vrot.slane %v3712, %v3770
        %v3772 = vlaneseq
        %v3773 = vshrl.u32 %v3772, 7
        %v3774 = vsub.s32 %v3182, %v3773
        %v3775 = vrot.slane %v3715, %v3774
        %v3776 = vlaneseq
        %v3777 = vshrl.u32 %v3776, 7
        %v3778 = vsub.s32 %v3182, %v3777
        %v3779 = vrot.slane %v3718, %v3778
        %v3780 = vlaneseq
        %v3781 = vshrl.u32 %v3780, 7
        %v3782 = vsub.s32 %v3182, %v3781
        %v3783 = vrot.slane %v3721, %v3782
        %v3784 = vlaneseq
        %v3785 = vshrl.u32 %v3784, 7
        %v3786 = vsub.s32 %v3182, %v3785
        %v3787 = vrot.slane %v3724, %v3786
        %v3788 = vlaneseq
        %v3789 = vshrl.u32 %v3788, 7
        %v3790 = vsub.s32 %v3182, %v3789
        %v3791 = vrot.slane %v3727, %v3790
        %v3792 = vsel %vm1774, %v3735, %v3731
        %v3793 = vsel %vm1776, %v3739, %v3792
        %v3794 = vsel %vm1778, %v3743, %v3793
        %v3795 = vsel %vm1780, %v3747, %v3794
        %v3796 = vsel %vm1782, %v3751, %v3795
        %v3797 = vsel %vm1784, %v3755, %v3796
        %v3798 = vsel %vm1786, %v3759, %v3797
        %v3799 = vsel %vm1774, %v3767, %v3763
        %v3800 = vsel %vm1776, %v3771, %v3799
        %v3801 = vsel %vm1778, %v3775, %v3800
        %v3802 = vsel %vm1780, %v3779, %v3801
        %v3803 = vsel %vm1782, %v3783, %v3802
        %v3804 = vsel %vm1784, %v3787, %v3803
        %v3805 = vsel %vm1786, %v3791, %v3804
        %3808 = vst.msk [vmem:[%s425] sm:$0xff] %vm3263, %v3798
        %3809 = vst.msk [vmem:[%s425 + $0x8] sm:$0xff] %vm3263, %v3805
        %s3810 = smul.u32 2, %s24
        %p3811 = scmp.lt.s32.totalorder %s3810, 3
        %s3812 = scalar_select %p3811, %s3810, 3
        %s3813 = smul.addr %s3812, 8
        %s3814 = scalar_lea.vmem %s8, %s3813
        // Predicated region
        $region65: #{tpu_custom_call.1} parent=51 // pred_check
          %p3815 = pneg %p230
        $region66: #{tpu_custom_call.1} parent=51 // pred_check_branch
          %3817 = sbr.rel (%p3815) target = $region68
        $region67: #{tpu_custom_call.1} parent=51 // pred_region
          %s3818 = smul.u32 2, %s24
        $region68: #{tpu_custom_call.1} parent=51 // pred_fallthru
          _
      $region52: #{tpu_custom_call.1} parent=5 // pred_fallthru
        _
      %p3819 = scmp.le.s32.totalorder 2, %s19
      // Predicated region
      $region69: #{tpu_custom_call.1} parent=5 // pred_check
        %p3820 = pneg %p3819
      $region70: #{tpu_custom_call.1} parent=5 // pred_check_branch
        %3822 = sbr.rel (%p3820) target = $region72
      $region71: #{tpu_custom_call.1} parent=5 // pred_region
        %s3823 = ssub.s32 %s19, 2
        // Predicated region
        $region73: #{tpu_custom_call.1} parent=71 // pred_check
          %p3824 = pneg %p236
        $region74: #{tpu_custom_call.1} parent=71 // pred_check_branch
          %3826 = sbr.rel (%p3824) target = $region76
        $region75: #{tpu_custom_call.1} parent=71 // pred_region
          %s3827 = smul.u32 2, %s25
          %p3828 = scmp.lt.s32.totalorder %s3827, 3
          %s3829 = scalar_select %p3828, %s3827, 3
          %s3830 = smul.addr %s3829, 8
          %s3831 = scalar_lea.vmem %s8, %s3830
        $region76: #{tpu_custom_call.1} parent=71 // pred_fallthru
          _
      $region72: #{tpu_custom_call.1} parent=5 // pred_fallthru
        _
    $region6: #{tpu_custom_call.1} parent=1 // loop_footer
      %s23 = sadd.s32 1, %s19
    $region7: #{tpu_custom_call.1} parent=1 // loop_footer_branch
      %18 = sbr.rel target = $region3
    $region8: #{tpu_custom_call.1} parent=1 // loop_exit
      _
    %3832 = vsyncpa [#allocation3], 1
    %s3833 = scalar_lea.sflag [#allocation3], 1
    %3834 = vsyncpa %s3833, 1
    %3835 = vsyncpa [#allocation6], 1
    %3836 = vsyncpa [#allocation4], 1
    %s3837 = scalar_lea.sflag [#allocation4], 1
    %3838 = vsyncpa %s3837, 1

</llo_original>
